<compile_context>
chip_gen: v7x
topology: tpu7x:2x2x1
jax: 0.10.0
libtpu: 0.0.40
codegen_flags: <defaults>
</compile_context>

<pallas_src>
import numpy as np
import jax
import jax.numpy as jnp
from jax import lax
from jax.experimental import pallas as pl
from jax.experimental.pallas import tpu as pltpu


# ----------------------------- grammar (synthetic gdef) ----------------------
OPERATIONS = [
    # (name, parameter_types, input_types, return_type)
    ('scene',  [],                       [],                            'object_set'),
    ('filter', ['attribute_concept'],    ['object_set'],                'object_set'),
    ('relate', ['relational_concept'],   ['object'],                    'object_set'),
    ('unique', [],                       ['object_set'],                'object'),
    ('move',   ['action_concept'],       ['world', 'object', 'object'], 'return'),
    ('idle',   [],                       ['world'],                     'return'),
]
PARAMETER_TYPES = ('attribute_concept', 'relational_concept', 'action_concept')
VARIABLE_TYPES = ('object_set', 'object', 'world')
RETURN_TYPES = ('return',)

MASK_P = {
    x: np.array([1.0 if len(v) > 0 and v[0] == x else 0.0 for _, v, _, _ in OPERATIONS],
                dtype=np.float32)
    for x in PARAMETER_TYPES
}
MASK_O_VARIABLE = np.array([1.0 if v in VARIABLE_TYPES else 0.0 for _, _, _, v in OPERATIONS],
                           dtype=np.float32)
MASK_O_RETURN = np.array([1.0 if v in RETURN_TYPES else 0.0 for _, _, _, v in OPERATIONS],
                         dtype=np.float32)
MASK_I_NONE = np.array([1.0 if len(v) == 0 else 0.0 for _, _, v, _ in OPERATIONS],
                       dtype=np.float32)


def _round_up(x, m):
    return ((x + m - 1) // m) * m


# ----------------------------- Pallas kernels --------------------------------
def bigru_opselect_kernel(f_ref, mask_ref, w_ih_ref, b_ih_ref, w_hh_ref, b_hh_ref,
                          op_w_ref, op_b_ref, op_mask_ref,
                          hid_ref, last_ref, op_logp_ref, op_idx_ref, op_sel_ref,
                          gi_ref):
    """Bidirectional single-layer GRU (gate order r,z,n) + fused op-selection epilogue.

    Padded layout: each gate block padded to HP lanes (lane-aligned slices); hidden state
    carried as one [Bb, 2*HP] array (fwd | bwd) so BOTH directions' recurrent matmuls are
    a single block-diagonal [Bb,2HP]x[2HP,6HP] MXU push per step.
    """
    T, Bb, E = f_ref.shape
    HP = w_hh_ref.shape[0] // 2
    G = 3 * HP
    KP = op_w_ref.shape[1]

    # Hoisted input projection: independent of h, so ONE big MXU call for all timesteps
    # and both directions instead of 2*T tiny matmuls on the serial recurrence path.
    f2 = f_ref[...].reshape(T * Bb, E)
    gi = jnp.dot(f2, w_ih_ref[...], preferred_element_type=jnp.float32) + b_ih_ref[...]
    gi_ref[...] = gi.reshape(T, Bb, 2 * G)

    w_hh = w_hh_ref[...]        # [2HP, 6HP] block-diagonal (fwd rows -> fwd gate cols, etc.)
    b_hh = b_hh_ref[...]        # [1, 6HP]

    def gru_gates(gi_t, gh_t, h):
        r = jax.nn.sigmoid(gi_t[:, 0:HP] + gh_t[:, 0:HP])
        z = jax.nn.sigmoid(gi_t[:, HP:2 * HP] + gh_t[:, HP:2 * HP])
        n = jnp.tanh(gi_t[:, 2 * HP:3 * HP] + r * gh_t[:, 2 * HP:3 * HP])
        return (1.0 - z) * n + z * h

    # Forward and backward recurrences are independent dependency chains: interleave them
    # in a single loop; one merged matmul per step feeds both.
    def body(t, h_cat):
        tb = T - 1 - t
        m_f = mask_ref[t] > 0.0            # [Bb, 1] length mask (fwd step)
        m_b = mask_ref[tb] > 0.0           # [Bb, 1] length mask (bwd step)
        gh = jnp.dot(h_cat, w_hh, preferred_element_type=jnp.float32) + b_hh   # [Bb, 6HP]
        gi_f = gi_ref[t]                   # [Bb, 6HP]
        gi_b = gi_ref[tb]
        hf = h_cat[:, 0:HP]
        hb = h_cat[:, HP:2 * HP]
        cand_f = gru_gates(gi_f[:, 0:G], gh[:, 0:G], hf)
        cand_b = gru_gates(gi_b[:, G:2 * G], gh[:, G:2 * G], hb)
        hid_ref[t, :, 0:HP] = jnp.where(m_f, cand_f, 0.0)        # pad_packed: 0 at pads
        hid_ref[tb, :, HP:2 * HP] = jnp.where(m_b, cand_b, 0.0)
        hf = jnp.where(m_f, cand_f, hf)
        hb = jnp.where(m_b, cand_b, hb)
        return jnp.concatenate([hf, hb], axis=1)

    h0 = jnp.zeros((Bb, 2 * HP), jnp.float32)
    # Full unroll only for small T (large T would blow vreg live ranges / spill).
    h_cat = lax.fori_loop(0, T, body, h0, unroll=(True if T <= 16 else 4))
    last_ref[...] = h_cat

    # ---- fused operation-selection epilogue (last state still live in VMEM) ----
    # stand-in QueueExecutor 'operation' head + forward() syntax masking + _sample (eval).
    logits = jnp.dot(h_cat, op_w_ref[...], preferred_element_type=jnp.float32) + op_b_ref[...]
    masked = jnp.where(op_mask_ref[...] > 0.0, logits, -1e9)
    mx = jnp.max(masked, axis=-1, keepdims=True)
    shifted = masked - mx
    denom = jnp.sum(jnp.exp(shifted), axis=-1, keepdims=True)
    log_probs = shifted - jnp.log(denom)
    op_logp_ref[...] = log_probs
    iota = lax.broadcasted_iota(jnp.int32, masked.shape, 1)
    idx = jnp.min(jnp.where(masked >= mx, iota, KP), axis=-1, keepdims=True)   # first argmax
    op_idx_ref[...] = idx.astype(jnp.int32)
    op_sel_ref[...] = jnp.sum(jnp.where(iota == idx, log_probs, 0.0), axis=-1, keepdims=True)


def concept_attention_sample_kernel(pt_ref, key_ref, scores_ref, values_ref, valid_ref,
                                    w1k_ref, w1v_ref, b1_ref, w2_ref, b2_ref, w3_ref, b3_ref,
                                    logp_ref, idx_ref, sel_ref):
    """One (scene, parameter-type) item per grid step; weights selected via scalar prefetch.

    key: [1, 2HP] (lane-padded last state; per-ptype key projection folded into w1k);
    scores/valid: [Np, 1]; values: [Np, 2HP] (lane-padded hiddens).
    concat([key.expand, scores*values]) @ W1 is a split matmul to avoid an in-kernel concat.
    Fused with _sample() (eval/SAMPLE): log_softmax / argmax / selected log-prob.
    """
    Np = values_ref.shape[1]
    sv = scores_ref[0] * values_ref[0]                                       # [Np, 2HP]
    key_part = jnp.dot(key_ref[0], w1k_ref[0], preferred_element_type=jnp.float32)   # [1, 2H]
    h1 = jnp.maximum(
        key_part + jnp.dot(sv, w1v_ref[0], preferred_element_type=jnp.float32) + b1_ref[0],
        0.0)
    h2 = jnp.maximum(
        jnp.dot(h1, w2_ref[0], preferred_element_type=jnp.float32) + b2_ref[0], 0.0)
    att = jnp.dot(h2, w3_ref[0], preferred_element_type=jnp.float32) + b3_ref[0]      # [Np,1]

    masked = jnp.where(valid_ref[0] > 0.0, att, -1e9)        # padding rows only
    mx = jnp.max(masked, axis=0, keepdims=True)
    shifted = masked - mx
    denom = jnp.sum(jnp.exp(shifted), axis=0, keepdims=True)
    log_probs = shifted - jnp.log(denom)
    logp_ref[0] = log_probs
    iota = lax.broadcasted_iota(jnp.int32, masked.shape, 0)
    idx = jnp.min(jnp.where(masked >= mx, iota, Np), axis=0, keepdims=True)   # [1,1]
    idx_ref[0] = idx.astype(jnp.int32)
    sel_ref[0] = jnp.sum(jnp.where(iota == idx, log_probs, 0.0), axis=0, keepdims=True)


# ----------------------------- wrappers ---------------------------------------
def bigru_encode_opselect(f, mask, syntax_masks, params):
    """f: [B,T,E] f32, mask: [B,T] f32, syntax_masks: [B,K] f32.

    Returns:
      hid      [T, B, 2*HP]  time-major, lane-padded (fwd in [:, :, 0:H], bwd in [:, :, HP:HP+H])
      last     [B, 2*HP]     lane-padded last states (same layout)
      op_logp  [B, K], op_idx [B] int32, op_sel [B]   (depth-0 operation selection)
    """
    B, T, E = f.shape
    H = params['wf_hh'].shape[0]
    HP = _round_up(H, 128)              # each gate block lane-aligned
    K = params['op_head_w'].shape[1]
    KP = _round_up(K, 128)
    # Fill MXU rows when the batch is large; 8-sublane minimum otherwise.
    # (On v7x, batches spanning >= 2 blocks shard across both TensorCores via "parallel".)
    B_BLK = min(_round_up(B, 8), 128)
    BP = _round_up(B, B_BLK)

    f_tm = jnp.transpose(f, (1, 0, 2))                       # [T, B, E]
    mask_tm = jnp.transpose(mask, (1, 0))[:, :, None]        # [T, B, 1]
    f_tm = jnp.pad(f_tm, ((0, 0), (0, BP - B), (0, 0)))
    mask_tm = jnp.pad(mask_tm, ((0, 0), (0, BP - B), (0, 0)))

    # zero-pad each gate block (r|z|n) to HP lanes; padded hidden lanes provably stay 0
    # (zero weights/bias, h0 = 0).
    def pad_gate_cols(w):  # [rows, 3H] -> [rows, 3HP]
        return jnp.concatenate(
            [jnp.pad(w[:, g * H:(g + 1) * H], ((0, 0), (0, HP - H))) for g in range(3)],
            axis=1)

    # input projection: fwd gates in cols [0:3HP], bwd gates in [3HP:6HP]
    w_ih = jnp.concatenate([pad_gate_cols(params['wf_ih']),
                            pad_gate_cols(params['wb_ih'])], axis=1)        # [E, 6HP]
    b_ih = jnp.concatenate([pad_gate_cols(params['bf_ih']),
                            pad_gate_cols(params['bb_ih'])], axis=1)        # [1, 6HP]
    # block-diagonal recurrent weights: ONE [Bb,2HP]x[2HP,6HP] push per step
    w_hh = jnp.zeros((2 * HP, 6 * HP), jnp.float32)
    w_hh = w_hh.at[0:H, 0:3 * HP].set(pad_gate_cols(params['wf_hh']))
    w_hh = w_hh.at[HP:HP + H, 3 * HP:6 * HP].set(pad_gate_cols(params['wb_hh']))
    b_hh = jnp.concatenate([pad_gate_cols(params['bf_hh']),
                            pad_gate_cols(params['bb_hh'])], axis=1)        # [1, 6HP]

    # op-select head, rows laid out to match the lane-padded h_cat
    op_w = jnp.zeros((2 * HP, KP), jnp.float32)
    op_w = op_w.at[0:H, 0:K].set(params['op_head_w'][0:H])
    op_w = op_w.at[HP:HP + H, 0:K].set(params['op_head_w'][H:2 * H])
    op_b = jnp.zeros((1, KP), jnp.float32).at[0, 0:K].set(params['op_head_b'])
    op_m = jnp.pad(syntax_masks.astype(jnp.float32), ((0, BP - B), (0, KP - K)))

    args = (f_tm, mask_tm, w_ih, b_ih, w_hh, b_hh, op_w, op_b, op_m)
    out_shapes = (jax.ShapeDtypeStruct((T, BP, 2 * HP), jnp.float32),   # hiddens (padded layout)
                  jax.ShapeDtypeStruct((BP, 2 * HP), jnp.float32),      # last state
                  jax.ShapeDtypeStruct((BP, KP), jnp.float32),          # op log-probs
                  jax.ShapeDtypeStruct((BP, 1), jnp.int32),             # op argmax
                  jax.ShapeDtypeStruct((BP, 1), jnp.float32))           # op selected log-prob

    # NOTE: constant weight specs could use pipeline_mode=pl.Buffered(1) to avoid double
    # buffering them in VMEM at scale (matters most on v7x's 64 MiB VMEM).
    hid, last, op_logp, op_idx, op_sel = pl.pallas_call(
        bigru_opselect_kernel,
        grid=(BP // B_BLK,),
        in_specs=[
            pl.BlockSpec((T, B_BLK, E), lambda b: (0, b, 0)),
            pl.BlockSpec((T, B_BLK, 1), lambda b: (0, b, 0)),
            pl.BlockSpec((E, 6 * HP), lambda b: (0, 0)),
            pl.BlockSpec((1, 6 * HP), lambda b: (0, 0)),
            pl.BlockSpec((2 * HP, 6 * HP), lambda b: (0, 0)),
            pl.BlockSpec((1, 6 * HP), lambda b: (0, 0)),
            pl.BlockSpec((2 * HP, KP), lambda b: (0, 0)),
            pl.BlockSpec((1, KP), lambda b: (0, 0)),
            pl.BlockSpec((B_BLK, KP), lambda b: (b, 0)),
        ],
        out_specs=(pl.BlockSpec((T, B_BLK, 2 * HP), lambda b: (0, b, 0)),
                   pl.BlockSpec((B_BLK, 2 * HP), lambda b: (b, 0)),
                   pl.BlockSpec((B_BLK, KP), lambda b: (b, 0)),
                   pl.BlockSpec((B_BLK, 1), lambda b: (b, 0)),
                   pl.BlockSpec((B_BLK, 1), lambda b: (b, 0))),
        out_shape=out_shapes,
        scratch_shapes=[pltpu.VMEM((T, B_BLK, 6 * HP), jnp.float32)],   # hoisted gi
        compiler_params=pltpu.CompilerParams(
            dimension_semantics=("parallel",),          # shards batch blocks over TCs on v7x
            vmem_limit_bytes=32 * 1024 * 1024),
    )(*args)

    return hid[:, :B], last[:B], op_logp[:B, :K], op_idx[:B, 0], op_sel[:B, 0]


def concept_attention_sample_batched(stacked, ptype_ids, keys, scores, values, valid):
    """ONE pallas_call for all (scene, parameter-type) items.

    ptype_ids: [n] int32 (scalar prefetch; selects the per-parameter-type weight block)
    keys:   [n, 1, 2HP]   scores/valid: [n, Np, 1]   values: [n, Np, 2HP]
    Returns (logp [n,Np,1], idx [n,1,1] int32, sel [n,1,1]).
    """
    n, Np, twoHP = values.shape
    twoH = stacked['w2'].shape[1]
    H = stacked['w2'].shape[2]

    out_shapes = (jax.ShapeDtypeStruct((n, Np, 1), jnp.float32),
                  jax.ShapeDtypeStruct((n, 1, 1), jnp.int32),
                  jax.ShapeDtypeStruct((n, 1, 1), jnp.float32))

    grid_spec = pltpu.PrefetchScalarGridSpec(
        num_scalar_prefetch=1, grid=(n,),
        in_specs=[
            pl.BlockSpec((1, 1, twoHP), lambda i, pt: (i, 0, 0)),
            pl.BlockSpec((1, Np, 1), lambda i, pt: (i, 0, 0)),
            pl.BlockSpec((1, Np, twoHP), lambda i, pt: (i, 0, 0)),
            pl.BlockSpec((1, Np, 1), lambda i, pt: (i, 0, 0)),
            pl.BlockSpec((1, twoHP, twoH), lambda i, pt: (pt[i], 0, 0)),
            pl.BlockSpec((1, twoHP, twoH), lambda i, pt: (pt[i], 0, 0)),
            pl.BlockSpec((1, 1, twoH), lambda i, pt: (pt[i], 0, 0)),
            pl.BlockSpec((1, twoH, H), lambda i, pt: (pt[i], 0, 0)),
            pl.BlockSpec((1, 1, H), lambda i, pt: (pt[i], 0, 0)),
            pl.BlockSpec((1, H, 1), lambda i, pt: (pt[i], 0, 0)),
            pl.BlockSpec((1, 1, 1), lambda i, pt: (pt[i], 0, 0)),
        ],
        out_specs=(pl.BlockSpec((1, Np, 1), lambda i, pt: (i, 0, 0)),
                   pl.BlockSpec((1, 1, 1), lambda i, pt: (i, 0, 0)),
                   pl.BlockSpec((1, 1, 1), lambda i, pt: (i, 0, 0))),
    )
    return pl.pallas_call(
        concept_attention_sample_kernel,
        grid_spec=grid_spec,
        out_shape=out_shapes,
        compiler_params=pltpu.CompilerParams(dimension_semantics=("arbitrary",)),
    )(ptype_ids, keys, scores, values, valid,
      stacked['w1k'], stacked['w1v'], stacked['b1'],
      stacked['w2'], stacked['b2'], stacked['w3'], stacked['b3'])


# ----------------------------- parameters & glue ------------------------------
def init_params(key, vocab_size, word_dim, pos_dim, hidden, n_ops):
    ks = jax.random.split(key, 20)

    def w(k, shape, scale=0.1):
        return jax.random.normal(k, shape, jnp.float32) * scale

    E = word_dim + pos_dim
    H = hidden
    params = {}
    emb = w(ks[0], (vocab_size, word_dim))
    params['embedding'] = emb.at[0].set(0.0)              # padding_idx=0
    params['pos_embedding'] = w(ks[1], (128, pos_dim))    # LearnedPositionalEmbedding(128, .)
    # single-layer bidirectional GRU (gate order r, z, n); weights stored transposed
    params['wf_ih'] = w(ks[2], (E, 3 * H)); params['wf_hh'] = w(ks[3], (H, 3 * H))
    params['bf_ih'] = w(ks[4], (1, 3 * H)); params['bf_hh'] = w(ks[5], (1, 3 * H))
    params['wb_ih'] = w(ks[6], (E, 3 * H)); params['wb_hh'] = w(ks[7], (H, 3 * H))
    params['bb_ih'] = w(ks[8], (1, 3 * H)); params['bb_hh'] = w(ks[9], (1, 3 * H))
    # concept attention heads: Linear(2*(2H)->2H), ReLU, Linear(2H->H), ReLU, Linear(H->1)
    params['concept_attention'] = {}
    for i, ptype in enumerate(PARAMETER_TYPES):
        kk = jax.random.split(ks[10 + i], 6)
        params['concept_attention'][ptype] = dict(
            w1k=w(kk[0], (2 * H, 2 * H)), w1v=w(kk[1], (2 * H, 2 * H)), b1=w(kk[2], (1, 2 * H)),
            w2=w(kk[3], (2 * H, H)), b2=w(kk[4], (1, H)),
            w3=w(kk[5], (H, 1)), b3=jnp.zeros((1, 1), jnp.float32),
        )
    # TODO(synk): QueueExecutor(2*hidden, n_ops) internals are not given in the reference
    # module; the stand-in linear heads below produce its outputs ('operation' logits,
    # per-parameter-type attention keys, per-token attention scores).
    params['op_head_w'] = w(ks[13], (2 * H, n_ops))
    params['op_head_b'] = jnp.zeros((n_ops,), jnp.float32)
    params['ptype_key_w'] = {p: w(jax.random.fold_in(ks[14], i), (2 * H, 2 * H))
                             for i, p in enumerate(PARAMETER_TYPES)}
    params['attn_score_w'] = w(ks[15], (2 * H, 1))
    return params


def _pad_state_rows(w, H):
    """Map a [2H, out] weight onto the lane-padded hidden/last-state layout [2HP, out]."""
    HP = _round_up(H, 128)
    out_dim = w.shape[1]
    z = jnp.zeros((2 * HP, out_dim), jnp.float32)
    z = z.at[0:H, :].set(w[0:H])
    z = z.at[HP:HP + H, :].set(w[H:2 * H])
    return z


def build_concept_stacked_weights(params, H):
    """Stack per-parameter-type concept-attention weights for data-dependent BlockSpec
    selection; fold the stand-in per-ptype key projection into the first layer and
    row-pad first-layer weights so the kernel consumes lane-padded hiddens directly."""
    w1k, w1v, b1, w2, b2, w3, b3 = [], [], [], [], [], [], []
    for p in PARAMETER_TYPES:
        ca = params['concept_attention'][p]
        comb = params['ptype_key_w'][p] @ ca['w1k']        # fold key projection: [2H, 2H]
        w1k.append(_pad_state_rows(comb, H))
        w1v.append(_pad_state_rows(ca['w1v'], H))
        b1.append(ca['b1']); w2.append(ca['w2']); b2.append(ca['b2'])
        w3.append(ca['w3']); b3.append(ca['b3'])
    return dict(w1k=jnp.stack(w1k), w1v=jnp.stack(w1v), b1=jnp.stack(b1),
                w2=jnp.stack(w2), b2=jnp.stack(b2), w3=jnp.stack(w3), b3=jnp.stack(b3))


def get_operation_sample_mask(ret_type, current_depth, max_depth, nr_cgs, nr_rcgs, nr_ags):
    syntax = (MASK_O_RETURN if ret_type == 'return' else MASK_O_VARIABLE).copy()
    if current_depth == max_depth - 1:
        syntax = syntax * MASK_I_NONE
    for nr, name in zip([nr_cgs, nr_rcgs, nr_ags], PARAMETER_TYPES):
        if nr == 0:
            syntax = syntax * (1.0 - MASK_P[name])
    return syntax.astype(np.float32)


def encode_and_select(params, sent, sent_length, syntax_masks):
    """Embedding/positional glue + fused BiGRU-encode + depth-0 op-select kernel."""
    B, T = sent.shape
    pos_dim = params['pos_embedding'].shape[1]
    word = params['embedding'][jnp.asarray(sent)]                               # [B, T, word_dim]
    pos = jnp.broadcast_to(params['pos_embedding'][:T][None, :, :], (B, T, pos_dim))
    f = jnp.concatenate([word, pos], axis=-1).astype(jnp.float32)               # [B, T, E]
    mask = (jnp.arange(T)[None, :] < jnp.asarray(sent_length)[:, None]).astype(jnp.float32)
    return bigru_encode_opselect(f, mask, jnp.asarray(syntax_masks), params)


# ----------------------------- demo forward ------------------------------------
if __name__ == "__main__":
    B, T = 2, 8
    WORD_DIM, POS_DIM, HIDDEN = 16, 16, 32
    VOCAB = 32
    N_OPS = len(OPERATIONS)
    MAX_DEPTH = 2
    DISCOUNT = 0.9
    HP = _round_up(HIDDEN, 128)

    params = init_params(jax.random.PRNGKey(0), VOCAB, WORD_DIM, POS_DIM, HIDDEN, N_OPS)
    ca_stacked = build_concept_stacked_weights(params, HIDDEN)
    attn_w_pad = _pad_state_rows(params['attn_score_w'], HIDDEN)               # [2HP, 1]

    # vocab: 0=<pad>, 1=<CONCEPTS>, 2=<REL_CONCEPTS>, 3=<ACT_CONCEPTS>, >=4 words
    CONCEPTS_ID, REL_ID, ACT_ID = 1, 2, 3
    sent = np.array([
        [5, 1, 6, 2, 1, 7, 3, 8],     # length 8: 2 concept groups, 1 rel, 1 act
        [9, 1, 10, 2, 3, 11, 0, 0],   # length 6: 1 concept group, 1 rel, 1 act
    ], dtype=np.int32)
    sent_length = np.array([8, 6], dtype=np.int32)
    concept_groups = [[['red'], ['cube']], [['blue']]]
    relational_concept_groups = [[['left']], [['right']]]
    action_concept_groups = [[['move']], [['stack']]]

    # depth-0 syntax masks (host; only need per-scene concept counts and ret_type='return')
    syntax_masks = np.stack([
        get_operation_sample_mask('return', 0, MAX_DEPTH,
                                  len(concept_groups[i]),
                                  len(relational_concept_groups[i]),
                                  len(action_concept_groups[i]))
        for i in range(B)], axis=0)
    assert (syntax_masks.sum(axis=1) > 0).all(), "degenerate all-masked syntax row"

    # ---- kernel 1: fused BiGRU + depth-0 operation selection (one launch) ----
    hid, last, op_logp, op_idx, op_sel = encode_and_select(params, sent, sent_length, syntax_masks)
    # stand-in QueueExecutor per-token attention scores (glue, computed once, batched)
    token_scores = jnp.einsum('tbd,dk->tbk', hid, attn_w_pad)[..., 0]           # [T, B]

    # single host sync for the encode + op-select phase
    fetched = jax.block_until_ready((hid, last, op_logp, op_idx, op_sel, token_scores))
    (hid_np, last_np, op_logp_np, op_idx_np, op_sel_np,
     token_scores_np) = jax.device_get(fetched)

    # ---- gather per-scene metadata (host control flow; hid is time-major, lane-padded) ----
    scene_meta = []
    for i in range(B):
        l = int(sent_length[i])
        s = sent[i, :l]
        h = hid_np[:l, i, :]                       # [l, 2HP]
        sc = token_scores_np[:l, i]                # [l]
        cg_mask = (s == CONCEPTS_ID)
        rcg_mask = (s == REL_ID)
        ag_mask = (s == ACT_ID)
        assert int(cg_mask.sum()) == len(concept_groups[i])
        assert int(rcg_mask.sum()) == len(relational_concept_groups[i])
        assert int(ag_mask.sum()) == len(action_concept_groups[i])
        scene_meta.append(dict(
            l=l,
            pembs={'attribute_concept': h[cg_mask],
                   'relational_concept': h[rcg_mask],
                   'action_concept': h[ag_mask]},
            pscores={'attribute_concept': sc[cg_mask],
                     'relational_concept': sc[rcg_mask],
                     'action_concept': sc[ag_mask]},
            pvals={'attribute_concept': concept_groups[i],
                   'relational_concept': relational_concept_groups[i],
                   'action_concept': action_concept_groups[i]}))

    # ---- depth-0 decode: ONE batched concept-attention kernel for all items, ONE sync ----
    # TODO(synk): the recursive multi-depth queue decode (QueueExecutor), training-mode
    # multinomial sampling and the BERT branch are host control flow, not kernels; one
    # decode step per scene is shown here.
    items = []
    for i in range(B):
        op_info = OPERATIONS[int(op_idx_np[i])]
        if len(op_info[1]) != 0:
            items.append((i, op_info[1][0]))

    concept_results = {}
    if items:
        n_items = len(items)
        n_max = max(scene_meta[i]['pembs'][pt].shape[0] for i, pt in items)
        Np = max(_round_up(n_max, 8), 8)
        ptype_ids = np.array([PARAMETER_TYPES.index(pt) for _, pt in items], np.int32)
        keys = np.zeros((n_items, 1, 2 * HP), np.float32)
        scores = np.zeros((n_items, Np, 1), np.float32)
        values = np.zeros((n_items, Np, 2 * HP), np.float32)
        valid = np.zeros((n_items, Np, 1), np.float32)
        for j, (i, pt) in enumerate(items):
            pe = scene_meta[i]['pembs'][pt]
            N = pe.shape[0]
            assert N > 0, "syntax mask guarantees >=1 candidate for a parametered op"
            keys[j, 0] = last_np[i]
            values[j, :N] = pe
            scores[j, :N, 0] = scene_meta[i]['pscores'][pt]
            valid[j, :N, 0] = 1.0
        c_logp, c_idx, c_sel = concept_attention_sample_batched(
            ca_stacked, jnp.asarray(ptype_ids), jnp.asarray(keys),
            jnp.asarray(scores), jnp.asarray(values), jnp.asarray(valid))
        c_idx_np, c_sel_np, c_logp_np = jax.device_get(
            jax.block_until_ready((c_idx, c_sel, c_logp)))          # single host sync
        assert np.isfinite(c_sel_np).all()
        for j, (i, pt) in enumerate(items):
            concept_results[i] = (int(c_idx_np[j, 0, 0]), float(c_sel_np[j, 0, 0]))

    programs = []
    for i in range(B):
        op_idx_i = int(op_idx_np[i])
        op_info = OPERATIONS[op_idx_i]
        p, lp = {}, []
        p['op'] = op_info[0]
        lp.append(float(op_sel_np[i]))
        if len(op_info[1]) != 0:
            ptype = op_info[1][0]
            c_idx_i, c_logp_i = concept_results[i]
            p[ptype + '_idx'] = c_idx_i
            p[ptype + '_values'] = scene_meta[i]['pvals'][ptype]
            p['param_type'] = ptype
            lp.append(c_logp_i)
        p['inputs'] = [dict() for _ in op_info[2]]
        programs.append((i, p, lp))

    # _translate (glue): total and discounted log-likelihoods
    results = []
    for scene_id, prog, lps in programs:
        lps_arr = np.asarray(lps, dtype=np.float32)
        likelihood = float(lps_arr.sum())
        dis = DISCOUNT ** np.arange(len(lps_arr) - 1, -1, -1, dtype=np.float32)
        discounted = float((lps_arr * dis).sum())
        results.append({'scene_id': scene_id, 'program': prog,
                        'log_likelihood': likelihood,
                        'discounted_log_likelihood': discounted})

    assert np.isfinite(hid_np).all()
    assert np.isfinite(op_logp_np).all()
    for r in results:
        assert np.isfinite(r['log_likelihood'])
        assert np.isfinite(r['discounted_log_likelihood'])

    print("KERNEL_OK")
</pallas_src>

<mosaic_0001>
module attributes {stable_mosaic.version = 11 : i64} {
  func.func @bigru_opselect_kernel(%arg0: i32, %arg1: memref<8x8x32xf32, #tpu.memory_space<vmem>>, %arg2: memref<8x8x1xf32, #tpu.memory_space<vmem>>, %arg3: memref<32x768xf32, #tpu.memory_space<vmem>>, %arg4: memref<1x768xf32, #tpu.memory_space<vmem>>, %arg5: memref<256x768xf32, #tpu.memory_space<vmem>>, %arg6: memref<1x768xf32, #tpu.memory_space<vmem>>, %arg7: memref<256x128xf32, #tpu.memory_space<vmem>>, %arg8: memref<1x128xf32, #tpu.memory_space<vmem>>, %arg9: memref<8x128xf32, #tpu.memory_space<vmem>>, %arg10: memref<8x8x256xf32, #tpu.memory_space<vmem>>, %arg11: memref<8x256xf32, #tpu.memory_space<vmem>>, %arg12: memref<8x128xf32, #tpu.memory_space<vmem>>, %arg13: memref<8x1xi32, #tpu.memory_space<vmem>>, %arg14: memref<8x1xf32, #tpu.memory_space<vmem>>, %arg15: memref<8x8x768xf32, #tpu.memory_space<vmem>>) attributes {dimension_semantics = [#tpu.dimension_semantics<parallel>], iteration_bounds = array<i64: 1>, scalar_prefetch = 0 : i64, scratch_operands = 1 : i64, tpu.core_type = #tpu.core_type<tc>, window_params = [{transform_indices = @transform_0, window_bounds = array<i64: 8, 8, 32>}, {transform_indices = @transform_1, window_bounds = array<i64: 8, 8, 1>}, {pipeline_mode = #tpu.pipeline_mode<synchronous>, transform_indices = @transform_2, window_bounds = array<i64: 32, 768>}, {pipeline_mode = #tpu.pipeline_mode<synchronous>, transform_indices = @transform_3, window_bounds = array<i64: 1, 768>}, {pipeline_mode = #tpu.pipeline_mode<synchronous>, transform_indices = @transform_4, window_bounds = array<i64: 256, 768>}, {pipeline_mode = #tpu.pipeline_mode<synchronous>, transform_indices = @transform_5, window_bounds = array<i64: 1, 768>}, {pipeline_mode = #tpu.pipeline_mode<synchronous>, transform_indices = @transform_6, window_bounds = array<i64: 256, 128>}, {pipeline_mode = #tpu.pipeline_mode<synchronous>, transform_indices = @transform_7, window_bounds = array<i64: 1, 128>}, {transform_indices = @transform_8, window_bounds = array<i64: 8, 128>}, {transform_indices = @transform_9, window_bounds = array<i64: 8, 8, 256>}, {transform_indices = @transform_10, window_bounds = array<i64: 8, 256>}, {transform_indices = @transform_11, window_bounds = array<i64: 8, 128>}, {transform_indices = @transform_12, window_bounds = array<i64: 8, 1>}, {transform_indices = @transform_13, window_bounds = array<i64: 8, 1>}]} {
    %c0 = arith.constant 0 : index
    %c0_0 = arith.constant 0 : index
    %c0_1 = arith.constant 0 : index
    %0 = vector.load %arg1[%c0, %c0_0, %c0_1] : memref<8x8x32xf32, #tpu.memory_space<vmem>>, vector<8x8x32xf32>
    %1 = vector.shape_cast %0 : vector<8x8x32xf32> to vector<64x32xf32>
    %c0_2 = arith.constant 0 : index
    %c0_3 = arith.constant 0 : index
    %2 = vector.load %arg3[%c0_2, %c0_3] : memref<32x768xf32, #tpu.memory_space<vmem>>, vector<32x768xf32>
    %cst = arith.constant dense<0.000000e+00> : vector<64x768xf32>
    %3 = tpu.matmul %1, %2, %cst {dimension_numbers = #tpu.dot_dimension_numbers<[1], [0], [0], [1], [0, 0, 1, 1], [], []>} : vector<64x32xf32>, vector<32x768xf32>, vector<64x768xf32> -> vector<64x768xf32>
    %c0_4 = arith.constant 0 : index
    %c0_5 = arith.constant 0 : index
    %4 = vector.load %arg4[%c0_4, %c0_5] : memref<1x768xf32, #tpu.memory_space<vmem>>, vector<1x768xf32>
    %5 = vector.broadcast %4 : vector<1x768xf32> to vector<64x768xf32>
    %6 = arith.addf %3, %5 : vector<64x768xf32>
    %7 = vector.shape_cast %6 : vector<64x768xf32> to vector<8x8x768xf32>
    %c0_6 = arith.constant 0 : index
    %c0_7 = arith.constant 0 : index
    %c0_8 = arith.constant 0 : index
    %8 = vector.load %arg15[%c0_6, %c0_7, %c0_8] : memref<8x8x768xf32, #tpu.memory_space<vmem>>, vector<8x8x768xf32>
    tpu.vector_store %arg15[%c0_6, %c0_7, %c0_8], %7 {strides = array<i32>} : memref<8x8x768xf32, #tpu.memory_space<vmem>>, vector<8x8x768xf32>,
    %c0_9 = arith.constant 0 : index
    %c0_10 = arith.constant 0 : index
    %9 = vector.load %arg5[%c0_9, %c0_10] : memref<256x768xf32, #tpu.memory_space<vmem>>, vector<256x768xf32>
    %c0_11 = arith.constant 0 : index
    %c0_12 = arith.constant 0 : index
    %10 = vector.load %arg6[%c0_11, %c0_12] : memref<1x768xf32, #tpu.memory_space<vmem>>, vector<1x768xf32>
    %cst_13 = arith.constant 0.000000e+00 : f32
    %11 = vector.broadcast %cst_13 : f32 to vector<8x256xf32>
    %c0_i32 = arith.constant 0 : i32
    %c7_i32 = arith.constant 7 : i32
    %12 = arith.subi %c7_i32, %c0_i32 : i32
    %13 = arith.index_cast %c0_i32 : i32 to index
    %c0_14 = arith.constant 0 : index
    %c0_15 = arith.constant 0 : index
    %14 = vector.load %arg2[%13, %c0_14, %c0_15] : memref<8x8x1xf32, #tpu.memory_space<vmem>>, vector<1x8x1xf32>
    %15 = vector.shape_cast %14 : vector<1x8x1xf32> to vector<8x1xf32>
    %cst_16 = arith.constant 0.000000e+00 : f32
    %16 = vector.broadcast %cst_16 : f32 to vector<8x1xf32>
    %17 = arith.cmpf ogt, %15, %16 : vector<8x1xf32>
    %18 = arith.index_cast %12 : i32 to index
    %c0_17 = arith.constant 0 : index
    %c0_18 = arith.constant 0 : index
    %19 = vector.load %arg2[%18, %c0_17, %c0_18] : memref<8x8x1xf32, #tpu.memory_space<vmem>>, vector<1x8x1xf32>
    %20 = vector.shape_cast %19 : vector<1x8x1xf32> to vector<8x1xf32>
    %cst_19 = arith.constant 0.000000e+00 : f32
    %21 = vector.broadcast %cst_19 : f32 to vector<8x1xf32>
    %22 = arith.cmpf ogt, %20, %21 : vector<8x1xf32>
    %cst_20 = arith.constant dense<0.000000e+00> : vector<8x768xf32>
    %23 = tpu.matmul %11, %9, %cst_20 {dimension_numbers = #tpu.dot_dimension_numbers<[1], [0], [0], [1], [0, 0, 1, 1], [], []>} : vector<8x256xf32>, vector<256x768xf32>, vector<8x768xf32> -> vector<8x768xf32>
    %24 = vector.broadcast %10 : vector<1x768xf32> to vector<8x768xf32>
    %25 = arith.addf %23, %24 : vector<8x768xf32>
    %26 = arith.index_cast %c0_i32 : i32 to index
    %c0_21 = arith.constant 0 : index
    %c0_22 = arith.constant 0 : index
    %27 = vector.load %arg15[%26, %c0_21, %c0_22] : memref<8x8x768xf32, #tpu.memory_space<vmem>>, vector<1x8x768xf32>
    %28 = vector.shape_cast %27 : vector<1x8x768xf32> to vector<8x768xf32>
    %29 = arith.index_cast %12 : i32 to index
    %c0_23 = arith.constant 0 : index
    %c0_24 = arith.constant 0 : index
    %30 = vector.load %arg15[%29, %c0_23, %c0_24] : memref<8x8x768xf32, #tpu.memory_space<vmem>>, vector<1x8x768xf32>
    %31 = vector.shape_cast %30 : vector<1x8x768xf32> to vector<8x768xf32>
    %32 = vector.extract_strided_slice %11 {offsets = [0, 0], sizes = [8, 128], strides = [1, 1]} : vector<8x256xf32> to vector<8x128xf32>
    %33 = vector.extract_strided_slice %11 {offsets = [0, 128], sizes = [8, 128], strides = [1, 1]} : vector<8x256xf32> to vector<8x128xf32>
    %34 = vector.extract_strided_slice %28 {offsets = [0, 0], sizes = [8, 384], strides = [1, 1]} : vector<8x768xf32> to vector<8x384xf32>
    %35 = vector.extract_strided_slice %25 {offsets = [0, 0], sizes = [8, 384], strides = [1, 1]} : vector<8x768xf32> to vector<8x384xf32>
    %36 = vector.extract_strided_slice %34 {offsets = [0, 0], sizes = [8, 128], strides = [1, 1]} : vector<8x384xf32> to vector<8x128xf32>
    %37 = vector.extract_strided_slice %35 {offsets = [0, 0], sizes = [8, 128], strides = [1, 1]} : vector<8x384xf32> to vector<8x128xf32>
    %38 = arith.addf %36, %37 : vector<8x128xf32>
    %39 = arith.negf %38 : vector<8x128xf32>
    %40 = math.exp %39 : vector<8x128xf32>
    %cst_25 = arith.constant 1.000000e+00 : f32
    %41 = vector.broadcast %cst_25 : f32 to vector<8x128xf32>
    %42 = arith.addf %41, %40 : vector<8x128xf32>
    %43 = arith.divf %41, %42 : vector<8x128xf32>
    %44 = vector.extract_strided_slice %34 {offsets = [0, 128], sizes = [8, 128], strides = [1, 1]} : vector<8x384xf32> to vector<8x128xf32>
    %45 = vector.extract_strided_slice %35 {offsets = [0, 128], sizes = [8, 128], strides = [1, 1]} : vector<8x384xf32> to vector<8x128xf32>
    %46 = arith.addf %44, %45 : vector<8x128xf32>
    %47 = arith.negf %46 : vector<8x128xf32>
    %48 = math.exp %47 : vector<8x128xf32>
    %cst_26 = arith.constant 1.000000e+00 : f32
    %49 = vector.broadcast %cst_26 : f32 to vector<8x128xf32>
    %50 = arith.addf %49, %48 : vector<8x128xf32>
    %51 = arith.divf %49, %50 : vector<8x128xf32>
    %52 = vector.extract_strided_slice %34 {offsets = [0, 256], sizes = [8, 128], strides = [1, 1]} : vector<8x384xf32> to vector<8x128xf32>
    %53 = vector.extract_strided_slice %35 {offsets = [0, 256], sizes = [8, 128], strides = [1, 1]} : vector<8x384xf32> to vector<8x128xf32>
    %54 = arith.mulf %43, %53 : vector<8x128xf32>
    %55 = arith.addf %52, %54 : vector<8x128xf32>
    %56 = math.tanh %55 : vector<8x128xf32>
    %cst_27 = arith.constant 1.000000e+00 : f32
    %57 = vector.broadcast %cst_27 : f32 to vector<8x128xf32>
    %58 = arith.subf %57, %51 : vector<8x128xf32>
    %59 = arith.mulf %58, %56 : vector<8x128xf32>
    %60 = arith.mulf %51, %32 : vector<8x128xf32>
    %61 = arith.addf %59, %60 : vector<8x128xf32>
    %62 = vector.extract_strided_slice %31 {offsets = [0, 384], sizes = [8, 384], strides = [1, 1]} : vector<8x768xf32> to vector<8x384xf32>
    %63 = vector.extract_strided_slice %25 {offsets = [0, 384], sizes = [8, 384], strides = [1, 1]} : vector<8x768xf32> to vector<8x384xf32>
    %64 = vector.extract_strided_slice %62 {offsets = [0, 0], sizes = [8, 128], strides = [1, 1]} : vector<8x384xf32> to vector<8x128xf32>
    %65 = vector.extract_strided_slice %63 {offsets = [0, 0], sizes = [8, 128], strides = [1, 1]} : vector<8x384xf32> to vector<8x128xf32>
    %66 = arith.addf %64, %65 : vector<8x128xf32>
    %67 = arith.negf %66 : vector<8x128xf32>
    %68 = math.exp %67 : vector<8x128xf32>
    %cst_28 = arith.constant 1.000000e+00 : f32
    %69 = vector.broadcast %cst_28 : f32 to vector<8x128xf32>
    %70 = arith.addf %69, %68 : vector<8x128xf32>
    %71 = arith.divf %69, %70 : vector<8x128xf32>
    %72 = vector.extract_strided_slice %62 {offsets = [0, 128], sizes = [8, 128], strides = [1, 1]} : vector<8x384xf32> to vector<8x128xf32>
    %73 = vector.extract_strided_slice %63 {offsets = [0, 128], sizes = [8, 128], strides = [1, 1]} : vector<8x384xf32> to vector<8x128xf32>
    %74 = arith.addf %72, %73 : vector<8x128xf32>
    %75 = arith.negf %74 : vector<8x128xf32>
    %76 = math.exp %75 : vector<8x128xf32>
    %cst_29 = arith.constant 1.000000e+00 : f32
    %77 = vector.broadcast %cst_29 : f32 to vector<8x128xf32>
    %78 = arith.addf %77, %76 : vector<8x128xf32>
    %79 = arith.divf %77, %78 : vector<8x128xf32>
    %80 = vector.extract_strided_slice %62 {offsets = [0, 256], sizes = [8, 128], strides = [1, 1]} : vector<8x384xf32> to vector<8x128xf32>
    %81 = vector.extract_strided_slice %63 {offsets = [0, 256], sizes = [8, 128], strides = [1, 1]} : vector<8x384xf32> to vector<8x128xf32>
    %82 = arith.mulf %71, %81 : vector<8x128xf32>
    %83 = arith.addf %80, %82 : vector<8x128xf32>
    %84 = math.tanh %83 : vector<8x128xf32>
    %cst_30 = arith.constant 1.000000e+00 : f32
    %85 = vector.broadcast %cst_30 : f32 to vector<8x128xf32>
    %86 = arith.subf %85, %79 : vector<8x128xf32>
    %87 = arith.mulf %86, %84 : vector<8x128xf32>
    %88 = arith.mulf %79, %33 : vector<8x128xf32>
    %89 = arith.addf %87, %88 : vector<8x128xf32>
    %cst_31 = arith.constant 0.000000e+00 : f32
    %90 = vector.shape_cast %17 : vector<8x1xi1> to vector<8x1xi1>
    %91 = vector.broadcast %90 : vector<8x1xi1> to vector<8x128xi1>
    %92 = vector.broadcast %cst_31 : f32 to vector<8x128xf32>
    %93 = arith.select %91, %61, %92 : vector<8x128xi1>, vector<8x128xf32>
    %94 = arith.index_cast %c0_i32 : i32 to index
    %c0_32 = arith.constant 0 : index
    %c0_33 = arith.constant 0 : index
    %95 = vector.load %arg10[%94, %c0_32, %c0_33] : memref<8x8x256xf32, #tpu.memory_space<vmem>>, vector<1x8x128xf32>
    %96 = vector.shape_cast %95 : vector<1x8x128xf32> to vector<8x128xf32>
    %97 = vector.shape_cast %93 : vector<8x128xf32> to vector<1x8x128xf32>
    tpu.vector_store %arg10[%94, %c0_32, %c0_33], %97 {strides = array<i32>} : memref<8x8x256xf32, #tpu.memory_space<vmem>>, vector<1x8x128xf32>,
    %cst_34 = arith.constant 0.000000e+00 : f32
    %98 = vector.shape_cast %22 : vector<8x1xi1> to vector<8x1xi1>
    %99 = vector.broadcast %98 : vector<8x1xi1> to vector<8x128xi1>
    %100 = vector.broadcast %cst_34 : f32 to vector<8x128xf32>
    %101 = arith.select %99, %89, %100 : vector<8x128xi1>, vector<8x128xf32>
    %102 = arith.index_cast %12 : i32 to index
    %c0_35 = arith.constant 0 : index
    %c128 = arith.constant 128 : index
    %103 = vector.load %arg10[%102, %c0_35, %c128] : memref<8x8x256xf32, #tpu.memory_space<vmem>>, vector<1x8x128xf32>
    %104 = vector.shape_cast %103 : vector<1x8x128xf32> to vector<8x128xf32>
    %105 = vector.shape_cast %101 : vector<8x128xf32> to vector<1x8x128xf32>
    tpu.vector_store %arg10[%102, %c0_35, %c128], %105 {strides = array<i32>} : memref<8x8x256xf32, #tpu.memory_space<vmem>>, vector<1x8x128xf32>,
    %106 = vector.shape_cast %17 : vector<8x1xi1> to vector<8x1xi1>
    %107 = vector.broadcast %106 : vector<8x1xi1> to vector<8x128xi1>
    %108 = arith.select %107, %61, %32 : vector<8x128xi1>, vector<8x128xf32>
    %109 = vector.shape_cast %22 : vector<8x1xi1> to vector<8x1xi1>
    %110 = vector.broadcast %109 : vector<8x1xi1> to vector<8x128xi1>
    %111 = arith.select %110, %89, %33 : vector<8x128xi1>, vector<8x128xf32>
    %112 = tpu.concatenate %108, %111 in 1 : vector<8x128xf32>, vector<8x128xf32> -> vector<8x256xf32>
    %c1_i32 = arith.constant 1 : i32
    %c7_i32_36 = arith.constant 7 : i32
    %113 = arith.subi %c7_i32_36, %c1_i32 : i32
    %114 = arith.index_cast %c1_i32 : i32 to index
    %c0_37 = arith.constant 0 : index
    %c0_38 = arith.constant 0 : index
    %115 = vector.load %arg2[%114, %c0_37, %c0_38] : memref<8x8x1xf32, #tpu.memory_space<vmem>>, vector<1x8x1xf32>
    %116 = vector.shape_cast %115 : vector<1x8x1xf32> to vector<8x1xf32>
    %cst_39 = arith.constant 0.000000e+00 : f32
    %117 = vector.broadcast %cst_39 : f32 to vector<8x1xf32>
    %118 = arith.cmpf ogt, %116, %117 : vector<8x1xf32>
    %119 = arith.index_cast %113 : i32 to index
    %c0_40 = arith.constant 0 : index
    %c0_41 = arith.constant 0 : index
    %120 = vector.load %arg2[%119, %c0_40, %c0_41] : memref<8x8x1xf32, #tpu.memory_space<vmem>>, vector<1x8x1xf32>
    %121 = vector.shape_cast %120 : vector<1x8x1xf32> to vector<8x1xf32>
    %cst_42 = arith.constant 0.000000e+00 : f32
    %122 = vector.broadcast %cst_42 : f32 to vector<8x1xf32>
    %123 = arith.cmpf ogt, %121, %122 : vector<8x1xf32>
    %cst_43 = arith.constant dense<0.000000e+00> : vector<8x768xf32>
    %124 = tpu.matmul %112, %9, %cst_43 {dimension_numbers = #tpu.dot_dimension_numbers<[1], [0], [0], [1], [0, 0, 1, 1], [], []>} : vector<8x256xf32>, vector<256x768xf32>, vector<8x768xf32> -> vector<8x768xf32>
    %125 = vector.broadcast %10 : vector<1x768xf32> to vector<8x768xf32>
    %126 = arith.addf %124, %125 : vector<8x768xf32>
    %127 = arith.index_cast %c1_i32 : i32 to index
    %c0_44 = arith.constant 0 : index
    %c0_45 = arith.constant 0 : index
    %128 = vector.load %arg15[%127, %c0_44, %c0_45] : memref<8x8x768xf32, #tpu.memory_space<vmem>>, vector<1x8x768xf32>
    %129 = vector.shape_cast %128 : vector<1x8x768xf32> to vector<8x768xf32>
    %130 = arith.index_cast %113 : i32 to index
    %c0_46 = arith.constant 0 : index
    %c0_47 = arith.constant 0 : index
    %131 = vector.load %arg15[%130, %c0_46, %c0_47] : memref<8x8x768xf32, #tpu.memory_space<vmem>>, vector<1x8x768xf32>
    %132 = vector.shape_cast %131 : vector<1x8x768xf32> to vector<8x768xf32>
    %133 = vector.extract_strided_slice %112 {offsets = [0, 0], sizes = [8, 128], strides = [1, 1]} : vector<8x256xf32> to vector<8x128xf32>
    %134 = vector.extract_strided_slice %112 {offsets = [0, 128], sizes = [8, 128], strides = [1, 1]} : vector<8x256xf32> to vector<8x128xf32>
    %135 = vector.extract_strided_slice %129 {offsets = [0, 0], sizes = [8, 384], strides = [1, 1]} : vector<8x768xf32> to vector<8x384xf32>
    %136 = vector.extract_strided_slice %126 {offsets = [0, 0], sizes = [8, 384], strides = [1, 1]} : vector<8x768xf32> to vector<8x384xf32>
    %137 = vector.extract_strided_slice %135 {offsets = [0, 0], sizes = [8, 128], strides = [1, 1]} : vector<8x384xf32> to vector<8x128xf32>
    %138 = vector.extract_strided_slice %136 {offsets = [0, 0], sizes = [8, 128], strides = [1, 1]} : vector<8x384xf32> to vector<8x128xf32>
    %139 = arith.addf %137, %138 : vector<8x128xf32>
    %140 = arith.negf %139 : vector<8x128xf32>
    %141 = math.exp %140 : vector<8x128xf32>
    %cst_48 = arith.constant 1.000000e+00 : f32
    %142 = vector.broadcast %cst_48 : f32 to vector<8x128xf32>
    %143 = arith.addf %142, %141 : vector<8x128xf32>
    %144 = arith.divf %142, %143 : vector<8x128xf32>
    %145 = vector.extract_strided_slice %135 {offsets = [0, 128], sizes = [8, 128], strides = [1, 1]} : vector<8x384xf32> to vector<8x128xf32>
    %146 = vector.extract_strided_slice %136 {offsets = [0, 128], sizes = [8, 128], strides = [1, 1]} : vector<8x384xf32> to vector<8x128xf32>
    %147 = arith.addf %145, %146 : vector<8x128xf32>
    %148 = arith.negf %147 : vector<8x128xf32>
    %149 = math.exp %148 : vector<8x128xf32>
    %cst_49 = arith.constant 1.000000e+00 : f32
    %150 = vector.broadcast %cst_49 : f32 to vector<8x128xf32>
    %151 = arith.addf %150, %149 : vector<8x128xf32>
    %152 = arith.divf %150, %151 : vector<8x128xf32>
    %153 = vector.extract_strided_slice %135 {offsets = [0, 256], sizes = [8, 128], strides = [1, 1]} : vector<8x384xf32> to vector<8x128xf32>
    %154 = vector.extract_strided_slice %136 {offsets = [0, 256], sizes = [8, 128], strides = [1, 1]} : vector<8x384xf32> to vector<8x128xf32>
    %155 = arith.mulf %144, %154 : vector<8x128xf32>
    %156 = arith.addf %153, %155 : vector<8x128xf32>
    %157 = math.tanh %156 : vector<8x128xf32>
    %cst_50 = arith.constant 1.000000e+00 : f32
    %158 = vector.broadcast %cst_50 : f32 to vector<8x128xf32>
    %159 = arith.subf %158, %152 : vector<8x128xf32>
    %160 = arith.mulf %159, %157 : vector<8x128xf32>
    %161 = arith.mulf %152, %133 : vector<8x128xf32>
    %162 = arith.addf %160, %161 : vector<8x128xf32>
    %163 = vector.extract_strided_slice %132 {offsets = [0, 384], sizes = [8, 384], strides = [1, 1]} : vector<8x768xf32> to vector<8x384xf32>
    %164 = vector.extract_strided_slice %126 {offsets = [0, 384], sizes = [8, 384], strides = [1, 1]} : vector<8x768xf32> to vector<8x384xf32>
    %165 = vector.extract_strided_slice %163 {offsets = [0, 0], sizes = [8, 128], strides = [1, 1]} : vector<8x384xf32> to vector<8x128xf32>
    %166 = vector.extract_strided_slice %164 {offsets = [0, 0], sizes = [8, 128], strides = [1, 1]} : vector<8x384xf32> to vector<8x128xf32>
    %167 = arith.addf %165, %166 : vector<8x128xf32>
    %168 = arith.negf %167 : vector<8x128xf32>
    %169 = math.exp %168 : vector<8x128xf32>
    %cst_51 = arith.constant 1.000000e+00 : f32
    %170 = vector.broadcast %cst_51 : f32 to vector<8x128xf32>
    %171 = arith.addf %170, %169 : vector<8x128xf32>
    %172 = arith.divf %170, %171 : vector<8x128xf32>
    %173 = vector.extract_strided_slice %163 {offsets = [0, 128], sizes = [8, 128], strides = [1, 1]} : vector<8x384xf32> to vector<8x128xf32>
    %174 = vector.extract_strided_slice %164 {offsets = [0, 128], sizes = [8, 128], strides = [1, 1]} : vector<8x384xf32> to vector<8x128xf32>
    %175 = arith.addf %173, %174 : vector<8x128xf32>
    %176 = arith.negf %175 : vector<8x128xf32>
    %177 = math.exp %176 : vector<8x128xf32>
    %cst_52 = arith.constant 1.000000e+00 : f32
    %178 = vector.broadcast %cst_52 : f32 to vector<8x128xf32>
    %179 = arith.addf %178, %177 : vector<8x128xf32>
    %180 = arith.divf %178, %179 : vector<8x128xf32>
    %181 = vector.extract_strided_slice %163 {offsets = [0, 256], sizes = [8, 128], strides = [1, 1]} : vector<8x384xf32> to vector<8x128xf32>
    %182 = vector.extract_strided_slice %164 {offsets = [0, 256], sizes = [8, 128], strides = [1, 1]} : vector<8x384xf32> to vector<8x128xf32>
    %183 = arith.mulf %172, %182 : vector<8x128xf32>
    %184 = arith.addf %181, %183 : vector<8x128xf32>
    %185 = math.tanh %184 : vector<8x128xf32>
    %cst_53 = arith.constant 1.000000e+00 : f32
    %186 = vector.broadcast %cst_53 : f32 to vector<8x128xf32>
    %187 = arith.subf %186, %180 : vector<8x128xf32>
    %188 = arith.mulf %187, %185 : vector<8x128xf32>
    %189 = arith.mulf %180, %134 : vector<8x128xf32>
    %190 = arith.addf %188, %189 : vector<8x128xf32>
    %cst_54 = arith.constant 0.000000e+00 : f32
    %191 = vector.shape_cast %118 : vector<8x1xi1> to vector<8x1xi1>
    %192 = vector.broadcast %191 : vector<8x1xi1> to vector<8x128xi1>
    %193 = vector.broadcast %cst_54 : f32 to vector<8x128xf32>
    %194 = arith.select %192, %162, %193 : vector<8x128xi1>, vector<8x128xf32>
    %195 = arith.index_cast %c1_i32 : i32 to index
    %c0_55 = arith.constant 0 : index
    %c0_56 = arith.constant 0 : index
    %196 = vector.load %arg10[%195, %c0_55, %c0_56] : memref<8x8x256xf32, #tpu.memory_space<vmem>>, vector<1x8x128xf32>
    %197 = vector.shape_cast %196 : vector<1x8x128xf32> to vector<8x128xf32>
    %198 = vector.shape_cast %194 : vector<8x128xf32> to vector<1x8x128xf32>
    tpu.vector_store %arg10[%195, %c0_55, %c0_56], %198 {strides = array<i32>} : memref<8x8x256xf32, #tpu.memory_space<vmem>>, vector<1x8x128xf32>,
    %cst_57 = arith.constant 0.000000e+00 : f32
    %199 = vector.shape_cast %123 : vector<8x1xi1> to vector<8x1xi1>
    %200 = vector.broadcast %199 : vector<8x1xi1> to vector<8x128xi1>
    %201 = vector.broadcast %cst_57 : f32 to vector<8x128xf32>
    %202 = arith.select %200, %190, %201 : vector<8x128xi1>, vector<8x128xf32>
    %203 = arith.index_cast %113 : i32 to index
    %c0_58 = arith.constant 0 : index
    %c128_59 = arith.constant 128 : index
    %204 = vector.load %arg10[%203, %c0_58, %c128_59] : memref<8x8x256xf32, #tpu.memory_space<vmem>>, vector<1x8x128xf32>
    %205 = vector.shape_cast %204 : vector<1x8x128xf32> to vector<8x128xf32>
    %206 = vector.shape_cast %202 : vector<8x128xf32> to vector<1x8x128xf32>
    tpu.vector_store %arg10[%203, %c0_58, %c128_59], %206 {strides = array<i32>} : memref<8x8x256xf32, #tpu.memory_space<vmem>>, vector<1x8x128xf32>,
    %207 = vector.shape_cast %118 : vector<8x1xi1> to vector<8x1xi1>
    %208 = vector.broadcast %207 : vector<8x1xi1> to vector<8x128xi1>
    %209 = arith.select %208, %162, %133 : vector<8x128xi1>, vector<8x128xf32>
    %210 = vector.shape_cast %123 : vector<8x1xi1> to vector<8x1xi1>
    %211 = vector.broadcast %210 : vector<8x1xi1> to vector<8x128xi1>
    %212 = arith.select %211, %190, %134 : vector<8x128xi1>, vector<8x128xf32>
    %213 = tpu.concatenate %209, %212 in 1 : vector<8x128xf32>, vector<8x128xf32> -> vector<8x256xf32>
    %c2_i32 = arith.constant 2 : i32
    %c7_i32_60 = arith.constant 7 : i32
    %214 = arith.subi %c7_i32_60, %c2_i32 : i32
    %215 = arith.index_cast %c2_i32 : i32 to index
    %c0_61 = arith.constant 0 : index
    %c0_62 = arith.constant 0 : index
    %216 = vector.load %arg2[%215, %c0_61, %c0_62] : memref<8x8x1xf32, #tpu.memory_space<vmem>>, vector<1x8x1xf32>
    %217 = vector.shape_cast %216 : vector<1x8x1xf32> to vector<8x1xf32>
    %cst_63 = arith.constant 0.000000e+00 : f32
    %218 = vector.broadcast %cst_63 : f32 to vector<8x1xf32>
    %219 = arith.cmpf ogt, %217, %218 : vector<8x1xf32>
    %220 = arith.index_cast %214 : i32 to index
    %c0_64 = arith.constant 0 : index
    %c0_65 = arith.constant 0 : index
    %221 = vector.load %arg2[%220, %c0_64, %c0_65] : memref<8x8x1xf32, #tpu.memory_space<vmem>>, vector<1x8x1xf32>
    %222 = vector.shape_cast %221 : vector<1x8x1xf32> to vector<8x1xf32>
    %cst_66 = arith.constant 0.000000e+00 : f32
    %223 = vector.broadcast %cst_66 : f32 to vector<8x1xf32>
    %224 = arith.cmpf ogt, %222, %223 : vector<8x1xf32>
    %cst_67 = arith.constant dense<0.000000e+00> : vector<8x768xf32>
    %225 = tpu.matmul %213, %9, %cst_67 {dimension_numbers = #tpu.dot_dimension_numbers<[1], [0], [0], [1], [0, 0, 1, 1], [], []>} : vector<8x256xf32>, vector<256x768xf32>, vector<8x768xf32> -> vector<8x768xf32>
    %226 = vector.broadcast %10 : vector<1x768xf32> to vector<8x768xf32>
    %227 = arith.addf %225, %226 : vector<8x768xf32>
    %228 = arith.index_cast %c2_i32 : i32 to index
    %c0_68 = arith.constant 0 : index
    %c0_69 = arith.constant 0 : index
    %229 = vector.load %arg15[%228, %c0_68, %c0_69] : memref<8x8x768xf32, #tpu.memory_space<vmem>>, vector<1x8x768xf32>
    %230 = vector.shape_cast %229 : vector<1x8x768xf32> to vector<8x768xf32>
    %231 = arith.index_cast %214 : i32 to index
    %c0_70 = arith.constant 0 : index
    %c0_71 = arith.constant 0 : index
    %232 = vector.load %arg15[%231, %c0_70, %c0_71] : memref<8x8x768xf32, #tpu.memory_space<vmem>>, vector<1x8x768xf32>
    %233 = vector.shape_cast %232 : vector<1x8x768xf32> to vector<8x768xf32>
    %234 = vector.extract_strided_slice %213 {offsets = [0, 0], sizes = [8, 128], strides = [1, 1]} : vector<8x256xf32> to vector<8x128xf32>
    %235 = vector.extract_strided_slice %213 {offsets = [0, 128], sizes = [8, 128], strides = [1, 1]} : vector<8x256xf32> to vector<8x128xf32>
    %236 = vector.extract_strided_slice %230 {offsets = [0, 0], sizes = [8, 384], strides = [1, 1]} : vector<8x768xf32> to vector<8x384xf32>
    %237 = vector.extract_strided_slice %227 {offsets = [0, 0], sizes = [8, 384], strides = [1, 1]} : vector<8x768xf32> to vector<8x384xf32>
    %238 = vector.extract_strided_slice %236 {offsets = [0, 0], sizes = [8, 128], strides = [1, 1]} : vector<8x384xf32> to vector<8x128xf32>
    %239 = vector.extract_strided_slice %237 {offsets = [0, 0], sizes = [8, 128], strides = [1, 1]} : vector<8x384xf32> to vector<8x128xf32>
    %240 = arith.addf %238, %239 : vector<8x128xf32>
    %241 = arith.negf %240 : vector<8x128xf32>
    %242 = math.exp %241 : vector<8x128xf32>
    %cst_72 = arith.constant 1.000000e+00 : f32
    %243 = vector.broadcast %cst_72 : f32 to vector<8x128xf32>
    %244 = arith.addf %243, %242 : vector<8x128xf32>
    %245 = arith.divf %243, %244 : vector<8x128xf32>
    %246 = vector.extract_strided_slice %236 {offsets = [0, 128], sizes = [8, 128], strides = [1, 1]} : vector<8x384xf32> to vector<8x128xf32>
    %247 = vector.extract_strided_slice %237 {offsets = [0, 128], sizes = [8, 128], strides = [1, 1]} : vector<8x384xf32> to vector<8x128xf32>
    %248 = arith.addf %246, %247 : vector<8x128xf32>
    %249 = arith.negf %248 : vector<8x128xf32>
    %250 = math.exp %249 : vector<8x128xf32>
    %cst_73 = arith.constant 1.000000e+00 : f32
    %251 = vector.broadcast %cst_73 : f32 to vector<8x128xf32>
    %252 = arith.addf %251, %250 : vector<8x128xf32>
    %253 = arith.divf %251, %252 : vector<8x128xf32>
    %254 = vector.extract_strided_slice %236 {offsets = [0, 256], sizes = [8, 128], strides = [1, 1]} : vector<8x384xf32> to vector<8x128xf32>
    %255 = vector.extract_strided_slice %237 {offsets = [0, 256], sizes = [8, 128], strides = [1, 1]} : vector<8x384xf32> to vector<8x128xf32>
    %256 = arith.mulf %245, %255 : vector<8x128xf32>
    %257 = arith.addf %254, %256 : vector<8x128xf32>
    %258 = math.tanh %257 : vector<8x128xf32>
    %cst_74 = arith.constant 1.000000e+00 : f32
    %259 = vector.broadcast %cst_74 : f32 to vector<8x128xf32>
    %260 = arith.subf %259, %253 : vector<8x128xf32>
    %261 = arith.mulf %260, %258 : vector<8x128xf32>
    %262 = arith.mulf %253, %234 : vector<8x128xf32>
    %263 = arith.addf %261, %262 : vector<8x128xf32>
    %264 = vector.extract_strided_slice %233 {offsets = [0, 384], sizes = [8, 384], strides = [1, 1]} : vector<8x768xf32> to vector<8x384xf32>
    %265 = vector.extract_strided_slice %227 {offsets = [0, 384], sizes = [8, 384], strides = [1, 1]} : vector<8x768xf32> to vector<8x384xf32>
    %266 = vector.extract_strided_slice %264 {offsets = [0, 0], sizes = [8, 128], strides = [1, 1]} : vector<8x384xf32> to vector<8x128xf32>
    %267 = vector.extract_strided_slice %265 {offsets = [0, 0], sizes = [8, 128], strides = [1, 1]} : vector<8x384xf32> to vector<8x128xf32>
    %268 = arith.addf %266, %267 : vector<8x128xf32>
    %269 = arith.negf %268 : vector<8x128xf32>
    %270 = math.exp %269 : vector<8x128xf32>
    %cst_75 = arith.constant 1.000000e+00 : f32
    %271 = vector.broadcast %cst_75 : f32 to vector<8x128xf32>
    %272 = arith.addf %271, %270 : vector<8x128xf32>
    %273 = arith.divf %271, %272 : vector<8x128xf32>
    %274 = vector.extract_strided_slice %264 {offsets = [0, 128], sizes = [8, 128], strides = [1, 1]} : vector<8x384xf32> to vector<8x128xf32>
    %275 = vector.extract_strided_slice %265 {offsets = [0, 128], sizes = [8, 128], strides = [1, 1]} : vector<8x384xf32> to vector<8x128xf32>
    %276 = arith.addf %274, %275 : vector<8x128xf32>
    %277 = arith.negf %276 : vector<8x128xf32>
    %278 = math.exp %277 : vector<8x128xf32>
    %cst_76 = arith.constant 1.000000e+00 : f32
    %279 = vector.broadcast %cst_76 : f32 to vector<8x128xf32>
    %280 = arith.addf %279, %278 : vector<8x128xf32>
    %281 = arith.divf %279, %280 : vector<8x128xf32>
    %282 = vector.extract_strided_slice %264 {offsets = [0, 256], sizes = [8, 128], strides = [1, 1]} : vector<8x384xf32> to vector<8x128xf32>
    %283 = vector.extract_strided_slice %265 {offsets = [0, 256], sizes = [8, 128], strides = [1, 1]} : vector<8x384xf32> to vector<8x128xf32>
    %284 = arith.mulf %273, %283 : vector<8x128xf32>
    %285 = arith.addf %282, %284 : vector<8x128xf32>
    %286 = math.tanh %285 : vector<8x128xf32>
    %cst_77 = arith.constant 1.000000e+00 : f32
    %287 = vector.broadcast %cst_77 : f32 to vector<8x128xf32>
    %288 = arith.subf %287, %281 : vector<8x128xf32>
    %289 = arith.mulf %288, %286 : vector<8x128xf32>
    %290 = arith.mulf %281, %235 : vector<8x128xf32>
    %291 = arith.addf %289, %290 : vector<8x128xf32>
    %cst_78 = arith.constant 0.000000e+00 : f32
    %292 = vector.shape_cast %219 : vector<8x1xi1> to vector<8x1xi1>
    %293 = vector.broadcast %292 : vector<8x1xi1> to vector<8x128xi1>
    %294 = vector.broadcast %cst_78 : f32 to vector<8x128xf32>
    %295 = arith.select %293, %263, %294 : vector<8x128xi1>, vector<8x128xf32>
    %296 = arith.index_cast %c2_i32 : i32 to index
    %c0_79 = arith.constant 0 : index
    %c0_80 = arith.constant 0 : index
    %297 = vector.load %arg10[%296, %c0_79, %c0_80] : memref<8x8x256xf32, #tpu.memory_space<vmem>>, vector<1x8x128xf32>
    %298 = vector.shape_cast %297 : vector<1x8x128xf32> to vector<8x128xf32>
    %299 = vector.shape_cast %295 : vector<8x128xf32> to vector<1x8x128xf32>
    tpu.vector_store %arg10[%296, %c0_79, %c0_80], %299 {strides = array<i32>} : memref<8x8x256xf32, #tpu.memory_space<vmem>>, vector<1x8x128xf32>,
    %cst_81 = arith.constant 0.000000e+00 : f32
    %300 = vector.shape_cast %224 : vector<8x1xi1> to vector<8x1xi1>
    %301 = vector.broadcast %300 : vector<8x1xi1> to vector<8x128xi1>
    %302 = vector.broadcast %cst_81 : f32 to vector<8x128xf32>
    %303 = arith.select %301, %291, %302 : vector<8x128xi1>, vector<8x128xf32>
    %304 = arith.index_cast %214 : i32 to index
    %c0_82 = arith.constant 0 : index
    %c128_83 = arith.constant 128 : index
    %305 = vector.load %arg10[%304, %c0_82, %c128_83] : memref<8x8x256xf32, #tpu.memory_space<vmem>>, vector<1x8x128xf32>
    %306 = vector.shape_cast %305 : vector<1x8x128xf32> to vector<8x128xf32>
    %307 = vector.shape_cast %303 : vector<8x128xf32> to vector<1x8x128xf32>
    tpu.vector_store %arg10[%304, %c0_82, %c128_83], %307 {strides = array<i32>} : memref<8x8x256xf32, #tpu.memory_space<vmem>>, vector<1x8x128xf32>,
    %308 = vector.shape_cast %219 : vector<8x1xi1> to vector<8x1xi1>
    %309 = vector.broadcast %308 : vector<8x1xi1> to vector<8x128xi1>
    %310 = arith.select %309, %263, %234 : vector<8x128xi1>, vector<8x128xf32>
    %311 = vector.shape_cast %224 : vector<8x1xi1> to vector<8x1xi1>
    %312 = vector.broadcast %311 : vector<8x1xi1> to vector<8x128xi1>
    %313 = arith.select %312, %291, %235 : vector<8x128xi1>, vector<8x128xf32>
    %314 = tpu.concatenate %310, %313 in 1 : vector<8x128xf32>, vector<8x128xf32> -> vector<8x256xf32>
    %c3_i32 = arith.constant 3 : i32
    %c7_i32_84 = arith.constant 7 : i32
    %315 = arith.subi %c7_i32_84, %c3_i32 : i32
    %316 = arith.index_cast %c3_i32 : i32 to index
    %c0_85 = arith.constant 0 : index
    %c0_86 = arith.constant 0 : index
    %317 = vector.load %arg2[%316, %c0_85, %c0_86] : memref<8x8x1xf32, #tpu.memory_space<vmem>>, vector<1x8x1xf32>
    %318 = vector.shape_cast %317 : vector<1x8x1xf32> to vector<8x1xf32>
    %cst_87 = arith.constant 0.000000e+00 : f32
    %319 = vector.broadcast %cst_87 : f32 to vector<8x1xf32>
    %320 = arith.cmpf ogt, %318, %319 : vector<8x1xf32>
    %321 = arith.index_cast %315 : i32 to index
    %c0_88 = arith.constant 0 : index
    %c0_89 = arith.constant 0 : index
    %322 = vector.load %arg2[%321, %c0_88, %c0_89] : memref<8x8x1xf32, #tpu.memory_space<vmem>>, vector<1x8x1xf32>
    %323 = vector.shape_cast %322 : vector<1x8x1xf32> to vector<8x1xf32>
    %cst_90 = arith.constant 0.000000e+00 : f32
    %324 = vector.broadcast %cst_90 : f32 to vector<8x1xf32>
    %325 = arith.cmpf ogt, %323, %324 : vector<8x1xf32>
    %cst_91 = arith.constant dense<0.000000e+00> : vector<8x768xf32>
    %326 = tpu.matmul %314, %9, %cst_91 {dimension_numbers = #tpu.dot_dimension_numbers<[1], [0], [0], [1], [0, 0, 1, 1], [], []>} : vector<8x256xf32>, vector<256x768xf32>, vector<8x768xf32> -> vector<8x768xf32>
    %327 = vector.broadcast %10 : vector<1x768xf32> to vector<8x768xf32>
    %328 = arith.addf %326, %327 : vector<8x768xf32>
    %329 = arith.index_cast %c3_i32 : i32 to index
    %c0_92 = arith.constant 0 : index
    %c0_93 = arith.constant 0 : index
    %330 = vector.load %arg15[%329, %c0_92, %c0_93] : memref<8x8x768xf32, #tpu.memory_space<vmem>>, vector<1x8x768xf32>
    %331 = vector.shape_cast %330 : vector<1x8x768xf32> to vector<8x768xf32>
    %332 = arith.index_cast %315 : i32 to index
    %c0_94 = arith.constant 0 : index
    %c0_95 = arith.constant 0 : index
    %333 = vector.load %arg15[%332, %c0_94, %c0_95] : memref<8x8x768xf32, #tpu.memory_space<vmem>>, vector<1x8x768xf32>
    %334 = vector.shape_cast %333 : vector<1x8x768xf32> to vector<8x768xf32>
    %335 = vector.extract_strided_slice %314 {offsets = [0, 0], sizes = [8, 128], strides = [1, 1]} : vector<8x256xf32> to vector<8x128xf32>
    %336 = vector.extract_strided_slice %314 {offsets = [0, 128], sizes = [8, 128], strides = [1, 1]} : vector<8x256xf32> to vector<8x128xf32>
    %337 = vector.extract_strided_slice %331 {offsets = [0, 0], sizes = [8, 384], strides = [1, 1]} : vector<8x768xf32> to vector<8x384xf32>
    %338 = vector.extract_strided_slice %328 {offsets = [0, 0], sizes = [8, 384], strides = [1, 1]} : vector<8x768xf32> to vector<8x384xf32>
    %339 = vector.extract_strided_slice %337 {offsets = [0, 0], sizes = [8, 128], strides = [1, 1]} : vector<8x384xf32> to vector<8x128xf32>
    %340 = vector.extract_strided_slice %338 {offsets = [0, 0], sizes = [8, 128], strides = [1, 1]} : vector<8x384xf32> to vector<8x128xf32>
    %341 = arith.addf %339, %340 : vector<8x128xf32>
    %342 = arith.negf %341 : vector<8x128xf32>
    %343 = math.exp %342 : vector<8x128xf32>
    %cst_96 = arith.constant 1.000000e+00 : f32
    %344 = vector.broadcast %cst_96 : f32 to vector<8x128xf32>
    %345 = arith.addf %344, %343 : vector<8x128xf32>
    %346 = arith.divf %344, %345 : vector<8x128xf32>
    %347 = vector.extract_strided_slice %337 {offsets = [0, 128], sizes = [8, 128], strides = [1, 1]} : vector<8x384xf32> to vector<8x128xf32>
    %348 = vector.extract_strided_slice %338 {offsets = [0, 128], sizes = [8, 128], strides = [1, 1]} : vector<8x384xf32> to vector<8x128xf32>
    %349 = arith.addf %347, %348 : vector<8x128xf32>
    %350 = arith.negf %349 : vector<8x128xf32>
    %351 = math.exp %350 : vector<8x128xf32>
    %cst_97 = arith.constant 1.000000e+00 : f32
    %352 = vector.broadcast %cst_97 : f32 to vector<8x128xf32>
    %353 = arith.addf %352, %351 : vector<8x128xf32>
    %354 = arith.divf %352, %353 : vector<8x128xf32>
    %355 = vector.extract_strided_slice %337 {offsets = [0, 256], sizes = [8, 128], strides = [1, 1]} : vector<8x384xf32> to vector<8x128xf32>
    %356 = vector.extract_strided_slice %338 {offsets = [0, 256], sizes = [8, 128], strides = [1, 1]} : vector<8x384xf32> to vector<8x128xf32>
    %357 = arith.mulf %346, %356 : vector<8x128xf32>
    %358 = arith.addf %355, %357 : vector<8x128xf32>
    %359 = math.tanh %358 : vector<8x128xf32>
    %cst_98 = arith.constant 1.000000e+00 : f32
    %360 = vector.broadcast %cst_98 : f32 to vector<8x128xf32>
    %361 = arith.subf %360, %354 : vector<8x128xf32>
    %362 = arith.mulf %361, %359 : vector<8x128xf32>
    %363 = arith.mulf %354, %335 : vector<8x128xf32>
    %364 = arith.addf %362, %363 : vector<8x128xf32>
    %365 = vector.extract_strided_slice %334 {offsets = [0, 384], sizes = [8, 384], strides = [1, 1]} : vector<8x768xf32> to vector<8x384xf32>
    %366 = vector.extract_strided_slice %328 {offsets = [0, 384], sizes = [8, 384], strides = [1, 1]} : vector<8x768xf32> to vector<8x384xf32>
    %367 = vector.extract_strided_slice %365 {offsets = [0, 0], sizes = [8, 128], strides = [1, 1]} : vector<8x384xf32> to vector<8x128xf32>
    %368 = vector.extract_strided_slice %366 {offsets = [0, 0], sizes = [8, 128], strides = [1, 1]} : vector<8x384xf32> to vector<8x128xf32>
    %369 = arith.addf %367, %368 : vector<8x128xf32>
    %370 = arith.negf %369 : vector<8x128xf32>
    %371 = math.exp %370 : vector<8x128xf32>
    %cst_99 = arith.constant 1.000000e+00 : f32
    %372 = vector.broadcast %cst_99 : f32 to vector<8x128xf32>
    %373 = arith.addf %372, %371 : vector<8x128xf32>
    %374 = arith.divf %372, %373 : vector<8x128xf32>
    %375 = vector.extract_strided_slice %365 {offsets = [0, 128], sizes = [8, 128], strides = [1, 1]} : vector<8x384xf32> to vector<8x128xf32>
    %376 = vector.extract_strided_slice %366 {offsets = [0, 128], sizes = [8, 128], strides = [1, 1]} : vector<8x384xf32> to vector<8x128xf32>
    %377 = arith.addf %375, %376 : vector<8x128xf32>
    %378 = arith.negf %377 : vector<8x128xf32>
    %379 = math.exp %378 : vector<8x128xf32>
    %cst_100 = arith.constant 1.000000e+00 : f32
    %380 = vector.broadcast %cst_100 : f32 to vector<8x128xf32>
    %381 = arith.addf %380, %379 : vector<8x128xf32>
    %382 = arith.divf %380, %381 : vector<8x128xf32>
    %383 = vector.extract_strided_slice %365 {offsets = [0, 256], sizes = [8, 128], strides = [1, 1]} : vector<8x384xf32> to vector<8x128xf32>
    %384 = vector.extract_strided_slice %366 {offsets = [0, 256], sizes = [8, 128], strides = [1, 1]} : vector<8x384xf32> to vector<8x128xf32>
    %385 = arith.mulf %374, %384 : vector<8x128xf32>
    %386 = arith.addf %383, %385 : vector<8x128xf32>
    %387 = math.tanh %386 : vector<8x128xf32>
    %cst_101 = arith.constant 1.000000e+00 : f32
    %388 = vector.broadcast %cst_101 : f32 to vector<8x128xf32>
    %389 = arith.subf %388, %382 : vector<8x128xf32>
    %390 = arith.mulf %389, %387 : vector<8x128xf32>
    %391 = arith.mulf %382, %336 : vector<8x128xf32>
    %392 = arith.addf %390, %391 : vector<8x128xf32>
    %cst_102 = arith.constant 0.000000e+00 : f32
    %393 = vector.shape_cast %320 : vector<8x1xi1> to vector<8x1xi1>
    %394 = vector.broadcast %393 : vector<8x1xi1> to vector<8x128xi1>
    %395 = vector.broadcast %cst_102 : f32 to vector<8x128xf32>
    %396 = arith.select %394, %364, %395 : vector<8x128xi1>, vector<8x128xf32>
    %397 = arith.index_cast %c3_i32 : i32 to index
    %c0_103 = arith.constant 0 : index
    %c0_104 = arith.constant 0 : index
    %398 = vector.load %arg10[%397, %c0_103, %c0_104] : memref<8x8x256xf32, #tpu.memory_space<vmem>>, vector<1x8x128xf32>
    %399 = vector.shape_cast %398 : vector<1x8x128xf32> to vector<8x128xf32>
    %400 = vector.shape_cast %396 : vector<8x128xf32> to vector<1x8x128xf32>
    tpu.vector_store %arg10[%397, %c0_103, %c0_104], %400 {strides = array<i32>} : memref<8x8x256xf32, #tpu.memory_space<vmem>>, vector<1x8x128xf32>,
    %cst_105 = arith.constant 0.000000e+00 : f32
    %401 = vector.shape_cast %325 : vector<8x1xi1> to vector<8x1xi1>
    %402 = vector.broadcast %401 : vector<8x1xi1> to vector<8x128xi1>
    %403 = vector.broadcast %cst_105 : f32 to vector<8x128xf32>
    %404 = arith.select %402, %392, %403 : vector<8x128xi1>, vector<8x128xf32>
    %405 = arith.index_cast %315 : i32 to index
    %c0_106 = arith.constant 0 : index
    %c128_107 = arith.constant 128 : index
    %406 = vector.load %arg10[%405, %c0_106, %c128_107] : memref<8x8x256xf32, #tpu.memory_space<vmem>>, vector<1x8x128xf32>
    %407 = vector.shape_cast %406 : vector<1x8x128xf32> to vector<8x128xf32>
    %408 = vector.shape_cast %404 : vector<8x128xf32> to vector<1x8x128xf32>
    tpu.vector_store %arg10[%405, %c0_106, %c128_107], %408 {strides = array<i32>} : memref<8x8x256xf32, #tpu.memory_space<vmem>>, vector<1x8x128xf32>,
    %409 = vector.shape_cast %320 : vector<8x1xi1> to vector<8x1xi1>
    %410 = vector.broadcast %409 : vector<8x1xi1> to vector<8x128xi1>
    %411 = arith.select %410, %364, %335 : vector<8x128xi1>, vector<8x128xf32>
    %412 = vector.shape_cast %325 : vector<8x1xi1> to vector<8x1xi1>
    %413 = vector.broadcast %412 : vector<8x1xi1> to vector<8x128xi1>
    %414 = arith.select %413, %392, %336 : vector<8x128xi1>, vector<8x128xf32>
    %415 = tpu.concatenate %411, %414 in 1 : vector<8x128xf32>, vector<8x128xf32> -> vector<8x256xf32>
    %c4_i32 = arith.constant 4 : i32
    %c7_i32_108 = arith.constant 7 : i32
    %416 = arith.subi %c7_i32_108, %c4_i32 : i32
    %417 = arith.index_cast %c4_i32 : i32 to index
    %c0_109 = arith.constant 0 : index
    %c0_110 = arith.constant 0 : index
    %418 = vector.load %arg2[%417, %c0_109, %c0_110] : memref<8x8x1xf32, #tpu.memory_space<vmem>>, vector<1x8x1xf32>
    %419 = vector.shape_cast %418 : vector<1x8x1xf32> to vector<8x1xf32>
    %cst_111 = arith.constant 0.000000e+00 : f32
    %420 = vector.broadcast %cst_111 : f32 to vector<8x1xf32>
    %421 = arith.cmpf ogt, %419, %420 : vector<8x1xf32>
    %422 = arith.index_cast %416 : i32 to index
    %c0_112 = arith.constant 0 : index
    %c0_113 = arith.constant 0 : index
    %423 = vector.load %arg2[%422, %c0_112, %c0_113] : memref<8x8x1xf32, #tpu.memory_space<vmem>>, vector<1x8x1xf32>
    %424 = vector.shape_cast %423 : vector<1x8x1xf32> to vector<8x1xf32>
    %cst_114 = arith.constant 0.000000e+00 : f32
    %425 = vector.broadcast %cst_114 : f32 to vector<8x1xf32>
    %426 = arith.cmpf ogt, %424, %425 : vector<8x1xf32>
    %cst_115 = arith.constant dense<0.000000e+00> : vector<8x768xf32>
    %427 = tpu.matmul %415, %9, %cst_115 {dimension_numbers = #tpu.dot_dimension_numbers<[1], [0], [0], [1], [0, 0, 1, 1], [], []>} : vector<8x256xf32>, vector<256x768xf32>, vector<8x768xf32> -> vector<8x768xf32>
    %428 = vector.broadcast %10 : vector<1x768xf32> to vector<8x768xf32>
    %429 = arith.addf %427, %428 : vector<8x768xf32>
    %430 = arith.index_cast %c4_i32 : i32 to index
    %c0_116 = arith.constant 0 : index
    %c0_117 = arith.constant 0 : index
    %431 = vector.load %arg15[%430, %c0_116, %c0_117] : memref<8x8x768xf32, #tpu.memory_space<vmem>>, vector<1x8x768xf32>
    %432 = vector.shape_cast %431 : vector<1x8x768xf32> to vector<8x768xf32>
    %433 = arith.index_cast %416 : i32 to index
    %c0_118 = arith.constant 0 : index
    %c0_119 = arith.constant 0 : index
    %434 = vector.load %arg15[%433, %c0_118, %c0_119] : memref<8x8x768xf32, #tpu.memory_space<vmem>>, vector<1x8x768xf32>
    %435 = vector.shape_cast %434 : vector<1x8x768xf32> to vector<8x768xf32>
    %436 = vector.extract_strided_slice %415 {offsets = [0, 0], sizes = [8, 128], strides = [1, 1]} : vector<8x256xf32> to vector<8x128xf32>
    %437 = vector.extract_strided_slice %415 {offsets = [0, 128], sizes = [8, 128], strides = [1, 1]} : vector<8x256xf32> to vector<8x128xf32>
    %438 = vector.extract_strided_slice %432 {offsets = [0, 0], sizes = [8, 384], strides = [1, 1]} : vector<8x768xf32> to vector<8x384xf32>
    %439 = vector.extract_strided_slice %429 {offsets = [0, 0], sizes = [8, 384], strides = [1, 1]} : vector<8x768xf32> to vector<8x384xf32>
    %440 = vector.extract_strided_slice %438 {offsets = [0, 0], sizes = [8, 128], strides = [1, 1]} : vector<8x384xf32> to vector<8x128xf32>
    %441 = vector.extract_strided_slice %439 {offsets = [0, 0], sizes = [8, 128], strides = [1, 1]} : vector<8x384xf32> to vector<8x128xf32>
    %442 = arith.addf %440, %441 : vector<8x128xf32>
    %443 = arith.negf %442 : vector<8x128xf32>
    %444 = math.exp %443 : vector<8x128xf32>
    %cst_120 = arith.constant 1.000000e+00 : f32
    %445 = vector.broadcast %cst_120 : f32 to vector<8x128xf32>
    %446 = arith.addf %445, %444 : vector<8x128xf32>
    %447 = arith.divf %445, %446 : vector<8x128xf32>
    %448 = vector.extract_strided_slice %438 {offsets = [0, 128], sizes = [8, 128], strides = [1, 1]} : vector<8x384xf32> to vector<8x128xf32>
    %449 = vector.extract_strided_slice %439 {offsets = [0, 128], sizes = [8, 128], strides = [1, 1]} : vector<8x384xf32> to vector<8x128xf32>
    %450 = arith.addf %448, %449 : vector<8x128xf32>
    %451 = arith.negf %450 : vector<8x128xf32>
    %452 = math.exp %451 : vector<8x128xf32>
    %cst_121 = arith.constant 1.000000e+00 : f32
    %453 = vector.broadcast %cst_121 : f32 to vector<8x128xf32>
    %454 = arith.addf %453, %452 : vector<8x128xf32>
    %455 = arith.divf %453, %454 : vector<8x128xf32>
    %456 = vector.extract_strided_slice %438 {offsets = [0, 256], sizes = [8, 128], strides = [1, 1]} : vector<8x384xf32> to vector<8x128xf32>
    %457 = vector.extract_strided_slice %439 {offsets = [0, 256], sizes = [8, 128], strides = [1, 1]} : vector<8x384xf32> to vector<8x128xf32>
    %458 = arith.mulf %447, %457 : vector<8x128xf32>
    %459 = arith.addf %456, %458 : vector<8x128xf32>
    %460 = math.tanh %459 : vector<8x128xf32>
    %cst_122 = arith.constant 1.000000e+00 : f32
    %461 = vector.broadcast %cst_122 : f32 to vector<8x128xf32>
    %462 = arith.subf %461, %455 : vector<8x128xf32>
    %463 = arith.mulf %462, %460 : vector<8x128xf32>
    %464 = arith.mulf %455, %436 : vector<8x128xf32>
    %465 = arith.addf %463, %464 : vector<8x128xf32>
    %466 = vector.extract_strided_slice %435 {offsets = [0, 384], sizes = [8, 384], strides = [1, 1]} : vector<8x768xf32> to vector<8x384xf32>
    %467 = vector.extract_strided_slice %429 {offsets = [0, 384], sizes = [8, 384], strides = [1, 1]} : vector<8x768xf32> to vector<8x384xf32>
    %468 = vector.extract_strided_slice %466 {offsets = [0, 0], sizes = [8, 128], strides = [1, 1]} : vector<8x384xf32> to vector<8x128xf32>
    %469 = vector.extract_strided_slice %467 {offsets = [0, 0], sizes = [8, 128], strides = [1, 1]} : vector<8x384xf32> to vector<8x128xf32>
    %470 = arith.addf %468, %469 : vector<8x128xf32>
    %471 = arith.negf %470 : vector<8x128xf32>
    %472 = math.exp %471 : vector<8x128xf32>
    %cst_123 = arith.constant 1.000000e+00 : f32
    %473 = vector.broadcast %cst_123 : f32 to vector<8x128xf32>
    %474 = arith.addf %473, %472 : vector<8x128xf32>
    %475 = arith.divf %473, %474 : vector<8x128xf32>
    %476 = vector.extract_strided_slice %466 {offsets = [0, 128], sizes = [8, 128], strides = [1, 1]} : vector<8x384xf32> to vector<8x128xf32>
    %477 = vector.extract_strided_slice %467 {offsets = [0, 128], sizes = [8, 128], strides = [1, 1]} : vector<8x384xf32> to vector<8x128xf32>
    %478 = arith.addf %476, %477 : vector<8x128xf32>
    %479 = arith.negf %478 : vector<8x128xf32>
    %480 = math.exp %479 : vector<8x128xf32>
    %cst_124 = arith.constant 1.000000e+00 : f32
    %481 = vector.broadcast %cst_124 : f32 to vector<8x128xf32>
    %482 = arith.addf %481, %480 : vector<8x128xf32>
    %483 = arith.divf %481, %482 : vector<8x128xf32>
    %484 = vector.extract_strided_slice %466 {offsets = [0, 256], sizes = [8, 128], strides = [1, 1]} : vector<8x384xf32> to vector<8x128xf32>
    %485 = vector.extract_strided_slice %467 {offsets = [0, 256], sizes = [8, 128], strides = [1, 1]} : vector<8x384xf32> to vector<8x128xf32>
    %486 = arith.mulf %475, %485 : vector<8x128xf32>
    %487 = arith.addf %484, %486 : vector<8x128xf32>
    %488 = math.tanh %487 : vector<8x128xf32>
    %cst_125 = arith.constant 1.000000e+00 : f32
    %489 = vector.broadcast %cst_125 : f32 to vector<8x128xf32>
    %490 = arith.subf %489, %483 : vector<8x128xf32>
    %491 = arith.mulf %490, %488 : vector<8x128xf32>
    %492 = arith.mulf %483, %437 : vector<8x128xf32>
    %493 = arith.addf %491, %492 : vector<8x128xf32>
    %cst_126 = arith.constant 0.000000e+00 : f32
    %494 = vector.shape_cast %421 : vector<8x1xi1> to vector<8x1xi1>
    %495 = vector.broadcast %494 : vector<8x1xi1> to vector<8x128xi1>
    %496 = vector.broadcast %cst_126 : f32 to vector<8x128xf32>
    %497 = arith.select %495, %465, %496 : vector<8x128xi1>, vector<8x128xf32>
    %498 = arith.index_cast %c4_i32 : i32 to index
    %c0_127 = arith.constant 0 : index
    %c0_128 = arith.constant 0 : index
    %499 = vector.load %arg10[%498, %c0_127, %c0_128] : memref<8x8x256xf32, #tpu.memory_space<vmem>>, vector<1x8x128xf32>
    %500 = vector.shape_cast %499 : vector<1x8x128xf32> to vector<8x128xf32>
    %501 = vector.shape_cast %497 : vector<8x128xf32> to vector<1x8x128xf32>
    tpu.vector_store %arg10[%498, %c0_127, %c0_128], %501 {strides = array<i32>} : memref<8x8x256xf32, #tpu.memory_space<vmem>>, vector<1x8x128xf32>,
    %cst_129 = arith.constant 0.000000e+00 : f32
    %502 = vector.shape_cast %426 : vector<8x1xi1> to vector<8x1xi1>
    %503 = vector.broadcast %502 : vector<8x1xi1> to vector<8x128xi1>
    %504 = vector.broadcast %cst_129 : f32 to vector<8x128xf32>
    %505 = arith.select %503, %493, %504 : vector<8x128xi1>, vector<8x128xf32>
    %506 = arith.index_cast %416 : i32 to index
    %c0_130 = arith.constant 0 : index
    %c128_131 = arith.constant 128 : index
    %507 = vector.load %arg10[%506, %c0_130, %c128_131] : memref<8x8x256xf32, #tpu.memory_space<vmem>>, vector<1x8x128xf32>
    %508 = vector.shape_cast %507 : vector<1x8x128xf32> to vector<8x128xf32>
    %509 = vector.shape_cast %505 : vector<8x128xf32> to vector<1x8x128xf32>
    tpu.vector_store %arg10[%506, %c0_130, %c128_131], %509 {strides = array<i32>} : memref<8x8x256xf32, #tpu.memory_space<vmem>>, vector<1x8x128xf32>,
    %510 = vector.shape_cast %421 : vector<8x1xi1> to vector<8x1xi1>
    %511 = vector.broadcast %510 : vector<8x1xi1> to vector<8x128xi1>
    %512 = arith.select %511, %465, %436 : vector<8x128xi1>, vector<8x128xf32>
    %513 = vector.shape_cast %426 : vector<8x1xi1> to vector<8x1xi1>
    %514 = vector.broadcast %513 : vector<8x1xi1> to vector<8x128xi1>
    %515 = arith.select %514, %493, %437 : vector<8x128xi1>, vector<8x128xf32>
    %516 = tpu.concatenate %512, %515 in 1 : vector<8x128xf32>, vector<8x128xf32> -> vector<8x256xf32>
    %c5_i32 = arith.constant 5 : i32
    %c7_i32_132 = arith.constant 7 : i32
    %517 = arith.subi %c7_i32_132, %c5_i32 : i32
    %518 = arith.index_cast %c5_i32 : i32 to index
    %c0_133 = arith.constant 0 : index
    %c0_134 = arith.constant 0 : index
    %519 = vector.load %arg2[%518, %c0_133, %c0_134] : memref<8x8x1xf32, #tpu.memory_space<vmem>>, vector<1x8x1xf32>
    %520 = vector.shape_cast %519 : vector<1x8x1xf32> to vector<8x1xf32>
    %cst_135 = arith.constant 0.000000e+00 : f32
    %521 = vector.broadcast %cst_135 : f32 to vector<8x1xf32>
    %522 = arith.cmpf ogt, %520, %521 : vector<8x1xf32>
    %523 = arith.index_cast %517 : i32 to index
    %c0_136 = arith.constant 0 : index
    %c0_137 = arith.constant 0 : index
    %524 = vector.load %arg2[%523, %c0_136, %c0_137] : memref<8x8x1xf32, #tpu.memory_space<vmem>>, vector<1x8x1xf32>
    %525 = vector.shape_cast %524 : vector<1x8x1xf32> to vector<8x1xf32>
    %cst_138 = arith.constant 0.000000e+00 : f32
    %526 = vector.broadcast %cst_138 : f32 to vector<8x1xf32>
    %527 = arith.cmpf ogt, %525, %526 : vector<8x1xf32>
    %cst_139 = arith.constant dense<0.000000e+00> : vector<8x768xf32>
    %528 = tpu.matmul %516, %9, %cst_139 {dimension_numbers = #tpu.dot_dimension_numbers<[1], [0], [0], [1], [0, 0, 1, 1], [], []>} : vector<8x256xf32>, vector<256x768xf32>, vector<8x768xf32> -> vector<8x768xf32>
    %529 = vector.broadcast %10 : vector<1x768xf32> to vector<8x768xf32>
    %530 = arith.addf %528, %529 : vector<8x768xf32>
    %531 = arith.index_cast %c5_i32 : i32 to index
    %c0_140 = arith.constant 0 : index
    %c0_141 = arith.constant 0 : index
    %532 = vector.load %arg15[%531, %c0_140, %c0_141] : memref<8x8x768xf32, #tpu.memory_space<vmem>>, vector<1x8x768xf32>
    %533 = vector.shape_cast %532 : vector<1x8x768xf32> to vector<8x768xf32>
    %534 = arith.index_cast %517 : i32 to index
    %c0_142 = arith.constant 0 : index
    %c0_143 = arith.constant 0 : index
    %535 = vector.load %arg15[%534, %c0_142, %c0_143] : memref<8x8x768xf32, #tpu.memory_space<vmem>>, vector<1x8x768xf32>
    %536 = vector.shape_cast %535 : vector<1x8x768xf32> to vector<8x768xf32>
    %537 = vector.extract_strided_slice %516 {offsets = [0, 0], sizes = [8, 128], strides = [1, 1]} : vector<8x256xf32> to vector<8x128xf32>
    %538 = vector.extract_strided_slice %516 {offsets = [0, 128], sizes = [8, 128], strides = [1, 1]} : vector<8x256xf32> to vector<8x128xf32>
    %539 = vector.extract_strided_slice %533 {offsets = [0, 0], sizes = [8, 384], strides = [1, 1]} : vector<8x768xf32> to vector<8x384xf32>
    %540 = vector.extract_strided_slice %530 {offsets = [0, 0], sizes = [8, 384], strides = [1, 1]} : vector<8x768xf32> to vector<8x384xf32>
    %541 = vector.extract_strided_slice %539 {offsets = [0, 0], sizes = [8, 128], strides = [1, 1]} : vector<8x384xf32> to vector<8x128xf32>
    %542 = vector.extract_strided_slice %540 {offsets = [0, 0], sizes = [8, 128], strides = [1, 1]} : vector<8x384xf32> to vector<8x128xf32>
    %543 = arith.addf %541, %542 : vector<8x128xf32>
    %544 = arith.negf %543 : vector<8x128xf32>
    %545 = math.exp %544 : vector<8x128xf32>
    %cst_144 = arith.constant 1.000000e+00 : f32
    %546 = vector.broadcast %cst_144 : f32 to vector<8x128xf32>
    %547 = arith.addf %546, %545 : vector<8x128xf32>
    %548 = arith.divf %546, %547 : vector<8x128xf32>
    %549 = vector.extract_strided_slice %539 {offsets = [0, 128], sizes = [8, 128], strides = [1, 1]} : vector<8x384xf32> to vector<8x128xf32>
    %550 = vector.extract_strided_slice %540 {offsets = [0, 128], sizes = [8, 128], strides = [1, 1]} : vector<8x384xf32> to vector<8x128xf32>
    %551 = arith.addf %549, %550 : vector<8x128xf32>
    %552 = arith.negf %551 : vector<8x128xf32>
    %553 = math.exp %552 : vector<8x128xf32>
    %cst_145 = arith.constant 1.000000e+00 : f32
    %554 = vector.broadcast %cst_145 : f32 to vector<8x128xf32>
    %555 = arith.addf %554, %553 : vector<8x128xf32>
    %556 = arith.divf %554, %555 : vector<8x128xf32>
    %557 = vector.extract_strided_slice %539 {offsets = [0, 256], sizes = [8, 128], strides = [1, 1]} : vector<8x384xf32> to vector<8x128xf32>
    %558 = vector.extract_strided_slice %540 {offsets = [0, 256], sizes = [8, 128], strides = [1, 1]} : vector<8x384xf32> to vector<8x128xf32>
    %559 = arith.mulf %548, %558 : vector<8x128xf32>
    %560 = arith.addf %557, %559 : vector<8x128xf32>
    %561 = math.tanh %560 : vector<8x128xf32>
    %cst_146 = arith.constant 1.000000e+00 : f32
    %562 = vector.broadcast %cst_146 : f32 to vector<8x128xf32>
    %563 = arith.subf %562, %556 : vector<8x128xf32>
    %564 = arith.mulf %563, %561 : vector<8x128xf32>
    %565 = arith.mulf %556, %537 : vector<8x128xf32>
    %566 = arith.addf %564, %565 : vector<8x128xf32>
    %567 = vector.extract_strided_slice %536 {offsets = [0, 384], sizes = [8, 384], strides = [1, 1]} : vector<8x768xf32> to vector<8x384xf32>
    %568 = vector.extract_strided_slice %530 {offsets = [0, 384], sizes = [8, 384], strides = [1, 1]} : vector<8x768xf32> to vector<8x384xf32>
    %569 = vector.extract_strided_slice %567 {offsets = [0, 0], sizes = [8, 128], strides = [1, 1]} : vector<8x384xf32> to vector<8x128xf32>
    %570 = vector.extract_strided_slice %568 {offsets = [0, 0], sizes = [8, 128], strides = [1, 1]} : vector<8x384xf32> to vector<8x128xf32>
    %571 = arith.addf %569, %570 : vector<8x128xf32>
    %572 = arith.negf %571 : vector<8x128xf32>
    %573 = math.exp %572 : vector<8x128xf32>
    %cst_147 = arith.constant 1.000000e+00 : f32
    %574 = vector.broadcast %cst_147 : f32 to vector<8x128xf32>
    %575 = arith.addf %574, %573 : vector<8x128xf32>
    %576 = arith.divf %574, %575 : vector<8x128xf32>
    %577 = vector.extract_strided_slice %567 {offsets = [0, 128], sizes = [8, 128], strides = [1, 1]} : vector<8x384xf32> to vector<8x128xf32>
    %578 = vector.extract_strided_slice %568 {offsets = [0, 128], sizes = [8, 128], strides = [1, 1]} : vector<8x384xf32> to vector<8x128xf32>
    %579 = arith.addf %577, %578 : vector<8x128xf32>
    %580 = arith.negf %579 : vector<8x128xf32>
    %581 = math.exp %580 : vector<8x128xf32>
    %cst_148 = arith.constant 1.000000e+00 : f32
    %582 = vector.broadcast %cst_148 : f32 to vector<8x128xf32>
    %583 = arith.addf %582, %581 : vector<8x128xf32>
    %584 = arith.divf %582, %583 : vector<8x128xf32>
    %585 = vector.extract_strided_slice %567 {offsets = [0, 256], sizes = [8, 128], strides = [1, 1]} : vector<8x384xf32> to vector<8x128xf32>
    %586 = vector.extract_strided_slice %568 {offsets = [0, 256], sizes = [8, 128], strides = [1, 1]} : vector<8x384xf32> to vector<8x128xf32>
    %587 = arith.mulf %576, %586 : vector<8x128xf32>
    %588 = arith.addf %585, %587 : vector<8x128xf32>
    %589 = math.tanh %588 : vector<8x128xf32>
    %cst_149 = arith.constant 1.000000e+00 : f32
    %590 = vector.broadcast %cst_149 : f32 to vector<8x128xf32>
    %591 = arith.subf %590, %584 : vector<8x128xf32>
    %592 = arith.mulf %591, %589 : vector<8x128xf32>
    %593 = arith.mulf %584, %538 : vector<8x128xf32>
    %594 = arith.addf %592, %593 : vector<8x128xf32>
    %cst_150 = arith.constant 0.000000e+00 : f32
    %595 = vector.shape_cast %522 : vector<8x1xi1> to vector<8x1xi1>
    %596 = vector.broadcast %595 : vector<8x1xi1> to vector<8x128xi1>
    %597 = vector.broadcast %cst_150 : f32 to vector<8x128xf32>
    %598 = arith.select %596, %566, %597 : vector<8x128xi1>, vector<8x128xf32>
    %599 = arith.index_cast %c5_i32 : i32 to index
    %c0_151 = arith.constant 0 : index
    %c0_152 = arith.constant 0 : index
    %600 = vector.load %arg10[%599, %c0_151, %c0_152] : memref<8x8x256xf32, #tpu.memory_space<vmem>>, vector<1x8x128xf32>
    %601 = vector.shape_cast %600 : vector<1x8x128xf32> to vector<8x128xf32>
    %602 = vector.shape_cast %598 : vector<8x128xf32> to vector<1x8x128xf32>
    tpu.vector_store %arg10[%599, %c0_151, %c0_152], %602 {strides = array<i32>} : memref<8x8x256xf32, #tpu.memory_space<vmem>>, vector<1x8x128xf32>,
    %cst_153 = arith.constant 0.000000e+00 : f32
    %603 = vector.shape_cast %527 : vector<8x1xi1> to vector<8x1xi1>
    %604 = vector.broadcast %603 : vector<8x1xi1> to vector<8x128xi1>
    %605 = vector.broadcast %cst_153 : f32 to vector<8x128xf32>
    %606 = arith.select %604, %594, %605 : vector<8x128xi1>, vector<8x128xf32>
    %607 = arith.index_cast %517 : i32 to index
    %c0_154 = arith.constant 0 : index
    %c128_155 = arith.constant 128 : index
    %608 = vector.load %arg10[%607, %c0_154, %c128_155] : memref<8x8x256xf32, #tpu.memory_space<vmem>>, vector<1x8x128xf32>
    %609 = vector.shape_cast %608 : vector<1x8x128xf32> to vector<8x128xf32>
    %610 = vector.shape_cast %606 : vector<8x128xf32> to vector<1x8x128xf32>
    tpu.vector_store %arg10[%607, %c0_154, %c128_155], %610 {strides = array<i32>} : memref<8x8x256xf32, #tpu.memory_space<vmem>>, vector<1x8x128xf32>,
    %611 = vector.shape_cast %522 : vector<8x1xi1> to vector<8x1xi1>
    %612 = vector.broadcast %611 : vector<8x1xi1> to vector<8x128xi1>
    %613 = arith.select %612, %566, %537 : vector<8x128xi1>, vector<8x128xf32>
    %614 = vector.shape_cast %527 : vector<8x1xi1> to vector<8x1xi1>
    %615 = vector.broadcast %614 : vector<8x1xi1> to vector<8x128xi1>
    %616 = arith.select %615, %594, %538 : vector<8x128xi1>, vector<8x128xf32>
    %617 = tpu.concatenate %613, %616 in 1 : vector<8x128xf32>, vector<8x128xf32> -> vector<8x256xf32>
    %c6_i32 = arith.constant 6 : i32
    %c7_i32_156 = arith.constant 7 : i32
    %618 = arith.subi %c7_i32_156, %c6_i32 : i32
    %619 = arith.index_cast %c6_i32 : i32 to index
    %c0_157 = arith.constant 0 : index
    %c0_158 = arith.constant 0 : index
    %620 = vector.load %arg2[%619, %c0_157, %c0_158] : memref<8x8x1xf32, #tpu.memory_space<vmem>>, vector<1x8x1xf32>
    %621 = vector.shape_cast %620 : vector<1x8x1xf32> to vector<8x1xf32>
    %cst_159 = arith.constant 0.000000e+00 : f32
    %622 = vector.broadcast %cst_159 : f32 to vector<8x1xf32>
    %623 = arith.cmpf ogt, %621, %622 : vector<8x1xf32>
    %624 = arith.index_cast %618 : i32 to index
    %c0_160 = arith.constant 0 : index
    %c0_161 = arith.constant 0 : index
    %625 = vector.load %arg2[%624, %c0_160, %c0_161] : memref<8x8x1xf32, #tpu.memory_space<vmem>>, vector<1x8x1xf32>
    %626 = vector.shape_cast %625 : vector<1x8x1xf32> to vector<8x1xf32>
    %cst_162 = arith.constant 0.000000e+00 : f32
    %627 = vector.broadcast %cst_162 : f32 to vector<8x1xf32>
    %628 = arith.cmpf ogt, %626, %627 : vector<8x1xf32>
    %cst_163 = arith.constant dense<0.000000e+00> : vector<8x768xf32>
    %629 = tpu.matmul %617, %9, %cst_163 {dimension_numbers = #tpu.dot_dimension_numbers<[1], [0], [0], [1], [0, 0, 1, 1], [], []>} : vector<8x256xf32>, vector<256x768xf32>, vector<8x768xf32> -> vector<8x768xf32>
    %630 = vector.broadcast %10 : vector<1x768xf32> to vector<8x768xf32>
    %631 = arith.addf %629, %630 : vector<8x768xf32>
    %632 = arith.index_cast %c6_i32 : i32 to index
    %c0_164 = arith.constant 0 : index
    %c0_165 = arith.constant 0 : index
    %633 = vector.load %arg15[%632, %c0_164, %c0_165] : memref<8x8x768xf32, #tpu.memory_space<vmem>>, vector<1x8x768xf32>
    %634 = vector.shape_cast %633 : vector<1x8x768xf32> to vector<8x768xf32>
    %635 = arith.index_cast %618 : i32 to index
    %c0_166 = arith.constant 0 : index
    %c0_167 = arith.constant 0 : index
    %636 = vector.load %arg15[%635, %c0_166, %c0_167] : memref<8x8x768xf32, #tpu.memory_space<vmem>>, vector<1x8x768xf32>
    %637 = vector.shape_cast %636 : vector<1x8x768xf32> to vector<8x768xf32>
    %638 = vector.extract_strided_slice %617 {offsets = [0, 0], sizes = [8, 128], strides = [1, 1]} : vector<8x256xf32> to vector<8x128xf32>
    %639 = vector.extract_strided_slice %617 {offsets = [0, 128], sizes = [8, 128], strides = [1, 1]} : vector<8x256xf32> to vector<8x128xf32>
    %640 = vector.extract_strided_slice %634 {offsets = [0, 0], sizes = [8, 384], strides = [1, 1]} : vector<8x768xf32> to vector<8x384xf32>
    %641 = vector.extract_strided_slice %631 {offsets = [0, 0], sizes = [8, 384], strides = [1, 1]} : vector<8x768xf32> to vector<8x384xf32>
    %642 = vector.extract_strided_slice %640 {offsets = [0, 0], sizes = [8, 128], strides = [1, 1]} : vector<8x384xf32> to vector<8x128xf32>
    %643 = vector.extract_strided_slice %641 {offsets = [0, 0], sizes = [8, 128], strides = [1, 1]} : vector<8x384xf32> to vector<8x128xf32>
    %644 = arith.addf %642, %643 : vector<8x128xf32>
    %645 = arith.negf %644 : vector<8x128xf32>
    %646 = math.exp %645 : vector<8x128xf32>
    %cst_168 = arith.constant 1.000000e+00 : f32
    %647 = vector.broadcast %cst_168 : f32 to vector<8x128xf32>
    %648 = arith.addf %647, %646 : vector<8x128xf32>
    %649 = arith.divf %647, %648 : vector<8x128xf32>
    %650 = vector.extract_strided_slice %640 {offsets = [0, 128], sizes = [8, 128], strides = [1, 1]} : vector<8x384xf32> to vector<8x128xf32>
    %651 = vector.extract_strided_slice %641 {offsets = [0, 128], sizes = [8, 128], strides = [1, 1]} : vector<8x384xf32> to vector<8x128xf32>
    %652 = arith.addf %650, %651 : vector<8x128xf32>
    %653 = arith.negf %652 : vector<8x128xf32>
    %654 = math.exp %653 : vector<8x128xf32>
    %cst_169 = arith.constant 1.000000e+00 : f32
    %655 = vector.broadcast %cst_169 : f32 to vector<8x128xf32>
    %656 = arith.addf %655, %654 : vector<8x128xf32>
    %657 = arith.divf %655, %656 : vector<8x128xf32>
    %658 = vector.extract_strided_slice %640 {offsets = [0, 256], sizes = [8, 128], strides = [1, 1]} : vector<8x384xf32> to vector<8x128xf32>
    %659 = vector.extract_strided_slice %641 {offsets = [0, 256], sizes = [8, 128], strides = [1, 1]} : vector<8x384xf32> to vector<8x128xf32>
    %660 = arith.mulf %649, %659 : vector<8x128xf32>
    %661 = arith.addf %658, %660 : vector<8x128xf32>
    %662 = math.tanh %661 : vector<8x128xf32>
    %cst_170 = arith.constant 1.000000e+00 : f32
    %663 = vector.broadcast %cst_170 : f32 to vector<8x128xf32>
    %664 = arith.subf %663, %657 : vector<8x128xf32>
    %665 = arith.mulf %664, %662 : vector<8x128xf32>
    %666 = arith.mulf %657, %638 : vector<8x128xf32>
    %667 = arith.addf %665, %666 : vector<8x128xf32>
    %668 = vector.extract_strided_slice %637 {offsets = [0, 384], sizes = [8, 384], strides = [1, 1]} : vector<8x768xf32> to vector<8x384xf32>
    %669 = vector.extract_strided_slice %631 {offsets = [0, 384], sizes = [8, 384], strides = [1, 1]} : vector<8x768xf32> to vector<8x384xf32>
    %670 = vector.extract_strided_slice %668 {offsets = [0, 0], sizes = [8, 128], strides = [1, 1]} : vector<8x384xf32> to vector<8x128xf32>
    %671 = vector.extract_strided_slice %669 {offsets = [0, 0], sizes = [8, 128], strides = [1, 1]} : vector<8x384xf32> to vector<8x128xf32>
    %672 = arith.addf %670, %671 : vector<8x128xf32>
    %673 = arith.negf %672 : vector<8x128xf32>
    %674 = math.exp %673 : vector<8x128xf32>
    %cst_171 = arith.constant 1.000000e+00 : f32
    %675 = vector.broadcast %cst_171 : f32 to vector<8x128xf32>
    %676 = arith.addf %675, %674 : vector<8x128xf32>
    %677 = arith.divf %675, %676 : vector<8x128xf32>
    %678 = vector.extract_strided_slice %668 {offsets = [0, 128], sizes = [8, 128], strides = [1, 1]} : vector<8x384xf32> to vector<8x128xf32>
    %679 = vector.extract_strided_slice %669 {offsets = [0, 128], sizes = [8, 128], strides = [1, 1]} : vector<8x384xf32> to vector<8x128xf32>
    %680 = arith.addf %678, %679 : vector<8x128xf32>
    %681 = arith.negf %680 : vector<8x128xf32>
    %682 = math.exp %681 : vector<8x128xf32>
    %cst_172 = arith.constant 1.000000e+00 : f32
    %683 = vector.broadcast %cst_172 : f32 to vector<8x128xf32>
    %684 = arith.addf %683, %682 : vector<8x128xf32>
    %685 = arith.divf %683, %684 : vector<8x128xf32>
    %686 = vector.extract_strided_slice %668 {offsets = [0, 256], sizes = [8, 128], strides = [1, 1]} : vector<8x384xf32> to vector<8x128xf32>
    %687 = vector.extract_strided_slice %669 {offsets = [0, 256], sizes = [8, 128], strides = [1, 1]} : vector<8x384xf32> to vector<8x128xf32>
    %688 = arith.mulf %677, %687 : vector<8x128xf32>
    %689 = arith.addf %686, %688 : vector<8x128xf32>
    %690 = math.tanh %689 : vector<8x128xf32>
    %cst_173 = arith.constant 1.000000e+00 : f32
    %691 = vector.broadcast %cst_173 : f32 to vector<8x128xf32>
    %692 = arith.subf %691, %685 : vector<8x128xf32>
    %693 = arith.mulf %692, %690 : vector<8x128xf32>
    %694 = arith.mulf %685, %639 : vector<8x128xf32>
    %695 = arith.addf %693, %694 : vector<8x128xf32>
    %cst_174 = arith.constant 0.000000e+00 : f32
    %696 = vector.shape_cast %623 : vector<8x1xi1> to vector<8x1xi1>
    %697 = vector.broadcast %696 : vector<8x1xi1> to vector<8x128xi1>
    %698 = vector.broadcast %cst_174 : f32 to vector<8x128xf32>
    %699 = arith.select %697, %667, %698 : vector<8x128xi1>, vector<8x128xf32>
    %700 = arith.index_cast %c6_i32 : i32 to index
    %c0_175 = arith.constant 0 : index
    %c0_176 = arith.constant 0 : index
    %701 = vector.load %arg10[%700, %c0_175, %c0_176] : memref<8x8x256xf32, #tpu.memory_space<vmem>>, vector<1x8x128xf32>
    %702 = vector.shape_cast %701 : vector<1x8x128xf32> to vector<8x128xf32>
    %703 = vector.shape_cast %699 : vector<8x128xf32> to vector<1x8x128xf32>
    tpu.vector_store %arg10[%700, %c0_175, %c0_176], %703 {strides = array<i32>} : memref<8x8x256xf32, #tpu.memory_space<vmem>>, vector<1x8x128xf32>,
    %cst_177 = arith.constant 0.000000e+00 : f32
    %704 = vector.shape_cast %628 : vector<8x1xi1> to vector<8x1xi1>
    %705 = vector.broadcast %704 : vector<8x1xi1> to vector<8x128xi1>
    %706 = vector.broadcast %cst_177 : f32 to vector<8x128xf32>
    %707 = arith.select %705, %695, %706 : vector<8x128xi1>, vector<8x128xf32>
    %708 = arith.index_cast %618 : i32 to index
    %c0_178 = arith.constant 0 : index
    %c128_179 = arith.constant 128 : index
    %709 = vector.load %arg10[%708, %c0_178, %c128_179] : memref<8x8x256xf32, #tpu.memory_space<vmem>>, vector<1x8x128xf32>
    %710 = vector.shape_cast %709 : vector<1x8x128xf32> to vector<8x128xf32>
    %711 = vector.shape_cast %707 : vector<8x128xf32> to vector<1x8x128xf32>
    tpu.vector_store %arg10[%708, %c0_178, %c128_179], %711 {strides = array<i32>} : memref<8x8x256xf32, #tpu.memory_space<vmem>>, vector<1x8x128xf32>,
    %712 = vector.shape_cast %623 : vector<8x1xi1> to vector<8x1xi1>
    %713 = vector.broadcast %712 : vector<8x1xi1> to vector<8x128xi1>
    %714 = arith.select %713, %667, %638 : vector<8x128xi1>, vector<8x128xf32>
    %715 = vector.shape_cast %628 : vector<8x1xi1> to vector<8x1xi1>
    %716 = vector.broadcast %715 : vector<8x1xi1> to vector<8x128xi1>
    %717 = arith.select %716, %695, %639 : vector<8x128xi1>, vector<8x128xf32>
    %718 = tpu.concatenate %714, %717 in 1 : vector<8x128xf32>, vector<8x128xf32> -> vector<8x256xf32>
    %c7_i32_180 = arith.constant 7 : i32
    %c7_i32_181 = arith.constant 7 : i32
    %719 = arith.subi %c7_i32_181, %c7_i32_180 : i32
    %720 = arith.index_cast %c7_i32_180 : i32 to index
    %c0_182 = arith.constant 0 : index
    %c0_183 = arith.constant 0 : index
    %721 = vector.load %arg2[%720, %c0_182, %c0_183] : memref<8x8x1xf32, #tpu.memory_space<vmem>>, vector<1x8x1xf32>
    %722 = vector.shape_cast %721 : vector<1x8x1xf32> to vector<8x1xf32>
    %cst_184 = arith.constant 0.000000e+00 : f32
    %723 = vector.broadcast %cst_184 : f32 to vector<8x1xf32>
    %724 = arith.cmpf ogt, %722, %723 : vector<8x1xf32>
    %725 = arith.index_cast %719 : i32 to index
    %c0_185 = arith.constant 0 : index
    %c0_186 = arith.constant 0 : index
    %726 = vector.load %arg2[%725, %c0_185, %c0_186] : memref<8x8x1xf32, #tpu.memory_space<vmem>>, vector<1x8x1xf32>
    %727 = vector.shape_cast %726 : vector<1x8x1xf32> to vector<8x1xf32>
    %cst_187 = arith.constant 0.000000e+00 : f32
    %728 = vector.broadcast %cst_187 : f32 to vector<8x1xf32>
    %729 = arith.cmpf ogt, %727, %728 : vector<8x1xf32>
    %cst_188 = arith.constant dense<0.000000e+00> : vector<8x768xf32>
    %730 = tpu.matmul %718, %9, %cst_188 {dimension_numbers = #tpu.dot_dimension_numbers<[1], [0], [0], [1], [0, 0, 1, 1], [], []>} : vector<8x256xf32>, vector<256x768xf32>, vector<8x768xf32> -> vector<8x768xf32>
    %731 = vector.broadcast %10 : vector<1x768xf32> to vector<8x768xf32>
    %732 = arith.addf %730, %731 : vector<8x768xf32>
    %733 = arith.index_cast %c7_i32_180 : i32 to index
    %c0_189 = arith.constant 0 : index
    %c0_190 = arith.constant 0 : index
    %734 = vector.load %arg15[%733, %c0_189, %c0_190] : memref<8x8x768xf32, #tpu.memory_space<vmem>>, vector<1x8x768xf32>
    %735 = vector.shape_cast %734 : vector<1x8x768xf32> to vector<8x768xf32>
    %736 = arith.index_cast %719 : i32 to index
    %c0_191 = arith.constant 0 : index
    %c0_192 = arith.constant 0 : index
    %737 = vector.load %arg15[%736, %c0_191, %c0_192] : memref<8x8x768xf32, #tpu.memory_space<vmem>>, vector<1x8x768xf32>
    %738 = vector.shape_cast %737 : vector<1x8x768xf32> to vector<8x768xf32>
    %739 = vector.extract_strided_slice %718 {offsets = [0, 0], sizes = [8, 128], strides = [1, 1]} : vector<8x256xf32> to vector<8x128xf32>
    %740 = vector.extract_strided_slice %718 {offsets = [0, 128], sizes = [8, 128], strides = [1, 1]} : vector<8x256xf32> to vector<8x128xf32>
    %741 = vector.extract_strided_slice %735 {offsets = [0, 0], sizes = [8, 384], strides = [1, 1]} : vector<8x768xf32> to vector<8x384xf32>
    %742 = vector.extract_strided_slice %732 {offsets = [0, 0], sizes = [8, 384], strides = [1, 1]} : vector<8x768xf32> to vector<8x384xf32>
    %743 = vector.extract_strided_slice %741 {offsets = [0, 0], sizes = [8, 128], strides = [1, 1]} : vector<8x384xf32> to vector<8x128xf32>
    %744 = vector.extract_strided_slice %742 {offsets = [0, 0], sizes = [8, 128], strides = [1, 1]} : vector<8x384xf32> to vector<8x128xf32>
    %745 = arith.addf %743, %744 : vector<8x128xf32>
    %746 = arith.negf %745 : vector<8x128xf32>
    %747 = math.exp %746 : vector<8x128xf32>
    %cst_193 = arith.constant 1.000000e+00 : f32
    %748 = vector.broadcast %cst_193 : f32 to vector<8x128xf32>
    %749 = arith.addf %748, %747 : vector<8x128xf32>
    %750 = arith.divf %748, %749 : vector<8x128xf32>
    %751 = vector.extract_strided_slice %741 {offsets = [0, 128], sizes = [8, 128], strides = [1, 1]} : vector<8x384xf32> to vector<8x128xf32>
    %752 = vector.extract_strided_slice %742 {offsets = [0, 128], sizes = [8, 128], strides = [1, 1]} : vector<8x384xf32> to vector<8x128xf32>
    %753 = arith.addf %751, %752 : vector<8x128xf32>
    %754 = arith.negf %753 : vector<8x128xf32>
    %755 = math.exp %754 : vector<8x128xf32>
    %cst_194 = arith.constant 1.000000e+00 : f32
    %756 = vector.broadcast %cst_194 : f32 to vector<8x128xf32>
    %757 = arith.addf %756, %755 : vector<8x128xf32>
    %758 = arith.divf %756, %757 : vector<8x128xf32>
    %759 = vector.extract_strided_slice %741 {offsets = [0, 256], sizes = [8, 128], strides = [1, 1]} : vector<8x384xf32> to vector<8x128xf32>
    %760 = vector.extract_strided_slice %742 {offsets = [0, 256], sizes = [8, 128], strides = [1, 1]} : vector<8x384xf32> to vector<8x128xf32>
    %761 = arith.mulf %750, %760 : vector<8x128xf32>
    %762 = arith.addf %759, %761 : vector<8x128xf32>
    %763 = math.tanh %762 : vector<8x128xf32>
    %cst_195 = arith.constant 1.000000e+00 : f32
    %764 = vector.broadcast %cst_195 : f32 to vector<8x128xf32>
    %765 = arith.subf %764, %758 : vector<8x128xf32>
    %766 = arith.mulf %765, %763 : vector<8x128xf32>
    %767 = arith.mulf %758, %739 : vector<8x128xf32>
    %768 = arith.addf %766, %767 : vector<8x128xf32>
    %769 = vector.extract_strided_slice %738 {offsets = [0, 384], sizes = [8, 384], strides = [1, 1]} : vector<8x768xf32> to vector<8x384xf32>
    %770 = vector.extract_strided_slice %732 {offsets = [0, 384], sizes = [8, 384], strides = [1, 1]} : vector<8x768xf32> to vector<8x384xf32>
    %771 = vector.extract_strided_slice %769 {offsets = [0, 0], sizes = [8, 128], strides = [1, 1]} : vector<8x384xf32> to vector<8x128xf32>
    %772 = vector.extract_strided_slice %770 {offsets = [0, 0], sizes = [8, 128], strides = [1, 1]} : vector<8x384xf32> to vector<8x128xf32>
    %773 = arith.addf %771, %772 : vector<8x128xf32>
    %774 = arith.negf %773 : vector<8x128xf32>
    %775 = math.exp %774 : vector<8x128xf32>
    %cst_196 = arith.constant 1.000000e+00 : f32
    %776 = vector.broadcast %cst_196 : f32 to vector<8x128xf32>
    %777 = arith.addf %776, %775 : vector<8x128xf32>
    %778 = arith.divf %776, %777 : vector<8x128xf32>
    %779 = vector.extract_strided_slice %769 {offsets = [0, 128], sizes = [8, 128], strides = [1, 1]} : vector<8x384xf32> to vector<8x128xf32>
    %780 = vector.extract_strided_slice %770 {offsets = [0, 128], sizes = [8, 128], strides = [1, 1]} : vector<8x384xf32> to vector<8x128xf32>
    %781 = arith.addf %779, %780 : vector<8x128xf32>
    %782 = arith.negf %781 : vector<8x128xf32>
    %783 = math.exp %782 : vector<8x128xf32>
    %cst_197 = arith.constant 1.000000e+00 : f32
    %784 = vector.broadcast %cst_197 : f32 to vector<8x128xf32>
    %785 = arith.addf %784, %783 : vector<8x128xf32>
    %786 = arith.divf %784, %785 : vector<8x128xf32>
    %787 = vector.extract_strided_slice %769 {offsets = [0, 256], sizes = [8, 128], strides = [1, 1]} : vector<8x384xf32> to vector<8x128xf32>
    %788 = vector.extract_strided_slice %770 {offsets = [0, 256], sizes = [8, 128], strides = [1, 1]} : vector<8x384xf32> to vector<8x128xf32>
    %789 = arith.mulf %778, %788 : vector<8x128xf32>
    %790 = arith.addf %787, %789 : vector<8x128xf32>
    %791 = math.tanh %790 : vector<8x128xf32>
    %cst_198 = arith.constant 1.000000e+00 : f32
    %792 = vector.broadcast %cst_198 : f32 to vector<8x128xf32>
    %793 = arith.subf %792, %786 : vector<8x128xf32>
    %794 = arith.mulf %793, %791 : vector<8x128xf32>
    %795 = arith.mulf %786, %740 : vector<8x128xf32>
    %796 = arith.addf %794, %795 : vector<8x128xf32>
    %cst_199 = arith.constant 0.000000e+00 : f32
    %797 = vector.shape_cast %724 : vector<8x1xi1> to vector<8x1xi1>
    %798 = vector.broadcast %797 : vector<8x1xi1> to vector<8x128xi1>
    %799 = vector.broadcast %cst_199 : f32 to vector<8x128xf32>
    %800 = arith.select %798, %768, %799 : vector<8x128xi1>, vector<8x128xf32>
    %801 = arith.index_cast %c7_i32_180 : i32 to index
    %c0_200 = arith.constant 0 : index
    %c0_201 = arith.constant 0 : index
    %802 = vector.load %arg10[%801, %c0_200, %c0_201] : memref<8x8x256xf32, #tpu.memory_space<vmem>>, vector<1x8x128xf32>
    %803 = vector.shape_cast %802 : vector<1x8x128xf32> to vector<8x128xf32>
    %804 = vector.shape_cast %800 : vector<8x128xf32> to vector<1x8x128xf32>
    tpu.vector_store %arg10[%801, %c0_200, %c0_201], %804 {strides = array<i32>} : memref<8x8x256xf32, #tpu.memory_space<vmem>>, vector<1x8x128xf32>,
    %cst_202 = arith.constant 0.000000e+00 : f32
    %805 = vector.shape_cast %729 : vector<8x1xi1> to vector<8x1xi1>
    %806 = vector.broadcast %805 : vector<8x1xi1> to vector<8x128xi1>
    %807 = vector.broadcast %cst_202 : f32 to vector<8x128xf32>
    %808 = arith.select %806, %796, %807 : vector<8x128xi1>, vector<8x128xf32>
    %809 = arith.index_cast %719 : i32 to index
    %c0_203 = arith.constant 0 : index
    %c128_204 = arith.constant 128 : index
    %810 = vector.load %arg10[%809, %c0_203, %c128_204] : memref<8x8x256xf32, #tpu.memory_space<vmem>>, vector<1x8x128xf32>
    %811 = vector.shape_cast %810 : vector<1x8x128xf32> to vector<8x128xf32>
    %812 = vector.shape_cast %808 : vector<8x128xf32> to vector<1x8x128xf32>
    tpu.vector_store %arg10[%809, %c0_203, %c128_204], %812 {strides = array<i32>} : memref<8x8x256xf32, #tpu.memory_space<vmem>>, vector<1x8x128xf32>,
    %813 = vector.shape_cast %724 : vector<8x1xi1> to vector<8x1xi1>
    %814 = vector.broadcast %813 : vector<8x1xi1> to vector<8x128xi1>
    %815 = arith.select %814, %768, %739 : vector<8x128xi1>, vector<8x128xf32>
    %816 = vector.shape_cast %729 : vector<8x1xi1> to vector<8x1xi1>
    %817 = vector.broadcast %816 : vector<8x1xi1> to vector<8x128xi1>
    %818 = arith.select %817, %796, %740 : vector<8x128xi1>, vector<8x128xf32>
    %819 = tpu.concatenate %815, %818 in 1 : vector<8x128xf32>, vector<8x128xf32> -> vector<8x256xf32>
    %c8_i32 = arith.constant 8 : i32
    %c0_205 = arith.constant 0 : index
    %c0_206 = arith.constant 0 : index
    %820 = vector.load %arg11[%c0_205, %c0_206] : memref<8x256xf32, #tpu.memory_space<vmem>>, vector<8x256xf32>
    tpu.vector_store %arg11[%c0_205, %c0_206], %819 {strides = array<i32>} : memref<8x256xf32, #tpu.memory_space<vmem>>, vector<8x256xf32>,
    %c0_207 = arith.constant 0 : index
    %c0_208 = arith.constant 0 : index
    %821 = vector.load %arg7[%c0_207, %c0_208] : memref<256x128xf32, #tpu.memory_space<vmem>>, vector<256x128xf32>
    %cst_209 = arith.constant dense<0.000000e+00> : vector<8x128xf32>
    %822 = tpu.matmul %819, %821, %cst_209 {dimension_numbers = #tpu.dot_dimension_numbers<[1], [0], [0], [1], [0, 0, 1, 1], [], []>} : vector<8x256xf32>, vector<256x128xf32>, vector<8x128xf32> -> vector<8x128xf32>
    %c0_210 = arith.constant 0 : index
    %c0_211 = arith.constant 0 : index
    %823 = vector.load %arg8[%c0_210, %c0_211] : memref<1x128xf32, #tpu.memory_space<vmem>>, vector<1x128xf32>
    %824 = vector.broadcast %823 : vector<1x128xf32> to vector<8x128xf32>
    %825 = arith.addf %822, %824 : vector<8x128xf32>
    %c0_212 = arith.constant 0 : index
    %c0_213 = arith.constant 0 : index
    %826 = vector.load %arg9[%c0_212, %c0_213] : memref<8x128xf32, #tpu.memory_space<vmem>>, vector<8x128xf32>
    %cst_214 = arith.constant 0.000000e+00 : f32
    %827 = vector.broadcast %cst_214 : f32 to vector<8x128xf32>
    %828 = arith.cmpf ogt, %826, %827 : vector<8x128xf32>
    %cst_215 = arith.constant -1.000000e+09 : f32
    %829 = vector.broadcast %cst_215 : f32 to vector<8x128xf32>
    %830 = arith.select %828, %825, %829 : vector<8x128xi1>, vector<8x128xf32>
    %cst_216 = arith.constant dense<0xFF800000> : vector<8xf32>
    %831 = vector.multi_reduction <maximumf>, %830, %cst_216 [1] : vector<8x128xf32> to vector<8xf32>
    %832 = vector.shape_cast %831 : vector<8xf32> to vector<8x1xf32>
    %833 = vector.broadcast %832 : vector<8x1xf32> to vector<8x128xf32>
    %834 = arith.subf %830, %833 : vector<8x128xf32>
    %835 = math.exp %834 : vector<8x128xf32>
    %cst_217 = arith.constant dense<0.000000e+00> : vector<8xf32>
    %836 = vector.multi_reduction <add>, %835, %cst_217 [1] : vector<8x128xf32> to vector<8xf32>
    %837 = vector.shape_cast %836 : vector<8xf32> to vector<8x1xf32>
    %838 = math.log %837 : vector<8x1xf32>
    %839 = vector.broadcast %838 : vector<8x1xf32> to vector<8x128xf32>
    %840 = arith.subf %834, %839 : vector<8x128xf32>
    %c0_218 = arith.constant 0 : index
    %c0_219 = arith.constant 0 : index
    %841 = vector.load %arg12[%c0_218, %c0_219] : memref<8x128xf32, #tpu.memory_space<vmem>>, vector<8x128xf32>
    tpu.vector_store %arg12[%c0_218, %c0_219], %840 {strides = array<i32>} : memref<8x128xf32, #tpu.memory_space<vmem>>, vector<8x128xf32>,
    %842 = tpu.iota {dimensions = array<i32: 1>} : vector<8x128xi32>
    %843 = vector.broadcast %832 : vector<8x1xf32> to vector<8x128xf32>
    %844 = arith.cmpf oge, %830, %843 : vector<8x128xf32>
    %c128_i32 = arith.constant 128 : i32
    %845 = vector.broadcast %c128_i32 : i32 to vector<8x128xi32>
    %846 = arith.select %844, %842, %845 : vector<8x128xi1>, vector<8x128xi32>
    %cst_220 = arith.constant dense<2147483647> : vector<8xi32>
    %847 = vector.multi_reduction <minsi>, %846, %cst_220 [1] : vector<8x128xi32> to vector<8xi32>
    %848 = vector.shape_cast %847 : vector<8xi32> to vector<8x1xi32>
    %c0_221 = arith.constant 0 : index
    %c0_222 = arith.constant 0 : index
    %849 = vector.load %arg13[%c0_221, %c0_222] : memref<8x1xi32, #tpu.memory_space<vmem>>, vector<8x1xi32>
    tpu.vector_store %arg13[%c0_221, %c0_222], %848 {strides = array<i32>} : memref<8x1xi32, #tpu.memory_space<vmem>>, vector<8x1xi32>,
    %850 = vector.broadcast %848 : vector<8x1xi32> to vector<8x128xi32>
    %851 = arith.cmpi eq, %842, %850 : vector<8x128xi32>
    %cst_223 = arith.constant 0.000000e+00 : f32
    %852 = vector.broadcast %cst_223 : f32 to vector<8x128xf32>
    %853 = arith.select %851, %840, %852 : vector<8x128xi1>, vector<8x128xf32>
    %cst_224 = arith.constant dense<0.000000e+00> : vector<8xf32>
    %854 = vector.multi_reduction <add>, %853, %cst_224 [1] : vector<8x128xf32> to vector<8xf32>
    %855 = vector.shape_cast %854 : vector<8xf32> to vector<8x1xf32>
    %c0_225 = arith.constant 0 : index
    %c0_226 = arith.constant 0 : index
    %856 = vector.load %arg14[%c0_225, %c0_226] : memref<8x1xf32, #tpu.memory_space<vmem>>, vector<8x1xf32>
    tpu.vector_store %arg14[%c0_225, %c0_226], %855 {strides = array<i32>} : memref<8x1xf32, #tpu.memory_space<vmem>>, vector<8x1xf32>,
    return
  }
  func.func @transform_0(%arg0: i32) -> (i32, i32, i32) {
    %c0_i32 = arith.constant 0 : i32
    %c0_i32_0 = arith.constant 0 : i32
    %c0_i32_1 = arith.constant 0 : i32
    return %c0_i32, %arg0, %c0_i32_0 : i32, i32, i32
  }
  func.func @transform_1(%arg0: i32) -> (i32, i32, i32) {
    %c0_i32 = arith.constant 0 : i32
    %c0_i32_0 = arith.constant 0 : i32
    %c0_i32_1 = arith.constant 0 : i32
    return %c0_i32, %arg0, %c0_i32_0 : i32, i32, i32
  }
  func.func @transform_2(%arg0: i32) -> (i32, i32) {
    %c0_i32 = arith.constant 0 : i32
    %c0_i32_0 = arith.constant 0 : i32
    %c0_i32_1 = arith.constant 0 : i32
    return %c0_i32, %c0_i32_0 : i32, i32
  }
  func.func @transform_3(%arg0: i32) -> (i32, i32) {
    %c0_i32 = arith.constant 0 : i32
    %c0_i32_0 = arith.constant 0 : i32
    %c0_i32_1 = arith.constant 0 : i32
    return %c0_i32, %c0_i32_0 : i32, i32
  }
  func.func @transform_4(%arg0: i32) -> (i32, i32) {
    %c0_i32 = arith.constant 0 : i32
    %c0_i32_0 = arith.constant 0 : i32
    %c0_i32_1 = arith.constant 0 : i32
    return %c0_i32, %c0_i32_0 : i32, i32
  }
  func.func @transform_5(%arg0: i32) -> (i32, i32) {
    %c0_i32 = arith.constant 0 : i32
    %c0_i32_0 = arith.constant 0 : i32
    %c0_i32_1 = arith.constant 0 : i32
    return %c0_i32, %c0_i32_0 : i32, i32
  }
  func.func @transform_6(%arg0: i32) -> (i32, i32) {
    %c0_i32 = arith.constant 0 : i32
    %c0_i32_0 = arith.constant 0 : i32
    %c0_i32_1 = arith.constant 0 : i32
    return %c0_i32, %c0_i32_0 : i32, i32
  }
  func.func @transform_7(%arg0: i32) -> (i32, i32) {
    %c0_i32 = arith.constant 0 : i32
    %c0_i32_0 = arith.constant 0 : i32
    %c0_i32_1 = arith.constant 0 : i32
    return %c0_i32, %c0_i32_0 : i32, i32
  }
  func.func @transform_8(%arg0: i32) -> (i32, i32) {
    %c0_i32 = arith.constant 0 : i32
    %c0_i32_0 = arith.constant 0 : i32
    return %arg0, %c0_i32 : i32, i32
  }
  func.func @transform_9(%arg0: i32) -> (i32, i32, i32) {
    %c0_i32 = arith.constant 0 : i32
    %c0_i32_0 = arith.constant 0 : i32
    %c0_i32_1 = arith.constant 0 : i32
    return %c0_i32, %arg0, %c0_i32_0 : i32, i32, i32
  }
  func.func @transform_10(%arg0: i32) -> (i32, i32) {
    %c0_i32 = arith.constant 0 : i32
    %c0_i32_0 = arith.constant 0 : i32
    return %arg0, %c0_i32 : i32, i32
  }
  func.func @transform_11(%arg0: i32) -> (i32, i32) {
    %c0_i32 = arith.constant 0 : i32
    %c0_i32_0 = arith.constant 0 : i32
    return %arg0, %c0_i32 : i32, i32
  }
  func.func @transform_12(%arg0: i32) -> (i32, i32) {
    %c0_i32 = arith.constant 0 : i32
    %c0_i32_0 = arith.constant 0 : i32
    return %arg0, %c0_i32 : i32, i32
  }
  func.func @transform_13(%arg0: i32) -> (i32, i32) {
    %c0_i32 = arith.constant 0 : i32
    %c0_i32_0 = arith.constant 0 : i32
    return %arg0, %c0_i32 : i32, i32
  }
}

</mosaic_0001>

<llo_original>
// kernel: tpu_custom_call.1
$region0: #{tpu_custom_call.1}
  #allocation0 [shape = 'u32[]', space=smem, size = 0x4, offset = 0x4, fixed_abs, tag = 'smem constant byte address 0x4 - core index']
  #allocation1 [shape = 'u32[144,128]{1,0:T(1,128)}', space=vmem, size = 0x12000, scoped, tag = 'internal scratch']
  #allocation2 [shape = 'f32[8,8,768]{2,1,0:T(8,128)}', space=vmem, size = 0x30000, scoped, tag = 'scratch operand']
  %s0 = inlined_call_operand.vmem [shape: f32[8,8,32], index: 0, kind: input, shape index: {}]
  %s1 = inlined_call_operand.vmem [shape: f32[8,8,1], index: 1, kind: input, shape index: {}]
  %s2 = inlined_call_operand.hbm [shape: f32[32,768], index: 2, kind: input, shape index: {}]
  %s3 = inlined_call_operand.vmem [shape: f32[1,768], index: 3, kind: input, shape index: {}]
  %s4 = inlined_call_operand.hbm [shape: f32[256,768], index: 4, kind: input, shape index: {}]
  %s5 = inlined_call_operand.vmem [shape: f32[1,768], index: 5, kind: input, shape index: {}]
  %s6 = inlined_call_operand.hbm [shape: f32[256,128], index: 6, kind: input, shape index: {}]
  %s7 = inlined_call_operand.vmem [shape: f32[1,128], index: 7, kind: input, shape index: {}]
  %s8 = inlined_call_operand.vmem [shape: f32[8,128], index: 8, kind: input, shape index: {}]
  %s9 = inlined_call_operand.hbm [shape: f32[8,8,256], index: 9, kind: output, shape index: {0}]
  %s10 = inlined_call_operand.hbm [shape: f32[8,256], index: 10, kind: output, shape index: {1}]
  %s11 = inlined_call_operand.hbm [shape: f32[8,128], index: 11, kind: output, shape index: {2}]
  %s12 = inlined_call_operand.vmem [shape: s32[8,1], index: 12, kind: output, shape index: {3}]
  %s13 = inlined_call_operand.vmem [shape: f32[8,1], index: 13, kind: output, shape index: {4}]
  %14 = xla_tuple %s9, %s10, %s11, %s12, %s13
  %s15 = sld [smem:[#allocation0]]
  $region90: #{tpu_custom_call.1} parent=0
    _
  %s17 = ssub.s32 1, %s15
  %s18 = scalar_select 0, %s17, %s15
  $region1: #{tpu_custom_call.1} parent=0
    #allocation3 [shape = 'u8[98304]{0}', space=vmem, size = 0x18000, scoped, tag = 'input window, operand 2, single buffered']
    #allocation4 [shape = 's32[1]{0}', space=sflag, size = 0x4, scoped, tag = 'scoped memory for tpu_custom_call.1']
    #allocation5 [shape = 's32[1]{0}', space=sflag, size = 0x4, scoped, tag = 'scoped memory for tpu_custom_call.1']
    #allocation6 [shape = 'u8[786432]{0}', space=vmem, size = 0xc0000, scoped, tag = 'input window, operand 4, single buffered']
    #allocation7 [shape = 's32[1]{0}', space=sflag, size = 0x4, scoped, tag = 'scoped memory for tpu_custom_call.1']
    #allocation8 [shape = 'u8[131072]{0}', space=vmem, size = 0x20000, scoped, tag = 'input window, operand 6, single buffered']
    #allocation9 [shape = 'u8[65536]{0}', space=vmem, size = 0x10000, scoped, tag = 'output window, operand 0, single buffered']
    #allocation10 [shape = 'u8[8192]{0}', space=vmem, size = 0x2000, scoped, tag = 'output window, operand 1, single buffered']
    #allocation11 [shape = 's32[1]{0}', space=sflag, size = 0x4, scoped, tag = 'scoped memory for tpu_custom_call.1']
    #allocation12 [shape = 'u8[4096]{0}', space=vmem, size = 0x1000, scoped, tag = 'output window, operand 2, single buffered']
    %19 = vsyncpa [#allocation4], 0
    %20 = vsyncpa [#allocation7], 0
    %21 = vsyncpa [#allocation5], 0
    %22 = vsyncpa [#allocation11], 0
    // Predicated region
    $region2: #{tpu_custom_call.1} parent=1 // pred_check
      _
    $region3: #{tpu_custom_call.1} parent=1 // pred_check_branch
      %24 = sbr.rel (0) target = $region5
    $region4: #{tpu_custom_call.1} parent=1 // pred_region
      _
    $region5: #{tpu_custom_call.1} parent=1 // pred_fallthru
      _
    // Predicated region
    $region6: #{tpu_custom_call.1} parent=1 // pred_check
      _
    $region7: #{tpu_custom_call.1} parent=1 // pred_check_branch
      %26 = sbr.rel (0) target = $region9
    $region8: #{tpu_custom_call.1} parent=1 // pred_region
      _
    $region9: #{tpu_custom_call.1} parent=1 // pred_fallthru
      _
    // Predicated region
    $region10: #{tpu_custom_call.1} parent=1 // pred_check
      _
    $region11: #{tpu_custom_call.1} parent=1 // pred_check_branch
      %28 = sbr.rel (0) target = $region13
    $region12: #{tpu_custom_call.1} parent=1 // pred_region
      %s30 = ssub.s32 3072, 3072
      %31 = vsyncadd [#allocation4], %s30
      %s32 = sshll.u32 [#allocation3], 4
      %s33 = int_to_ptr.vmem [resolvable:$true] %s32
      %38 = dma.hbm_to_vmem [thread:$0]  %s2, 3072, %s33, [#allocation4], 768, 768, 48
    $region13: #{tpu_custom_call.1} parent=1 // pred_fallthru
      _
    // Predicated region
    $region14: #{tpu_custom_call.1} parent=1 // pred_check
      _
    $region15: #{tpu_custom_call.1} parent=1 // pred_check_branch
      %40 = sbr.rel (0) target = $region17
    $region16: #{tpu_custom_call.1} parent=1 // pred_region
      _
    $region17: #{tpu_custom_call.1} parent=1 // pred_fallthru
      _
    // Predicated region
    $region18: #{tpu_custom_call.1} parent=1 // pred_check
      _
    $region19: #{tpu_custom_call.1} parent=1 // pred_check_branch
      %42 = sbr.rel (0) target = $region21
    $region20: #{tpu_custom_call.1} parent=1 // pred_region
      %s44 = ssub.s32 24576, 24576
      %45 = vsyncadd [#allocation7], %s44
      %s46 = sshll.u32 [#allocation6], 4
      %s47 = int_to_ptr.vmem [resolvable:$true] %s46
      %52 = dma.hbm_to_vmem [thread:$0]  %s4, 24576, %s47, [#allocation7], 768, 768, 48
    $region21: #{tpu_custom_call.1} parent=1 // pred_fallthru
      _
    // Predicated region
    $region22: #{tpu_custom_call.1} parent=1 // pred_check
      _
    $region23: #{tpu_custom_call.1} parent=1 // pred_check_branch
      %54 = sbr.rel (0) target = $region25
    $region24: #{tpu_custom_call.1} parent=1 // pred_region
      _
    $region25: #{tpu_custom_call.1} parent=1 // pred_fallthru
      _
    // Predicated region
    $region26: #{tpu_custom_call.1} parent=1 // pred_check
      _
    $region27: #{tpu_custom_call.1} parent=1 // pred_check_branch
      %56 = sbr.rel (0) target = $region29
    $region28: #{tpu_custom_call.1} parent=1 // pred_region
      %s58 = ssub.s32 4096, 4096
      %59 = vsyncadd [#allocation7], %s58
      %s60 = sshll.u32 [#allocation8], 4
      %s61 = int_to_ptr.vmem [resolvable:$true] %s60
      %66 = dma.hbm_to_vmem [thread:$0]  %s6, 4096, %s61, [#allocation7], 128, 128, 8
    $region29: #{tpu_custom_call.1} parent=1 // pred_fallthru
      _
    // Predicated region
    $region30: #{tpu_custom_call.1} parent=1 // pred_check
      _
    $region31: #{tpu_custom_call.1} parent=1 // pred_check_branch
      %68 = sbr.rel (0) target = $region33
    $region32: #{tpu_custom_call.1} parent=1 // pred_region
      _
    $region33: #{tpu_custom_call.1} parent=1 // pred_fallthru
      _
    // Predicated region
    $region34: #{tpu_custom_call.1} parent=1 // pred_check
      _
    $region35: #{tpu_custom_call.1} parent=1 // pred_check_branch
      %70 = sbr.rel (0) target = $region37
    $region36: #{tpu_custom_call.1} parent=1 // pred_region
      _
    $region37: #{tpu_custom_call.1} parent=1 // pred_fallthru
      _
    // Predicated region
    $region38: #{tpu_custom_call.1} parent=1 // pred_check
      _
    $region39: #{tpu_custom_call.1} parent=1 // pred_check_branch
      %72 = sbr.rel (0) target = $region41
    $region40: #{tpu_custom_call.1} parent=1 // pred_region
      %73 = dma.done [#allocation4], 3072
    $region41: #{tpu_custom_call.1} parent=1 // pred_fallthru
      _
    // Predicated region
    $region42: #{tpu_custom_call.1} parent=1 // pred_check
      _
    $region43: #{tpu_custom_call.1} parent=1 // pred_check_branch
      %75 = sbr.rel (0) target = $region45
    $region44: #{tpu_custom_call.1} parent=1 // pred_region
      %76 = dma.done [#allocation7], 24576
    $region45: #{tpu_custom_call.1} parent=1 // pred_fallthru
      _
    // Predicated region
    $region46: #{tpu_custom_call.1} parent=1 // pred_check
      _
    $region47: #{tpu_custom_call.1} parent=1 // pred_check_branch
      %78 = sbr.rel (0) target = $region49
    $region48: #{tpu_custom_call.1} parent=1 // pred_region
      %79 = dma.done [#allocation7], 4096
    $region49: #{tpu_custom_call.1} parent=1 // pred_fallthru
      _
    %v80 = vld [vmem:[%s0] sm:$0xff]
    %v81 = vld [vmem:[%s0 + $0x8] sm:$0xff]
    %v82 = vld [vmem:[%s0 + $0x10] sm:$0xff]
    %v83 = vld [vmem:[%s0 + $0x18] sm:$0xff]
    %v84 = vld [vmem:[%s0 + $0x20] sm:$0xff]
    %v85 = vld [vmem:[%s0 + $0x28] sm:$0xff]
    %v86 = vld [vmem:[%s0 + $0x30] sm:$0xff]
    %v87 = vld [vmem:[%s0 + $0x38] sm:$0xff]
    %v88 = vld [vmem:[#allocation3] sm:$0xff]
    %v89 = vld [vmem:[#allocation3 + $0x8] sm:$0xff]
    %v90 = vld [vmem:[#allocation3 + $0x10] sm:$0xff]
    %v91 = vld [vmem:[#allocation3 + $0x18] sm:$0xff]
    %v92 = vld [vmem:[#allocation3 + $0x20] sm:$0xff]
    %v93 = vld [vmem:[#allocation3 + $0x28] sm:$0xff]
    %v94 = vld [vmem:[#allocation3 + $0x30] sm:$0xff]
    %v95 = vld [vmem:[#allocation3 + $0x38] sm:$0xff]
    %v96 = vld [vmem:[#allocation3 + $0x40] sm:$0xff]
    %v97 = vld [vmem:[#allocation3 + $0x48] sm:$0xff]
    %v98 = vld [vmem:[#allocation3 + $0x50] sm:$0xff]
    %v99 = vld [vmem:[#allocation3 + $0x58] sm:$0xff]
    %v100 = vld [vmem:[#allocation3 + $0x60] sm:$0xff]
    %v101 = vld [vmem:[#allocation3 + $0x68] sm:$0xff]
    %v102 = vld [vmem:[#allocation3 + $0x70] sm:$0xff]
    %v103 = vld [vmem:[#allocation3 + $0x78] sm:$0xff]
    %v104 = vld [vmem:[#allocation3 + $0x80] sm:$0xff]
    %v105 = vld [vmem:[#allocation3 + $0x88] sm:$0xff]
    %v106 = vld [vmem:[#allocation3 + $0x90] sm:$0xff]
    %v107 = vld [vmem:[#allocation3 + $0x98] sm:$0xff]
    %v108 = vld [vmem:[#allocation3 + $0xa0] sm:$0xff]
    %v109 = vld [vmem:[#allocation3 + $0xa8] sm:$0xff]
    %v110 = vld [vmem:[#allocation3 + $0xb0] sm:$0xff]
    %v111 = vld [vmem:[#allocation3 + $0xb8] sm:$0xff]
    %v112 = vld [vmem:[%s3] sm:$0x3f]
    %v114 = vlaneseq
    %v115 = vshrl.u32 %v114, 7
    %v116 = vsub.s32 0, %v115
    %v117 = vrot.slane %v112, %v116
    %v118 = vlaneseq
    %v119 = vshrl.u32 %v118, 7
    %v120 = vsub.s32 1, %v119
    %v121 = vrot.slane %v112, %v120
    %v122 = vlaneseq
    %v123 = vshrl.u32 %v122, 7
    %v124 = vsub.s32 2, %v123
    %v125 = vrot.slane %v112, %v124
    %v126 = vlaneseq
    %v127 = vshrl.u32 %v126, 7
    %v128 = vsub.s32 3, %v127
    %v129 = vrot.slane %v112, %v128
    %v130 = vlaneseq
    %v131 = vshrl.u32 %v130, 7
    %v132 = vsub.s32 4, %v131
    %v133 = vrot.slane %v112, %v132
    %v134 = vlaneseq
    %v135 = vshrl.u32 %v134, 7
    %v136 = vsub.s32 5, %v135
    %v137 = vrot.slane %v112, %v136
    %vm144 = vcmask 261120
    %v146 = vsel %vm144, %v80, 0
    %v149 = vsel %vm144, %v81, 0
    %v152 = vsel %vm144, %v82, 0
    %v155 = vsel %vm144, %v83, 0
    %v158 = vsel %vm144, %v84, 0
    %v161 = vsel %vm144, %v85, 0
    %v164 = vsel %vm144, %v86, 0
    %v167 = vsel %vm144, %v87, 0
    %169 = vmatprep.subr.mxu0 %v89
    %170 = vmatpush1.msra.mxu0 %v88
    %171 = vmatprep.subr.mxu0 %v95
    %172 = vmatpush1.msra.mxu0 %v94
    %173 = vmatprep.subr.mxu0 %v101
    %174 = vmatpush1.msra.mxu0 %v100
    %175 = vmatprep.subr.mxu0 %v107
    %176 = vmatpush1.msra.mxu0 %v106
    %177 = vmatprep.subr.mxu0 0.0
    %178 = vmatpush1.msra.mxu0 0.0
    %179 = vmatprep.subr.mxu0 0.0
    %180 = vmatpush1.msra.mxu0 0.0
    %181 = vmatprep.subr.mxu0 0.0
    %182 = vmatpush1.msra.mxu0 0.0
    %183 = vmatprep.subr.mxu0 0.0
    %184 = vmatpush1.msra.mxu0 0.0
    %185 = vmatprep.subr.mxu0 0.0
    %186 = vmatpush1.msra.mxu0 0.0
    %187 = vmatprep.subr.mxu0 0.0
    %188 = vmatpush1.msra.mxu0 0.0
    %189 = vmatprep.subr.mxu0 0.0
    %190 = vmatpush1.msra.mxu0 0.0
    %191 = vmatprep.subr.mxu0 0.0
    %192 = vmatpush1.msra.mxu0 0.0
    %193 = vmatprep.subr.mxu0 0.0
    %194 = vmatpush1.msra.mxu0 0.0
    %195 = vmatprep.subr.mxu0 0.0
    %196 = vmatpush1.msra.mxu0 0.0
    %197 = vmatprep.subr.mxu0 0.0
    %198 = vmatpush1.msra.mxu0 0.0
    %199 = vmatprep.subr.mxu0 0.0
    %200 = vmatpush1.msra.mxu0 0.0
    %201 = vmatprep.subr.mxu0 0.0
    %202 = vmatpush1.msra.mxu0 0.0
    %203 = vmatprep.subr.mxu0 0.0
    %204 = vmatpush1.msra.mxu0 0.0
    %205 = vmatprep.subr.mxu0 0.0
    %206 = vmatpush1.msra.mxu0 0.0
    %207 = vmatprep.subr.mxu0 0.0
    %208 = vmatpush1.msra.mxu0 0.0
    %209 = vmatprep.subr.mxu0 0.0
    %210 = vmatpush1.msra.mxu0 0.0
    %211 = vmatprep.subr.mxu0 0.0
    %212 = vmatpush1.msra.mxu0 0.0
    %213 = vmatprep.subr.mxu0 0.0
    %214 = vmatpush1.msra.mxu0 0.0
    %215 = vmatprep.subr.mxu0 0.0
    %216 = vmatpush1.msra.mxu0 0.0
    %217 = vmatprep.subr.mxu0 0.0
    %218 = vmatpush1.msra.mxu0 0.0
    %219 = vmatprep.subr.mxu0 0.0
    %220 = vmatpush1.msra.mxu0 0.0
    %221 = vmatprep.subr.mxu0 0.0
    %222 = vmatpush1.msra.mxu0 0.0
    %223 = vmatprep.subr.mxu0 0.0
    %224 = vmatpush1.msra.mxu0 0.0
    %225 = vmatprep.subr.mxu0 0.0
    %226 = vmatpush1.msra.mxu0 0.0
    %227 = vmatprep.subr.mxu0 0.0
    %228 = vmatpush1.msra.mxu0 0.0
    %229 = vmatprep.subr.mxu0 0.0
    %230 = vmatpush1.msra.mxu0 0.0
    %231 = vmatprep.subr.mxu0 0.0
    %232 = vmatpush1.msra.mxu0 0.0
    %233 = vmatprep.mubr.f32.mxu0 0.0
    %234 = vmatmul.mubr.f32.gmra.mrb[0].mxu0 %v146
    %v235 = vpop.f32.mrb[0].mxu0
    %v236 = vadd.f32 %v117, %v235
    %v237 = vpop.f32.mrb[0].mxu0
    %v238 = vadd.f32 %v121, %v237
    %239 = vmatprep.mubr.f32.mxu0 0.0
    %240 = vmatmul.mubr.f32.gmra.mrb[0].mxu0 %v149
    %v241 = vpop.f32.mrb[0].mxu0
    %v242 = vadd.f32 %v117, %v241
    %v243 = vpop.f32.mrb[0].mxu0
    %v244 = vadd.f32 %v121, %v243
    %245 = vmatprep.mubr.f32.mxu0 0.0
    %246 = vmatmul.mubr.f32.gmra.mrb[0].mxu0 %v152
    %v247 = vpop.f32.mrb[0].mxu0
    %v248 = vadd.f32 %v117, %v247
    %v249 = vpop.f32.mrb[0].mxu0
    %v250 = vadd.f32 %v121, %v249
    %251 = vmatprep.mubr.f32.mxu0 0.0
    %252 = vmatmul.mubr.f32.gmra.mrb[0].mxu0 %v155
    %v253 = vpop.f32.mrb[0].mxu0
    %v254 = vadd.f32 %v117, %v253
    %v255 = vpop.f32.mrb[0].mxu0
    %v256 = vadd.f32 %v121, %v255
    %257 = vmatprep.mubr.f32.mxu0 0.0
    %258 = vmatmul.mubr.f32.gmra.mrb[0].mxu0 %v158
    %v259 = vpop.f32.mrb[0].mxu0
    %v260 = vadd.f32 %v117, %v259
    %v261 = vpop.f32.mrb[0].mxu0
    %v262 = vadd.f32 %v121, %v261
    %263 = vmatprep.mubr.f32.mxu0 0.0
    %264 = vmatmul.mubr.f32.gmra.mrb[0].mxu0 %v161
    %v265 = vpop.f32.mrb[0].mxu0
    %v266 = vadd.f32 %v117, %v265
    %v267 = vpop.f32.mrb[0].mxu0
    %v268 = vadd.f32 %v121, %v267
    %269 = vmatprep.mubr.f32.mxu0 0.0
    %270 = vmatmul.mubr.f32.gmra.mrb[0].mxu0 %v164
    %v271 = vpop.f32.mrb[0].mxu0
    %v272 = vadd.f32 %v117, %v271
    %v273 = vpop.f32.mrb[0].mxu0
    %v274 = vadd.f32 %v121, %v273
    %275 = vmatprep.mubr.f32.mxu0 0.0
    %276 = vmatmul.mubr.f32.gmra.mrb[0].mxu0 %v167
    %v277 = vpop.f32.mrb[0].mxu0
    %v278 = vadd.f32 %v117, %v277
    %v279 = vpop.f32.mrb[0].mxu0
    %v280 = vadd.f32 %v121, %v279
    %281 = vdwg.mxu0
    %282 = vmatprep.subr.mxu0 %v91
    %283 = vmatpush1.msra.mxu0 %v90
    %284 = vmatprep.subr.mxu0 %v97
    %285 = vmatpush1.msra.mxu0 %v96
    %286 = vmatprep.subr.mxu0 %v103
    %287 = vmatpush1.msra.mxu0 %v102
    %288 = vmatprep.subr.mxu0 %v109
    %289 = vmatpush1.msra.mxu0 %v108
    %290 = vmatprep.subr.mxu0 0.0
    %291 = vmatpush1.msra.mxu0 0.0
    %292 = vmatprep.subr.mxu0 0.0
    %293 = vmatpush1.msra.mxu0 0.0
    %294 = vmatprep.subr.mxu0 0.0
    %295 = vmatpush1.msra.mxu0 0.0
    %296 = vmatprep.subr.mxu0 0.0
    %297 = vmatpush1.msra.mxu0 0.0
    %298 = vmatprep.subr.mxu0 0.0
    %299 = vmatpush1.msra.mxu0 0.0
    %300 = vmatprep.subr.mxu0 0.0
    %301 = vmatpush1.msra.mxu0 0.0
    %302 = vmatprep.subr.mxu0 0.0
    %303 = vmatpush1.msra.mxu0 0.0
    %304 = vmatprep.subr.mxu0 0.0
    %305 = vmatpush1.msra.mxu0 0.0
    %306 = vmatprep.subr.mxu0 0.0
    %307 = vmatpush1.msra.mxu0 0.0
    %308 = vmatprep.subr.mxu0 0.0
    %309 = vmatpush1.msra.mxu0 0.0
    %310 = vmatprep.subr.mxu0 0.0
    %311 = vmatpush1.msra.mxu0 0.0
    %312 = vmatprep.subr.mxu0 0.0
    %313 = vmatpush1.msra.mxu0 0.0
    %314 = vmatprep.subr.mxu0 0.0
    %315 = vmatpush1.msra.mxu0 0.0
    %316 = vmatprep.subr.mxu0 0.0
    %317 = vmatpush1.msra.mxu0 0.0
    %318 = vmatprep.subr.mxu0 0.0
    %319 = vmatpush1.msra.mxu0 0.0
    %320 = vmatprep.subr.mxu0 0.0
    %321 = vmatpush1.msra.mxu0 0.0
    %322 = vmatprep.subr.mxu0 0.0
    %323 = vmatpush1.msra.mxu0 0.0
    %324 = vmatprep.subr.mxu0 0.0
    %325 = vmatpush1.msra.mxu0 0.0
    %326 = vmatprep.subr.mxu0 0.0
    %327 = vmatpush1.msra.mxu0 0.0
    %328 = vmatprep.subr.mxu0 0.0
    %329 = vmatpush1.msra.mxu0 0.0
    %330 = vmatprep.subr.mxu0 0.0
    %331 = vmatpush1.msra.mxu0 0.0
    %332 = vmatprep.subr.mxu0 0.0
    %333 = vmatpush1.msra.mxu0 0.0
    %334 = vmatprep.subr.mxu0 0.0
    %335 = vmatpush1.msra.mxu0 0.0
    %336 = vmatprep.subr.mxu0 0.0
    %337 = vmatpush1.msra.mxu0 0.0
    %338 = vmatprep.subr.mxu0 0.0
    %339 = vmatpush1.msra.mxu0 0.0
    %340 = vmatprep.subr.mxu0 0.0
    %341 = vmatpush1.msra.mxu0 0.0
    %342 = vmatprep.subr.mxu0 0.0
    %343 = vmatpush1.msra.mxu0 0.0
    %344 = vmatprep.subr.mxu0 0.0
    %345 = vmatpush1.msra.mxu0 0.0
    %346 = vmatprep.mubr.f32.mxu0 0.0
    %347 = vmatmul.mubr.f32.gmra.mrb[0].mxu0 %v146
    %v348 = vpop.f32.mrb[0].mxu0
    %v349 = vadd.f32 %v125, %v348
    %v350 = vpop.f32.mrb[0].mxu0
    %v351 = vadd.f32 %v129, %v350
    %352 = vmatprep.mubr.f32.mxu0 0.0
    %353 = vmatmul.mubr.f32.gmra.mrb[0].mxu0 %v149
    %v354 = vpop.f32.mrb[0].mxu0
    %v355 = vadd.f32 %v125, %v354
    %v356 = vpop.f32.mrb[0].mxu0
    %v357 = vadd.f32 %v129, %v356
    %358 = vmatprep.mubr.f32.mxu0 0.0
    %359 = vmatmul.mubr.f32.gmra.mrb[0].mxu0 %v152
    %v360 = vpop.f32.mrb[0].mxu0
    %v361 = vadd.f32 %v125, %v360
    %v362 = vpop.f32.mrb[0].mxu0
    %v363 = vadd.f32 %v129, %v362
    %364 = vmatprep.mubr.f32.mxu0 0.0
    %365 = vmatmul.mubr.f32.gmra.mrb[0].mxu0 %v155
    %v366 = vpop.f32.mrb[0].mxu0
    %v367 = vadd.f32 %v125, %v366
    %v368 = vpop.f32.mrb[0].mxu0
    %v369 = vadd.f32 %v129, %v368
    %370 = vmatprep.mubr.f32.mxu0 0.0
    %371 = vmatmul.mubr.f32.gmra.mrb[0].mxu0 %v158
    %v372 = vpop.f32.mrb[0].mxu0
    %v373 = vadd.f32 %v125, %v372
    %v374 = vpop.f32.mrb[0].mxu0
    %v375 = vadd.f32 %v129, %v374
    %376 = vmatprep.mubr.f32.mxu0 0.0
    %377 = vmatmul.mubr.f32.gmra.mrb[0].mxu0 %v161
    %v378 = vpop.f32.mrb[0].mxu0
    %v379 = vadd.f32 %v125, %v378
    %v380 = vpop.f32.mrb[0].mxu0
    %v381 = vadd.f32 %v129, %v380
    %382 = vmatprep.mubr.f32.mxu0 0.0
    %383 = vmatmul.mubr.f32.gmra.mrb[0].mxu0 %v164
    %v384 = vpop.f32.mrb[0].mxu0
    %v385 = vadd.f32 %v125, %v384
    %v386 = vpop.f32.mrb[0].mxu0
    %v387 = vadd.f32 %v129, %v386
    %388 = vmatprep.mubr.f32.mxu0 0.0
    %389 = vmatmul.mubr.f32.gmra.mrb[0].mxu0 %v167
    %v390 = vpop.f32.mrb[0].mxu0
    %v391 = vadd.f32 %v125, %v390
    %v392 = vpop.f32.mrb[0].mxu0
    %v393 = vadd.f32 %v129, %v392
    %394 = vdwg.mxu0
    %395 = vmatprep.subr.mxu0 %v93
    %396 = vmatpush1.msra.mxu0 %v92
    %397 = vmatprep.subr.mxu0 %v99
    %398 = vmatpush1.msra.mxu0 %v98
    %399 = vmatprep.subr.mxu0 %v105
    %400 = vmatpush1.msra.mxu0 %v104
    %401 = vmatprep.subr.mxu0 %v111
    %402 = vmatpush1.msra.mxu0 %v110
    %403 = vmatprep.subr.mxu0 0.0
    %404 = vmatpush1.msra.mxu0 0.0
    %405 = vmatprep.subr.mxu0 0.0
    %406 = vmatpush1.msra.mxu0 0.0
    %407 = vmatprep.subr.mxu0 0.0
    %408 = vmatpush1.msra.mxu0 0.0
    %409 = vmatprep.subr.mxu0 0.0
    %410 = vmatpush1.msra.mxu0 0.0
    %411 = vmatprep.subr.mxu0 0.0
    %412 = vmatpush1.msra.mxu0 0.0
    %413 = vmatprep.subr.mxu0 0.0
    %414 = vmatpush1.msra.mxu0 0.0
    %415 = vmatprep.subr.mxu0 0.0
    %416 = vmatpush1.msra.mxu0 0.0
    %417 = vmatprep.subr.mxu0 0.0
    %418 = vmatpush1.msra.mxu0 0.0
    %419 = vmatprep.subr.mxu0 0.0
    %420 = vmatpush1.msra.mxu0 0.0
    %421 = vmatprep.subr.mxu0 0.0
    %422 = vmatpush1.msra.mxu0 0.0
    %423 = vmatprep.subr.mxu0 0.0
    %424 = vmatpush1.msra.mxu0 0.0
    %425 = vmatprep.subr.mxu0 0.0
    %426 = vmatpush1.msra.mxu0 0.0
    %427 = vmatprep.subr.mxu0 0.0
    %428 = vmatpush1.msra.mxu0 0.0
    %429 = vmatprep.subr.mxu0 0.0
    %430 = vmatpush1.msra.mxu0 0.0
    %431 = vmatprep.subr.mxu0 0.0
    %432 = vmatpush1.msra.mxu0 0.0
    %433 = vmatprep.subr.mxu0 0.0
    %434 = vmatpush1.msra.mxu0 0.0
    %435 = vmatprep.subr.mxu0 0.0
    %436 = vmatpush1.msra.mxu0 0.0
    %437 = vmatprep.subr.mxu0 0.0
    %438 = vmatpush1.msra.mxu0 0.0
    %439 = vmatprep.subr.mxu0 0.0
    %440 = vmatpush1.msra.mxu0 0.0
    %441 = vmatprep.subr.mxu0 0.0
    %442 = vmatpush1.msra.mxu0 0.0
    %443 = vmatprep.subr.mxu0 0.0
    %444 = vmatpush1.msra.mxu0 0.0
    %445 = vmatprep.subr.mxu0 0.0
    %446 = vmatpush1.msra.mxu0 0.0
    %447 = vmatprep.subr.mxu0 0.0
    %448 = vmatpush1.msra.mxu0 0.0
    %449 = vmatprep.subr.mxu0 0.0
    %450 = vmatpush1.msra.mxu0 0.0
    %451 = vmatprep.subr.mxu0 0.0
    %452 = vmatpush1.msra.mxu0 0.0
    %453 = vmatprep.subr.mxu0 0.0
    %454 = vmatpush1.msra.mxu0 0.0
    %455 = vmatprep.subr.mxu0 0.0
    %456 = vmatpush1.msra.mxu0 0.0
    %457 = vmatprep.subr.mxu0 0.0
    %458 = vmatpush1.msra.mxu0 0.0
    %459 = vmatprep.mubr.f32.mxu0 0.0
    %460 = vmatmul.mubr.f32.gmra.mrb[0].mxu0 %v146
    %v461 = vpop.f32.mrb[0].mxu0
    %v462 = vadd.f32 %v133, %v461
    %v463 = vpop.f32.mrb[0].mxu0
    %v464 = vadd.f32 %v137, %v463
    %465 = vmatprep.mubr.f32.mxu0 0.0
    %466 = vmatmul.mubr.f32.gmra.mrb[0].mxu0 %v149
    %v467 = vpop.f32.mrb[0].mxu0
    %v468 = vadd.f32 %v133, %v467
    %v469 = vpop.f32.mrb[0].mxu0
    %v470 = vadd.f32 %v137, %v469
    %471 = vmatprep.mubr.f32.mxu0 0.0
    %472 = vmatmul.mubr.f32.gmra.mrb[0].mxu0 %v152
    %v473 = vpop.f32.mrb[0].mxu0
    %v474 = vadd.f32 %v133, %v473
    %v475 = vpop.f32.mrb[0].mxu0
    %v476 = vadd.f32 %v137, %v475
    %477 = vmatprep.mubr.f32.mxu0 0.0
    %478 = vmatmul.mubr.f32.gmra.mrb[0].mxu0 %v155
    %v479 = vpop.f32.mrb[0].mxu0
    %v480 = vadd.f32 %v133, %v479
    %v481 = vpop.f32.mrb[0].mxu0
    %v482 = vadd.f32 %v137, %v481
    %483 = vmatprep.mubr.f32.mxu0 0.0
    %484 = vmatmul.mubr.f32.gmra.mrb[0].mxu0 %v158
    %v485 = vpop.f32.mrb[0].mxu0
    %v486 = vadd.f32 %v133, %v485
    %v487 = vpop.f32.mrb[0].mxu0
    %v488 = vadd.f32 %v137, %v487
    %489 = vmatprep.mubr.f32.mxu0 0.0
    %490 = vmatmul.mubr.f32.gmra.mrb[0].mxu0 %v161
    %v491 = vpop.f32.mrb[0].mxu0
    %v492 = vadd.f32 %v133, %v491
    %v493 = vpop.f32.mrb[0].mxu0
    %v494 = vadd.f32 %v137, %v493
    %495 = vmatprep.mubr.f32.mxu0 0.0
    %496 = vmatmul.mubr.f32.gmra.mrb[0].mxu0 %v164
    %v497 = vpop.f32.mrb[0].mxu0
    %v498 = vadd.f32 %v133, %v497
    %v499 = vpop.f32.mrb[0].mxu0
    %v500 = vadd.f32 %v137, %v499
    %501 = vmatprep.mubr.f32.mxu0 0.0
    %502 = vmatmul.mubr.f32.gmra.mrb[0].mxu0 %v167
    %v503 = vpop.f32.mrb[0].mxu0
    %v504 = vadd.f32 %v133, %v503
    %v505 = vpop.f32.mrb[0].mxu0
    %v506 = vadd.f32 %v137, %v505
    %507 = vdwg.mxu0
    %508 = vst [vmem:[#allocation2] sm:$0xff] %v236
    %509 = vst [vmem:[#allocation2 + $0x8] sm:$0xff] %v238
    %510 = vst [vmem:[#allocation2 + $0x10] sm:$0xff] %v349
    %511 = vst [vmem:[#allocation2 + $0x18] sm:$0xff] %v351
    %512 = vst [vmem:[#allocation2 + $0x20] sm:$0xff] %v462
    %513 = vst [vmem:[#allocation2 + $0x28] sm:$0xff] %v464
    %514 = vst [vmem:[#allocation2 + $0x30] sm:$0xff] %v242
    %515 = vst [vmem:[#allocation2 + $0x38] sm:$0xff] %v244
    %516 = vst [vmem:[#allocation2 + $0x40] sm:$0xff] %v355
    %517 = vst [vmem:[#allocation2 + $0x48] sm:$0xff] %v357
    %518 = vst [vmem:[#allocation2 + $0x50] sm:$0xff] %v468
    %519 = vst [vmem:[#allocation2 + $0x58] sm:$0xff] %v470
    %520 = vst [vmem:[#allocation2 + $0x60] sm:$0xff] %v248
    %521 = vst [vmem:[#allocation2 + $0x68] sm:$0xff] %v250
    %522 = vst [vmem:[#allocation2 + $0x70] sm:$0xff] %v361
    %523 = vst [vmem:[#allocation2 + $0x78] sm:$0xff] %v363
    %524 = vst [vmem:[#allocation2 + $0x80] sm:$0xff] %v474
    %525 = vst [vmem:[#allocation2 + $0x88] sm:$0xff] %v476
    %526 = vst [vmem:[#allocation2 + $0x90] sm:$0xff] %v254
    %527 = vst [vmem:[#allocation2 + $0x98] sm:$0xff] %v256
    %528 = vst [vmem:[#allocation2 + $0xa0] sm:$0xff] %v367
    %529 = vst [vmem:[#allocation2 + $0xa8] sm:$0xff] %v369
    %530 = vst [vmem:[#allocation2 + $0xb0] sm:$0xff] %v480
    %531 = vst [vmem:[#allocation2 + $0xb8] sm:$0xff] %v482
    %532 = vst [vmem:[#allocation2 + $0xc0] sm:$0xff] %v260
    %533 = vst [vmem:[#allocation2 + $0xc8] sm:$0xff] %v262
    %534 = vst [vmem:[#allocation2 + $0xd0] sm:$0xff] %v373
    %535 = vst [vmem:[#allocation2 + $0xd8] sm:$0xff] %v375
    %536 = vst [vmem:[#allocation2 + $0xe0] sm:$0xff] %v486
    %537 = vst [vmem:[#allocation2 + $0xe8] sm:$0xff] %v488
    %538 = vst [vmem:[#allocation2 + $0xf0] sm:$0xff] %v266
    %539 = vst [vmem:[#allocation2 + $0xf8] sm:$0xff] %v268
    %540 = vst [vmem:[#allocation2 + $0x100] sm:$0xff] %v379
    %541 = vst [vmem:[#allocation2 + $0x108] sm:$0xff] %v381
    %542 = vst [vmem:[#allocation2 + $0x110] sm:$0xff] %v492
    %543 = vst [vmem:[#allocation2 + $0x118] sm:$0xff] %v494
    %544 = vst [vmem:[#allocation2 + $0x120] sm:$0xff] %v272
    %545 = vst [vmem:[#allocation2 + $0x128] sm:$0xff] %v274
    %546 = vst [vmem:[#allocation2 + $0x130] sm:$0xff] %v385
    %547 = vst [vmem:[#allocation2 + $0x138] sm:$0xff] %v387
    %548 = vst [vmem:[#allocation2 + $0x140] sm:$0xff] %v498
    %549 = vst [vmem:[#allocation2 + $0x148] sm:$0xff] %v500
    %550 = vst [vmem:[#allocation2 + $0x150] sm:$0xff] %v278
    %551 = vst [vmem:[#allocation2 + $0x158] sm:$0xff] %v280
    %552 = vst [vmem:[#allocation2 + $0x160] sm:$0xff] %v391
    %553 = vst [vmem:[#allocation2 + $0x168] sm:$0xff] %v393
    %554 = vst [vmem:[#allocation2 + $0x170] sm:$0xff] %v504
    %555 = vst [vmem:[#allocation2 + $0x178] sm:$0xff] %v506
    %v556 = vld [vmem:[#allocation6] sm:$0xff]
    %v557 = vld [vmem:[#allocation6 + $0x8] sm:$0xff]
    %v558 = vld [vmem:[#allocation6 + $0x10] sm:$0xff]
    %v559 = vld [vmem:[#allocation6 + $0x18] sm:$0xff]
    %v560 = vld [vmem:[#allocation6 + $0x20] sm:$0xff]
    %v561 = vld [vmem:[#allocation6 + $0x28] sm:$0xff]
    %v562 = vld [vmem:[#allocation6 + $0x30] sm:$0xff]
    %v563 = vld [vmem:[#allocation6 + $0x38] sm:$0xff]
    %v564 = vld [vmem:[#allocation6 + $0x40] sm:$0xff]
    %v565 = vld [vmem:[#allocation6 + $0x48] sm:$0xff]
    %v566 = vld [vmem:[#allocation6 + $0x50] sm:$0xff]
    %v567 = vld [vmem:[#allocation6 + $0x58] sm:$0xff]
    %v568 = vld [vmem:[#allocation6 + $0x60] sm:$0xff]
    %v569 = vld [vmem:[#allocation6 + $0x68] sm:$0xff]
    %v570 = vld [vmem:[#allocation6 + $0x70] sm:$0xff]
    %v571 = vld [vmem:[#allocation6 + $0x78] sm:$0xff]
    %v572 = vld [vmem:[#allocation6 + $0x80] sm:$0xff]
    %v573 = vld [vmem:[#allocation6 + $0x88] sm:$0xff]
    %v574 = vld [vmem:[#allocation6 + $0x90] sm:$0xff]
    %v575 = vld [vmem:[#allocation6 + $0x98] sm:$0xff]
    %v576 = vld [vmem:[#allocation6 + $0xa0] sm:$0xff]
    %v577 = vld [vmem:[#allocation6 + $0xa8] sm:$0xff]
    %v578 = vld [vmem:[#allocation6 + $0xb0] sm:$0xff]
    %v579 = vld [vmem:[#allocation6 + $0xb8] sm:$0xff]
    %v580 = vld [vmem:[#allocation6 + $0xc0] sm:$0xff]
    %v581 = vld [vmem:[#allocation6 + $0xc8] sm:$0xff]
    %v582 = vld [vmem:[#allocation6 + $0xd0] sm:$0xff]
    %v583 = vld [vmem:[#allocation6 + $0xd8] sm:$0xff]
    %v584 = vld [vmem:[#allocation6 + $0xe0] sm:$0xff]
    %v585 = vld [vmem:[#allocation6 + $0xe8] sm:$0xff]
    %v586 = vld [vmem:[#allocation6 + $0xf0] sm:$0xff]
    %v587 = vld [vmem:[#allocation6 + $0xf8] sm:$0xff]
    %v588 = vld [vmem:[#allocation6 + $0x100] sm:$0xff]
    %v589 = vld [vmem:[#allocation6 + $0x108] sm:$0xff]
    %v590 = vld [vmem:[#allocation6 + $0x110] sm:$0xff]
    %v591 = vld [vmem:[#allocation6 + $0x118] sm:$0xff]
    %v592 = vld [vmem:[#allocation6 + $0x120] sm:$0xff]
    %v593 = vld [vmem:[#allocation6 + $0x128] sm:$0xff]
    %v594 = vld [vmem:[#allocation6 + $0x130] sm:$0xff]
    %v595 = vld [vmem:[#allocation6 + $0x138] sm:$0xff]
    %v596 = vld [vmem:[#allocation6 + $0x140] sm:$0xff]
    %v597 = vld [vmem:[#allocation6 + $0x148] sm:$0xff]
    %v598 = vld [vmem:[#allocation6 + $0x150] sm:$0xff]
    %v599 = vld [vmem:[#allocation6 + $0x158] sm:$0xff]
    %v600 = vld [vmem:[#allocation6 + $0x160] sm:$0xff]
    %v601 = vld [vmem:[#allocation6 + $0x168] sm:$0xff]
    %v602 = vld [vmem:[#allocation6 + $0x170] sm:$0xff]
    %v603 = vld [vmem:[#allocation6 + $0x178] sm:$0xff]
    %v604 = vld [vmem:[#allocation6 + $0x180] sm:$0xff]
    %v605 = vld [vmem:[#allocation6 + $0x188] sm:$0xff]
    %v606 = vld [vmem:[#allocation6 + $0x190] sm:$0xff]
    %v607 = vld [vmem:[#allocation6 + $0x198] sm:$0xff]
    %v608 = vld [vmem:[#allocation6 + $0x1a0] sm:$0xff]
    %v609 = vld [vmem:[#allocation6 + $0x1a8] sm:$0xff]
    %v610 = vld [vmem:[#allocation6 + $0x1b0] sm:$0xff]
    %v611 = vld [vmem:[#allocation6 + $0x1b8] sm:$0xff]
    %v612 = vld [vmem:[#allocation6 + $0x1c0] sm:$0xff]
    %v613 = vld [vmem:[#allocation6 + $0x1c8] sm:$0xff]
    %v614 = vld [vmem:[#allocation6 + $0x1d0] sm:$0xff]
    %v615 = vld [vmem:[#allocation6 + $0x1d8] sm:$0xff]
    %v616 = vld [vmem:[#allocation6 + $0x1e0] sm:$0xff]
    %v617 = vld [vmem:[#allocation6 + $0x1e8] sm:$0xff]
    %v618 = vld [vmem:[#allocation6 + $0x1f0] sm:$0xff]
    %v619 = vld [vmem:[#allocation6 + $0x1f8] sm:$0xff]
    %v620 = vld [vmem:[#allocation6 + $0x200] sm:$0xff]
    %v621 = vld [vmem:[#allocation6 + $0x208] sm:$0xff]
    %v622 = vld [vmem:[#allocation6 + $0x210] sm:$0xff]
    %v623 = vld [vmem:[#allocation6 + $0x218] sm:$0xff]
    %v624 = vld [vmem:[#allocation6 + $0x220] sm:$0xff]
    %v625 = vld [vmem:[#allocation6 + $0x228] sm:$0xff]
    %v626 = vld [vmem:[#allocation6 + $0x230] sm:$0xff]
    %v627 = vld [vmem:[#allocation6 + $0x238] sm:$0xff]
    %v628 = vld [vmem:[#allocation6 + $0x240] sm:$0xff]
    %v629 = vld [vmem:[#allocation6 + $0x248] sm:$0xff]
    %v630 = vld [vmem:[#allocation6 + $0x250] sm:$0xff]
    %v631 = vld [vmem:[#allocation6 + $0x258] sm:$0xff]
    %v632 = vld [vmem:[#allocation6 + $0x260] sm:$0xff]
    %v633 = vld [vmem:[#allocation6 + $0x268] sm:$0xff]
    %v634 = vld [vmem:[#allocation6 + $0x270] sm:$0xff]
    %v635 = vld [vmem:[#allocation6 + $0x278] sm:$0xff]
    %v636 = vld [vmem:[#allocation6 + $0x280] sm:$0xff]
    %v637 = vld [vmem:[#allocation6 + $0x288] sm:$0xff]
    %v638 = vld [vmem:[#allocation6 + $0x290] sm:$0xff]
    %v639 = vld [vmem:[#allocation6 + $0x298] sm:$0xff]
    %v640 = vld [vmem:[#allocation6 + $0x2a0] sm:$0xff]
    %v641 = vld [vmem:[#allocation6 + $0x2a8] sm:$0xff]
    %v642 = vld [vmem:[#allocation6 + $0x2b0] sm:$0xff]
    %v643 = vld [vmem:[#allocation6 + $0x2b8] sm:$0xff]
    %v644 = vld [vmem:[#allocation6 + $0x2c0] sm:$0xff]
    %v645 = vld [vmem:[#allocation6 + $0x2c8] sm:$0xff]
    %v646 = vld [vmem:[#allocation6 + $0x2d0] sm:$0xff]
    %v647 = vld [vmem:[#allocation6 + $0x2d8] sm:$0xff]
    %v648 = vld [vmem:[#allocation6 + $0x2e0] sm:$0xff]
    %v649 = vld [vmem:[#allocation6 + $0x2e8] sm:$0xff]
    %v650 = vld [vmem:[#allocation6 + $0x2f0] sm:$0xff]
    %v651 = vld [vmem:[#allocation6 + $0x2f8] sm:$0xff]
    %v652 = vld [vmem:[#allocation6 + $0x300] sm:$0xff]
    %v653 = vld [vmem:[#allocation6 + $0x308] sm:$0xff]
    %v654 = vld [vmem:[#allocation6 + $0x310] sm:$0xff]
    %v655 = vld [vmem:[#allocation6 + $0x318] sm:$0xff]
    %v656 = vld [vmem:[#allocation6 + $0x320] sm:$0xff]
    %v657 = vld [vmem:[#allocation6 + $0x328] sm:$0xff]
    %v658 = vld [vmem:[#allocation6 + $0x330] sm:$0xff]
    %v659 = vld [vmem:[#allocation6 + $0x338] sm:$0xff]
    %v660 = vld [vmem:[#allocation6 + $0x340] sm:$0xff]
    %v661 = vld [vmem:[#allocation6 + $0x348] sm:$0xff]
    %v662 = vld [vmem:[#allocation6 + $0x350] sm:$0xff]
    %v663 = vld [vmem:[#allocation6 + $0x358] sm:$0xff]
    %v664 = vld [vmem:[#allocation6 + $0x360] sm:$0xff]
    %v665 = vld [vmem:[#allocation6 + $0x368] sm:$0xff]
    %v666 = vld [vmem:[#allocation6 + $0x370] sm:$0xff]
    %v667 = vld [vmem:[#allocation6 + $0x378] sm:$0xff]
    %v668 = vld [vmem:[#allocation6 + $0x380] sm:$0xff]
    %v669 = vld [vmem:[#allocation6 + $0x388] sm:$0xff]
    %v670 = vld [vmem:[#allocation6 + $0x390] sm:$0xff]
    %v671 = vld [vmem:[#allocation6 + $0x398] sm:$0xff]
    %v672 = vld [vmem:[#allocation6 + $0x3a0] sm:$0xff]
    %v673 = vld [vmem:[#allocation6 + $0x3a8] sm:$0xff]
    %v674 = vld [vmem:[#allocation6 + $0x3b0] sm:$0xff]
    %v675 = vld [vmem:[#allocation6 + $0x3b8] sm:$0xff]
    %v676 = vld [vmem:[#allocation6 + $0x3c0] sm:$0xff]
    %v677 = vld [vmem:[#allocation6 + $0x3c8] sm:$0xff]
    %v678 = vld [vmem:[#allocation6 + $0x3d0] sm:$0xff]
    %v679 = vld [vmem:[#allocation6 + $0x3d8] sm:$0xff]
    %v680 = vld [vmem:[#allocation6 + $0x3e0] sm:$0xff]
    %v681 = vld [vmem:[#allocation6 + $0x3e8] sm:$0xff]
    %v682 = vld [vmem:[#allocation6 + $0x3f0] sm:$0xff]
    %v683 = vld [vmem:[#allocation6 + $0x3f8] sm:$0xff]
    %v684 = vld [vmem:[#allocation6 + $0x400] sm:$0xff]
    %v685 = vld [vmem:[#allocation6 + $0x408] sm:$0xff]
    %v686 = vld [vmem:[#allocation6 + $0x410] sm:$0xff]
    %v687 = vld [vmem:[#allocation6 + $0x418] sm:$0xff]
    %v688 = vld [vmem:[#allocation6 + $0x420] sm:$0xff]
    %v689 = vld [vmem:[#allocation6 + $0x428] sm:$0xff]
    %v690 = vld [vmem:[#allocation6 + $0x430] sm:$0xff]
    %v691 = vld [vmem:[#allocation6 + $0x438] sm:$0xff]
    %v692 = vld [vmem:[#allocation6 + $0x440] sm:$0xff]
    %v693 = vld [vmem:[#allocation6 + $0x448] sm:$0xff]
    %v694 = vld [vmem:[#allocation6 + $0x450] sm:$0xff]
    %v695 = vld [vmem:[#allocation6 + $0x458] sm:$0xff]
    %v696 = vld [vmem:[#allocation6 + $0x460] sm:$0xff]
    %v697 = vld [vmem:[#allocation6 + $0x468] sm:$0xff]
    %v698 = vld [vmem:[#allocation6 + $0x470] sm:$0xff]
    %v699 = vld [vmem:[#allocation6 + $0x478] sm:$0xff]
    %v700 = vld [vmem:[#allocation6 + $0x480] sm:$0xff]
    %v701 = vld [vmem:[#allocation6 + $0x488] sm:$0xff]
    %v702 = vld [vmem:[#allocation6 + $0x490] sm:$0xff]
    %v703 = vld [vmem:[#allocation6 + $0x498] sm:$0xff]
    %v704 = vld [vmem:[#allocation6 + $0x4a0] sm:$0xff]
    %v705 = vld [vmem:[#allocation6 + $0x4a8] sm:$0xff]
    %v706 = vld [vmem:[#allocation6 + $0x4b0] sm:$0xff]
    %v707 = vld [vmem:[#allocation6 + $0x4b8] sm:$0xff]
    %v708 = vld [vmem:[#allocation6 + $0x4c0] sm:$0xff]
    %v709 = vld [vmem:[#allocation6 + $0x4c8] sm:$0xff]
    %v710 = vld [vmem:[#allocation6 + $0x4d0] sm:$0xff]
    %v711 = vld [vmem:[#allocation6 + $0x4d8] sm:$0xff]
    %v712 = vld [vmem:[#allocation6 + $0x4e0] sm:$0xff]
    %v713 = vld [vmem:[#allocation6 + $0x4e8] sm:$0xff]
    %v714 = vld [vmem:[#allocation6 + $0x4f0] sm:$0xff]
    %v715 = vld [vmem:[#allocation6 + $0x4f8] sm:$0xff]
    %v716 = vld [vmem:[#allocation6 + $0x500] sm:$0xff]
    %v717 = vld [vmem:[#allocation6 + $0x508] sm:$0xff]
    %v718 = vld [vmem:[#allocation6 + $0x510] sm:$0xff]
    %v719 = vld [vmem:[#allocation6 + $0x518] sm:$0xff]
    %v720 = vld [vmem:[#allocation6 + $0x520] sm:$0xff]
    %v721 = vld [vmem:[#allocation6 + $0x528] sm:$0xff]
    %v722 = vld [vmem:[#allocation6 + $0x530] sm:$0xff]
    %v723 = vld [vmem:[#allocation6 + $0x538] sm:$0xff]
    %v724 = vld [vmem:[#allocation6 + $0x540] sm:$0xff]
    %v725 = vld [vmem:[#allocation6 + $0x548] sm:$0xff]
    %v726 = vld [vmem:[#allocation6 + $0x550] sm:$0xff]
    %v727 = vld [vmem:[#allocation6 + $0x558] sm:$0xff]
    %v728 = vld [vmem:[#allocation6 + $0x560] sm:$0xff]
    %v729 = vld [vmem:[#allocation6 + $0x568] sm:$0xff]
    %v730 = vld [vmem:[#allocation6 + $0x570] sm:$0xff]
    %v731 = vld [vmem:[#allocation6 + $0x578] sm:$0xff]
    %v732 = vld [vmem:[#allocation6 + $0x580] sm:$0xff]
    %v733 = vld [vmem:[#allocation6 + $0x588] sm:$0xff]
    %v734 = vld [vmem:[#allocation6 + $0x590] sm:$0xff]
    %v735 = vld [vmem:[#allocation6 + $0x598] sm:$0xff]
    %v736 = vld [vmem:[#allocation6 + $0x5a0] sm:$0xff]
    %v737 = vld [vmem:[#allocation6 + $0x5a8] sm:$0xff]
    %v738 = vld [vmem:[#allocation6 + $0x5b0] sm:$0xff]
    %v739 = vld [vmem:[#allocation6 + $0x5b8] sm:$0xff]
    %v740 = vld [vmem:[#allocation6 + $0x5c0] sm:$0xff]
    %v741 = vld [vmem:[#allocation6 + $0x5c8] sm:$0xff]
    %v742 = vld [vmem:[#allocation6 + $0x5d0] sm:$0xff]
    %v743 = vld [vmem:[#allocation6 + $0x5d8] sm:$0xff]
    %v744 = vld [vmem:[#allocation6 + $0x5e0] sm:$0xff]
    %v745 = vld [vmem:[#allocation6 + $0x5e8] sm:$0xff]
    %v746 = vld [vmem:[#allocation6 + $0x5f0] sm:$0xff]
    %v747 = vld [vmem:[#allocation6 + $0x5f8] sm:$0xff]
    %v748 = vld [vmem:[%s5] sm:$0x3f]
    %v749 = vld [vmem:[%s1] sm:$0xff]
    %vm750 = vcmp.gt.f32.partialorder %v749, 0.0
    %s751 = scalar_lea.vmem %s1, 56
    %v752 = vld [vmem:[%s751] sm:$0xff]
    %vm753 = vcmp.gt.f32.partialorder %v752, 0.0
    %v755 = vlaneseq
    %v756 = vshrl.u32 %v755, 7
    %v757 = vsub.s32 0, %v756
    %v758 = vrot.slane %v748, %v757
    %v759 = vlaneseq
    %v760 = vshrl.u32 %v759, 7
    %v761 = vsub.s32 1, %v760
    %v762 = vrot.slane %v748, %v761
    %v763 = vlaneseq
    %v764 = vshrl.u32 %v763, 7
    %v765 = vsub.s32 2, %v764
    %v766 = vrot.slane %v748, %v765
    %v767 = vlaneseq
    %v768 = vshrl.u32 %v767, 7
    %v769 = vsub.s32 3, %v768
    %v770 = vrot.slane %v748, %v769
    %v771 = vlaneseq
    %v772 = vshrl.u32 %v771, 7
    %v773 = vsub.s32 4, %v772
    %v774 = vrot.slane %v748, %v773
    %v775 = vlaneseq
    %v776 = vshrl.u32 %v775, 7
    %v777 = vsub.s32 5, %v776
    %v778 = vrot.slane %v748, %v777
    %785 = vmatprep.subr.mxu0 %v557
    %786 = vmatpush1.msra.mxu0 %v556
    %787 = vmatprep.subr.mxu0 %v563
    %788 = vmatpush1.msra.mxu0 %v562
    %789 = vmatprep.subr.mxu0 %v569
    %790 = vmatpush1.msra.mxu0 %v568
    %791 = vmatprep.subr.mxu0 %v575
    %792 = vmatpush1.msra.mxu0 %v574
    %793 = vmatprep.subr.mxu0 %v581
    %794 = vmatpush1.msra.mxu0 %v580
    %795 = vmatprep.subr.mxu0 %v587
    %796 = vmatpush1.msra.mxu0 %v586
    %797 = vmatprep.subr.mxu0 %v593
    %798 = vmatpush1.msra.mxu0 %v592
    %799 = vmatprep.subr.mxu0 %v599
    %800 = vmatpush1.msra.mxu0 %v598
    %801 = vmatprep.subr.mxu0 %v605
    %802 = vmatpush1.msra.mxu0 %v604
    %803 = vmatprep.subr.mxu0 %v611
    %804 = vmatpush1.msra.mxu0 %v610
    %805 = vmatprep.subr.mxu0 %v617
    %806 = vmatpush1.msra.mxu0 %v616
    %807 = vmatprep.subr.mxu0 %v623
    %808 = vmatpush1.msra.mxu0 %v622
    %809 = vmatprep.subr.mxu0 %v629
    %810 = vmatpush1.msra.mxu0 %v628
    %811 = vmatprep.subr.mxu0 %v635
    %812 = vmatpush1.msra.mxu0 %v634
    %813 = vmatprep.subr.mxu0 %v641
    %814 = vmatpush1.msra.mxu0 %v640
    %815 = vmatprep.subr.mxu0 %v647
    %816 = vmatpush1.msra.mxu0 %v646
    %817 = vmatprep.subr.mxu0 %v653
    %818 = vmatpush1.msra.mxu0 %v652
    %819 = vmatprep.subr.mxu0 %v659
    %820 = vmatpush1.msra.mxu0 %v658
    %821 = vmatprep.subr.mxu0 %v665
    %822 = vmatpush1.msra.mxu0 %v664
    %823 = vmatprep.subr.mxu0 %v671
    %824 = vmatpush1.msra.mxu0 %v670
    %825 = vmatprep.subr.mxu0 %v677
    %826 = vmatpush1.msra.mxu0 %v676
    %827 = vmatprep.subr.mxu0 %v683
    %828 = vmatpush1.msra.mxu0 %v682
    %829 = vmatprep.subr.mxu0 %v689
    %830 = vmatpush1.msra.mxu0 %v688
    %831 = vmatprep.subr.mxu0 %v695
    %832 = vmatpush1.msra.mxu0 %v694
    %833 = vmatprep.subr.mxu0 %v701
    %834 = vmatpush1.msra.mxu0 %v700
    %835 = vmatprep.subr.mxu0 %v707
    %836 = vmatpush1.msra.mxu0 %v706
    %837 = vmatprep.subr.mxu0 %v713
    %838 = vmatpush1.msra.mxu0 %v712
    %839 = vmatprep.subr.mxu0 %v719
    %840 = vmatpush1.msra.mxu0 %v718
    %841 = vmatprep.subr.mxu0 %v725
    %842 = vmatpush1.msra.mxu0 %v724
    %843 = vmatprep.subr.mxu0 %v731
    %844 = vmatpush1.msra.mxu0 %v730
    %845 = vmatprep.subr.mxu0 %v737
    %846 = vmatpush1.msra.mxu0 %v736
    %847 = vmatprep.subr.mxu0 %v743
    %848 = vmatpush1.msra.mxu0 %v742
    %849 = vmatprep.mubr.f32.mxu0 0.0
    %850 = vmatmul.mubr.f32.gmra.mrb[0].mxu0 0.0
    %v851 = vpop.f32.mrb[0].mxu0
    %v852 = vadd.f32 %v758, %v851
    %v853 = vpop.f32.mrb[0].mxu0
    %v854 = vadd.f32 %v762, %v853
    %855 = vdwg.mxu0
    %856 = vmatprep.subr.mxu0 %v559
    %857 = vmatpush1.msra.mxu0 %v558
    %858 = vmatprep.subr.mxu0 %v565
    %859 = vmatpush1.msra.mxu0 %v564
    %860 = vmatprep.subr.mxu0 %v571
    %861 = vmatpush1.msra.mxu0 %v570
    %862 = vmatprep.subr.mxu0 %v577
    %863 = vmatpush1.msra.mxu0 %v576
    %864 = vmatprep.subr.mxu0 %v583
    %865 = vmatpush1.msra.mxu0 %v582
    %866 = vmatprep.subr.mxu0 %v589
    %867 = vmatpush1.msra.mxu0 %v588
    %868 = vmatprep.subr.mxu0 %v595
    %869 = vmatpush1.msra.mxu0 %v594
    %870 = vmatprep.subr.mxu0 %v601
    %871 = vmatpush1.msra.mxu0 %v600
    %872 = vmatprep.subr.mxu0 %v607
    %873 = vmatpush1.msra.mxu0 %v606
    %874 = vmatprep.subr.mxu0 %v613
    %875 = vmatpush1.msra.mxu0 %v612
    %876 = vmatprep.subr.mxu0 %v619
    %877 = vmatpush1.msra.mxu0 %v618
    %878 = vmatprep.subr.mxu0 %v625
    %879 = vmatpush1.msra.mxu0 %v624
    %880 = vmatprep.subr.mxu0 %v631
    %881 = vmatpush1.msra.mxu0 %v630
    %882 = vmatprep.subr.mxu0 %v637
    %883 = vmatpush1.msra.mxu0 %v636
    %884 = vmatprep.subr.mxu0 %v643
    %885 = vmatpush1.msra.mxu0 %v642
    %886 = vmatprep.subr.mxu0 %v649
    %887 = vmatpush1.msra.mxu0 %v648
    %888 = vmatprep.subr.mxu0 %v655
    %889 = vmatpush1.msra.mxu0 %v654
    %890 = vmatprep.subr.mxu0 %v661
    %891 = vmatpush1.msra.mxu0 %v660
    %892 = vmatprep.subr.mxu0 %v667
    %893 = vmatpush1.msra.mxu0 %v666
    %894 = vmatprep.subr.mxu0 %v673
    %895 = vmatpush1.msra.mxu0 %v672
    %896 = vmatprep.subr.mxu0 %v679
    %897 = vmatpush1.msra.mxu0 %v678
    %898 = vmatprep.subr.mxu0 %v685
    %899 = vmatpush1.msra.mxu0 %v684
    %900 = vmatprep.subr.mxu0 %v691
    %901 = vmatpush1.msra.mxu0 %v690
    %902 = vmatprep.subr.mxu0 %v697
    %903 = vmatpush1.msra.mxu0 %v696
    %904 = vmatprep.subr.mxu0 %v703
    %905 = vmatpush1.msra.mxu0 %v702
    %906 = vmatprep.subr.mxu0 %v709
    %907 = vmatpush1.msra.mxu0 %v708
    %908 = vmatprep.subr.mxu0 %v715
    %909 = vmatpush1.msra.mxu0 %v714
    %910 = vmatprep.subr.mxu0 %v721
    %911 = vmatpush1.msra.mxu0 %v720
    %912 = vmatprep.subr.mxu0 %v727
    %913 = vmatpush1.msra.mxu0 %v726
    %914 = vmatprep.subr.mxu0 %v733
    %915 = vmatpush1.msra.mxu0 %v732
    %916 = vmatprep.subr.mxu0 %v739
    %917 = vmatpush1.msra.mxu0 %v738
    %918 = vmatprep.subr.mxu0 %v745
    %919 = vmatpush1.msra.mxu0 %v744
    %920 = vmatprep.mubr.f32.mxu0 0.0
    %921 = vmatmul.mubr.f32.gmra.mrb[0].mxu0 0.0
    %v922 = vpop.f32.mrb[0].mxu0
    %v923 = vadd.f32 %v766, %v922
    %v924 = vpop.f32.mrb[0].mxu0
    %v925 = vadd.f32 %v770, %v924
    %926 = vdwg.mxu0
    %927 = vmatprep.subr.mxu0 %v561
    %928 = vmatpush1.msra.mxu0 %v560
    %929 = vmatprep.subr.mxu0 %v567
    %930 = vmatpush1.msra.mxu0 %v566
    %931 = vmatprep.subr.mxu0 %v573
    %932 = vmatpush1.msra.mxu0 %v572
    %933 = vmatprep.subr.mxu0 %v579
    %934 = vmatpush1.msra.mxu0 %v578
    %935 = vmatprep.subr.mxu0 %v585
    %936 = vmatpush1.msra.mxu0 %v584
    %937 = vmatprep.subr.mxu0 %v591
    %938 = vmatpush1.msra.mxu0 %v590
    %939 = vmatprep.subr.mxu0 %v597
    %940 = vmatpush1.msra.mxu0 %v596
    %941 = vmatprep.subr.mxu0 %v603
    %942 = vmatpush1.msra.mxu0 %v602
    %943 = vmatprep.subr.mxu0 %v609
    %944 = vmatpush1.msra.mxu0 %v608
    %945 = vmatprep.subr.mxu0 %v615
    %946 = vmatpush1.msra.mxu0 %v614
    %947 = vmatprep.subr.mxu0 %v621
    %948 = vmatpush1.msra.mxu0 %v620
    %949 = vmatprep.subr.mxu0 %v627
    %950 = vmatpush1.msra.mxu0 %v626
    %951 = vmatprep.subr.mxu0 %v633
    %952 = vmatpush1.msra.mxu0 %v632
    %953 = vmatprep.subr.mxu0 %v639
    %954 = vmatpush1.msra.mxu0 %v638
    %955 = vmatprep.subr.mxu0 %v645
    %956 = vmatpush1.msra.mxu0 %v644
    %957 = vmatprep.subr.mxu0 %v651
    %958 = vmatpush1.msra.mxu0 %v650
    %959 = vmatprep.subr.mxu0 %v657
    %960 = vmatpush1.msra.mxu0 %v656
    %961 = vmatprep.subr.mxu0 %v663
    %962 = vmatpush1.msra.mxu0 %v662
    %963 = vmatprep.subr.mxu0 %v669
    %964 = vmatpush1.msra.mxu0 %v668
    %965 = vmatprep.subr.mxu0 %v675
    %966 = vmatpush1.msra.mxu0 %v674
    %967 = vmatprep.subr.mxu0 %v681
    %968 = vmatpush1.msra.mxu0 %v680
    %969 = vmatprep.subr.mxu0 %v687
    %970 = vmatpush1.msra.mxu0 %v686
    %971 = vmatprep.subr.mxu0 %v693
    %972 = vmatpush1.msra.mxu0 %v692
    %973 = vmatprep.subr.mxu0 %v699
    %974 = vmatpush1.msra.mxu0 %v698
    %975 = vmatprep.subr.mxu0 %v705
    %976 = vmatpush1.msra.mxu0 %v704
    %977 = vmatprep.subr.mxu0 %v711
    %978 = vmatpush1.msra.mxu0 %v710
    %979 = vmatprep.subr.mxu0 %v717
    %980 = vmatpush1.msra.mxu0 %v716
    %981 = vmatprep.subr.mxu0 %v723
    %982 = vmatpush1.msra.mxu0 %v722
    %983 = vmatprep.subr.mxu0 %v729
    %984 = vmatpush1.msra.mxu0 %v728
    %985 = vmatprep.subr.mxu0 %v735
    %986 = vmatpush1.msra.mxu0 %v734
    %987 = vmatprep.subr.mxu0 %v741
    %988 = vmatpush1.msra.mxu0 %v740
    %989 = vmatprep.subr.mxu0 %v747
    %990 = vmatpush1.msra.mxu0 %v746
    %991 = vmatprep.mubr.f32.mxu0 0.0
    %992 = vmatmul.mubr.f32.gmra.mrb[0].mxu0 0.0
    %v993 = vpop.f32.mrb[0].mxu0
    %v994 = vadd.f32 %v774, %v993
    %v995 = vpop.f32.mrb[0].mxu0
    %v996 = vadd.f32 %v778, %v995
    %997 = vdwg.mxu0
    %v998 = vld [vmem:[#allocation2] sm:$0xff]
    %v999 = vld [vmem:[#allocation2 + $0x8] sm:$0xff]
    %v1000 = vld [vmem:[#allocation2 + $0x10] sm:$0xff]
    %s1001 = scalar_lea.vmem [#allocation2], 336
    %v1002 = vld [vmem:[%s1001 + $0x18] sm:$0xff]
    %v1003 = vld [vmem:[%s1001 + $0x20] sm:$0xff]
    %v1004 = vld [vmem:[%s1001 + $0x28] sm:$0xff]
    %v1005 = vadd.f32 %v998, %v852
    %v1006 = vxor.u32 %v1005, 2147483648
    %v1007 = vmul.f32 %v1006, 1.442695
    %v1008 = vpow.pop %v1007
    %v1009 = vadd.f32 %v1008, 1.0
    %v1010 = vrcp.pop %v1009
    %v1011 = vmul.f32 1.0, %v1010
    %v1012 = vadd.f32 %v999, %v854
    %v1013 = vxor.u32 %v1012, 2147483648
    %v1014 = vmul.f32 %v1013, 1.442695
    %v1015 = vpow.pop %v1014
    %v1016 = vadd.f32 %v1015, 1.0
    %v1017 = vrcp.pop %v1016
    %v1018 = vmul.f32 1.0, %v1017
    %v1019 = vmul.f32 %v1011, %v923
    %v1020 = vadd.f32 %v1000, %v1019
    %v1021 = vtanh.pop %v1020
    %v1022 = vsub.f32 1.0, %v1018
    %v1023 = vmul.f32 %v1022, %v1021
    %v1024 = vmul.f32 %v1018, 0.0
    %v1025 = vadd.f32 %v1023, %v1024
    %v1026 = vadd.f32 %v1002, %v925
    %v1027 = vxor.u32 %v1026, 2147483648
    %v1028 = vmul.f32 %v1027, 1.442695
    %v1029 = vpow.pop %v1028
    %v1030 = vadd.f32 %v1029, 1.0
    %v1031 = vrcp.pop %v1030
    %v1032 = vmul.f32 1.0, %v1031
    %v1033 = vadd.f32 %v1003, %v994
    %v1034 = vxor.u32 %v1033, 2147483648
    %v1035 = vmul.f32 %v1034, 1.442695
    %v1036 = vpow.pop %v1035
    %v1037 = vadd.f32 %v1036, 1.0
    %v1038 = vrcp.pop %v1037
    %v1039 = vmul.f32 1.0, %v1038
    %v1040 = vmul.f32 %v1032, %v996
    %v1041 = vadd.f32 %v1004, %v1040
    %v1042 = vtanh.pop %v1041
    %v1043 = vsub.f32 1.0, %v1039
    %v1044 = vmul.f32 %v1043, %v1042
    %v1045 = vmul.f32 %v1039, 0.0
    %v1046 = vadd.f32 %v1044, %v1045
    %v1047 = vsel %vm750, 1, 0
    %1048 = vset.pattern.permute.xlu0 0
    %1049 = vperm.xlu0 %1048, %v1047
    %v1050 = vpop.permute.xlu0 %1049
    %vm1051 = vcmp.eq.s32.totalorder %v1050, 1
    %v1052 = vsel %vm1051, %v1025, 0.0
    %1053 = vst [vmem:[#allocation9] sm:$0xff] %v1052
    %v1054 = vsel %vm753, 1, 0
    %1055 = vset.pattern.permute.xlu0 0
    %1056 = vperm.xlu0 %1055, %v1054
    %v1057 = vpop.permute.xlu0 %1056
    %vm1058 = vcmp.eq.s32.totalorder %v1057, 1
    %v1059 = vsel %vm1058, %v1046, 0.0
    %s1060 = scalar_lea.vmem [#allocation9], 112
    %1061 = vst [vmem:[%s1060 + $0x8] sm:$0xff] %v1059
    %s1062 = scalar_lea.vmem %s1, 8
    %v1063 = vld [vmem:[%s1062] sm:$0xff]
    %vm1064 = vcmp.gt.f32.partialorder %v1063, 0.0
    %s1065 = scalar_lea.vmem %s1, 48
    %v1066 = vld [vmem:[%s1065] sm:$0xff]
    %vm1067 = vcmp.gt.f32.partialorder %v1066, 0.0
    %1068 = vmatprep.subr.mxu0 %v557
    %1069 = vmatpush1.msra.mxu0 %v556
    %1070 = vmatprep.subr.mxu0 %v563
    %1071 = vmatpush1.msra.mxu0 %v562
    %1072 = vmatprep.subr.mxu0 %v569
    %1073 = vmatpush1.msra.mxu0 %v568
    %1074 = vmatprep.subr.mxu0 %v575
    %1075 = vmatpush1.msra.mxu0 %v574
    %1076 = vmatprep.subr.mxu0 %v581
    %1077 = vmatpush1.msra.mxu0 %v580
    %1078 = vmatprep.subr.mxu0 %v587
    %1079 = vmatpush1.msra.mxu0 %v586
    %1080 = vmatprep.subr.mxu0 %v593
    %1081 = vmatpush1.msra.mxu0 %v592
    %1082 = vmatprep.subr.mxu0 %v599
    %1083 = vmatpush1.msra.mxu0 %v598
    %1084 = vmatprep.subr.mxu0 %v605
    %1085 = vmatpush1.msra.mxu0 %v604
    %1086 = vmatprep.subr.mxu0 %v611
    %1087 = vmatpush1.msra.mxu0 %v610
    %1088 = vmatprep.subr.mxu0 %v617
    %1089 = vmatpush1.msra.mxu0 %v616
    %1090 = vmatprep.subr.mxu0 %v623
    %1091 = vmatpush1.msra.mxu0 %v622
    %1092 = vmatprep.subr.mxu0 %v629
    %1093 = vmatpush1.msra.mxu0 %v628
    %1094 = vmatprep.subr.mxu0 %v635
    %1095 = vmatpush1.msra.mxu0 %v634
    %1096 = vmatprep.subr.mxu0 %v641
    %1097 = vmatpush1.msra.mxu0 %v640
    %1098 = vmatprep.subr.mxu0 %v647
    %1099 = vmatpush1.msra.mxu0 %v646
    %1100 = vmatprep.subr.mxu0 %v653
    %1101 = vmatpush1.msra.mxu0 %v652
    %1102 = vmatprep.subr.mxu0 %v659
    %1103 = vmatpush1.msra.mxu0 %v658
    %1104 = vmatprep.subr.mxu0 %v665
    %1105 = vmatpush1.msra.mxu0 %v664
    %1106 = vmatprep.subr.mxu0 %v671
    %1107 = vmatpush1.msra.mxu0 %v670
    %1108 = vmatprep.subr.mxu0 %v677
    %1109 = vmatpush1.msra.mxu0 %v676
    %1110 = vmatprep.subr.mxu0 %v683
    %1111 = vmatpush1.msra.mxu0 %v682
    %1112 = vmatprep.subr.mxu0 %v689
    %1113 = vmatpush1.msra.mxu0 %v688
    %1114 = vmatprep.subr.mxu0 %v695
    %1115 = vmatpush1.msra.mxu0 %v694
    %1116 = vmatprep.subr.mxu0 %v701
    %1117 = vmatpush1.msra.mxu0 %v700
    %1118 = vmatprep.subr.mxu0 %v707
    %1119 = vmatpush1.msra.mxu0 %v706
    %1120 = vmatprep.subr.mxu0 %v713
    %1121 = vmatpush1.msra.mxu0 %v712
    %1122 = vmatprep.subr.mxu0 %v719
    %1123 = vmatpush1.msra.mxu0 %v718
    %1124 = vmatprep.subr.mxu0 %v725
    %1125 = vmatpush1.msra.mxu0 %v724
    %1126 = vmatprep.subr.mxu0 %v731
    %1127 = vmatpush1.msra.mxu0 %v730
    %1128 = vmatprep.subr.mxu0 %v737
    %1129 = vmatpush1.msra.mxu0 %v736
    %1130 = vmatprep.subr.mxu0 %v743
    %1131 = vmatpush1.msra.mxu0 %v742
    %1132 = vmatprep.mubr.f32.mxu0 %v1059
    %1133 = vmatmul.mubr.f32.gmra.mrb[0].mxu0 %v1052
    %v1134 = vpop.f32.mrb[0].mxu0
    %v1135 = vadd.f32 %v758, %v1134
    %v1136 = vpop.f32.mrb[0].mxu0
    %v1137 = vadd.f32 %v762, %v1136
    %1138 = vdwg.mxu0
    %1139 = vmatprep.subr.mxu0 %v559
    %1140 = vmatpush1.msra.mxu0 %v558
    %1141 = vmatprep.subr.mxu0 %v565
    %1142 = vmatpush1.msra.mxu0 %v564
    %1143 = vmatprep.subr.mxu0 %v571
    %1144 = vmatpush1.msra.mxu0 %v570
    %1145 = vmatprep.subr.mxu0 %v577
    %1146 = vmatpush1.msra.mxu0 %v576
    %1147 = vmatprep.subr.mxu0 %v583
    %1148 = vmatpush1.msra.mxu0 %v582
    %1149 = vmatprep.subr.mxu0 %v589
    %1150 = vmatpush1.msra.mxu0 %v588
    %1151 = vmatprep.subr.mxu0 %v595
    %1152 = vmatpush1.msra.mxu0 %v594
    %1153 = vmatprep.subr.mxu0 %v601
    %1154 = vmatpush1.msra.mxu0 %v600
    %1155 = vmatprep.subr.mxu0 %v607
    %1156 = vmatpush1.msra.mxu0 %v606
    %1157 = vmatprep.subr.mxu0 %v613
    %1158 = vmatpush1.msra.mxu0 %v612
    %1159 = vmatprep.subr.mxu0 %v619
    %1160 = vmatpush1.msra.mxu0 %v618
    %1161 = vmatprep.subr.mxu0 %v625
    %1162 = vmatpush1.msra.mxu0 %v624
    %1163 = vmatprep.subr.mxu0 %v631
    %1164 = vmatpush1.msra.mxu0 %v630
    %1165 = vmatprep.subr.mxu0 %v637
    %1166 = vmatpush1.msra.mxu0 %v636
    %1167 = vmatprep.subr.mxu0 %v643
    %1168 = vmatpush1.msra.mxu0 %v642
    %1169 = vmatprep.subr.mxu0 %v649
    %1170 = vmatpush1.msra.mxu0 %v648
    %1171 = vmatprep.subr.mxu0 %v655
    %1172 = vmatpush1.msra.mxu0 %v654
    %1173 = vmatprep.subr.mxu0 %v661
    %1174 = vmatpush1.msra.mxu0 %v660
    %1175 = vmatprep.subr.mxu0 %v667
    %1176 = vmatpush1.msra.mxu0 %v666
    %1177 = vmatprep.subr.mxu0 %v673
    %1178 = vmatpush1.msra.mxu0 %v672
    %1179 = vmatprep.subr.mxu0 %v679
    %1180 = vmatpush1.msra.mxu0 %v678
    %1181 = vmatprep.subr.mxu0 %v685
    %1182 = vmatpush1.msra.mxu0 %v684
    %1183 = vmatprep.subr.mxu0 %v691
    %1184 = vmatpush1.msra.mxu0 %v690
    %1185 = vmatprep.subr.mxu0 %v697
    %1186 = vmatpush1.msra.mxu0 %v696
    %1187 = vmatprep.subr.mxu0 %v703
    %1188 = vmatpush1.msra.mxu0 %v702
    %1189 = vmatprep.subr.mxu0 %v709
    %1190 = vmatpush1.msra.mxu0 %v708
    %1191 = vmatprep.subr.mxu0 %v715
    %1192 = vmatpush1.msra.mxu0 %v714
    %1193 = vmatprep.subr.mxu0 %v721
    %1194 = vmatpush1.msra.mxu0 %v720
    %1195 = vmatprep.subr.mxu0 %v727
    %1196 = vmatpush1.msra.mxu0 %v726
    %1197 = vmatprep.subr.mxu0 %v733
    %1198 = vmatpush1.msra.mxu0 %v732
    %1199 = vmatprep.subr.mxu0 %v739
    %1200 = vmatpush1.msra.mxu0 %v738
    %1201 = vmatprep.subr.mxu0 %v745
    %1202 = vmatpush1.msra.mxu0 %v744
    %1203 = vmatprep.mubr.f32.mxu0 %v1059
    %1204 = vmatmul.mubr.f32.gmra.mrb[0].mxu0 %v1052
    %v1205 = vpop.f32.mrb[0].mxu0
    %v1206 = vadd.f32 %v766, %v1205
    %v1207 = vpop.f32.mrb[0].mxu0
    %v1208 = vadd.f32 %v770, %v1207
    %1209 = vdwg.mxu0
    %1210 = vmatprep.subr.mxu0 %v561
    %1211 = vmatpush1.msra.mxu0 %v560
    %1212 = vmatprep.subr.mxu0 %v567
    %1213 = vmatpush1.msra.mxu0 %v566
    %1214 = vmatprep.subr.mxu0 %v573
    %1215 = vmatpush1.msra.mxu0 %v572
    %1216 = vmatprep.subr.mxu0 %v579
    %1217 = vmatpush1.msra.mxu0 %v578
    %1218 = vmatprep.subr.mxu0 %v585
    %1219 = vmatpush1.msra.mxu0 %v584
    %1220 = vmatprep.subr.mxu0 %v591
    %1221 = vmatpush1.msra.mxu0 %v590
    %1222 = vmatprep.subr.mxu0 %v597
    %1223 = vmatpush1.msra.mxu0 %v596
    %1224 = vmatprep.subr.mxu0 %v603
    %1225 = vmatpush1.msra.mxu0 %v602
    %1226 = vmatprep.subr.mxu0 %v609
    %1227 = vmatpush1.msra.mxu0 %v608
    %1228 = vmatprep.subr.mxu0 %v615
    %1229 = vmatpush1.msra.mxu0 %v614
    %1230 = vmatprep.subr.mxu0 %v621
    %1231 = vmatpush1.msra.mxu0 %v620
    %1232 = vmatprep.subr.mxu0 %v627
    %1233 = vmatpush1.msra.mxu0 %v626
    %1234 = vmatprep.subr.mxu0 %v633
    %1235 = vmatpush1.msra.mxu0 %v632
    %1236 = vmatprep.subr.mxu0 %v639
    %1237 = vmatpush1.msra.mxu0 %v638
    %1238 = vmatprep.subr.mxu0 %v645
    %1239 = vmatpush1.msra.mxu0 %v644
    %1240 = vmatprep.subr.mxu0 %v651
    %1241 = vmatpush1.msra.mxu0 %v650
    %1242 = vmatprep.subr.mxu0 %v657
    %1243 = vmatpush1.msra.mxu0 %v656
    %1244 = vmatprep.subr.mxu0 %v663
    %1245 = vmatpush1.msra.mxu0 %v662
    %1246 = vmatprep.subr.mxu0 %v669
    %1247 = vmatpush1.msra.mxu0 %v668
    %1248 = vmatprep.subr.mxu0 %v675
    %1249 = vmatpush1.msra.mxu0 %v674
    %1250 = vmatprep.subr.mxu0 %v681
    %1251 = vmatpush1.msra.mxu0 %v680
    %1252 = vmatprep.subr.mxu0 %v687
    %1253 = vmatpush1.msra.mxu0 %v686
    %1254 = vmatprep.subr.mxu0 %v693
    %1255 = vmatpush1.msra.mxu0 %v692
    %1256 = vmatprep.subr.mxu0 %v699
    %1257 = vmatpush1.msra.mxu0 %v698
    %1258 = vmatprep.subr.mxu0 %v705
    %1259 = vmatpush1.msra.mxu0 %v704
    %1260 = vmatprep.subr.mxu0 %v711
    %1261 = vmatpush1.msra.mxu0 %v710
    %1262 = vmatprep.subr.mxu0 %v717
    %1263 = vmatpush1.msra.mxu0 %v716
    %1264 = vmatprep.subr.mxu0 %v723
    %1265 = vmatpush1.msra.mxu0 %v722
    %1266 = vmatprep.subr.mxu0 %v729
    %1267 = vmatpush1.msra.mxu0 %v728
    %1268 = vmatprep.subr.mxu0 %v735
    %1269 = vmatpush1.msra.mxu0 %v734
    %1270 = vmatprep.subr.mxu0 %v741
    %1271 = vmatpush1.msra.mxu0 %v740
    %1272 = vmatprep.subr.mxu0 %v747
    %1273 = vmatpush1.msra.mxu0 %v746
    %1274 = vmatprep.mubr.f32.mxu0 %v1059
    %1275 = vmatmul.mubr.f32.gmra.mrb[0].mxu0 %v1052
    %v1276 = vpop.f32.mrb[0].mxu0
    %v1277 = vadd.f32 %v774, %v1276
    %v1278 = vpop.f32.mrb[0].mxu0
    %v1279 = vadd.f32 %v778, %v1278
    %1280 = vdwg.mxu0
    %s1281 = scalar_lea.vmem [#allocation2], 48
    %v1282 = vld [vmem:[%s1281] sm:$0xff]
    %v1283 = vld [vmem:[%s1281 + $0x8] sm:$0xff]
    %v1284 = vld [vmem:[%s1281 + $0x10] sm:$0xff]
    %s1285 = scalar_lea.vmem [#allocation2], 288
    %v1286 = vld [vmem:[%s1285 + $0x18] sm:$0xff]
    %v1287 = vld [vmem:[%s1285 + $0x20] sm:$0xff]
    %v1288 = vld [vmem:[%s1285 + $0x28] sm:$0xff]
    %v1289 = vadd.f32 %v1282, %v1135
    %v1290 = vxor.u32 %v1289, 2147483648
    %v1291 = vmul.f32 %v1290, 1.442695
    %v1292 = vpow.pop %v1291
    %v1293 = vadd.f32 %v1292, 1.0
    %v1294 = vrcp.pop %v1293
    %v1295 = vmul.f32 1.0, %v1294
    %v1296 = vadd.f32 %v1283, %v1137
    %v1297 = vxor.u32 %v1296, 2147483648
    %v1298 = vmul.f32 %v1297, 1.442695
    %v1299 = vpow.pop %v1298
    %v1300 = vadd.f32 %v1299, 1.0
    %v1301 = vrcp.pop %v1300
    %v1302 = vmul.f32 1.0, %v1301
    %v1303 = vmul.f32 %v1295, %v1206
    %v1304 = vadd.f32 %v1284, %v1303
    %v1305 = vtanh.pop %v1304
    %v1306 = vsub.f32 1.0, %v1302
    %v1307 = vmul.f32 %v1306, %v1305
    %v1308 = vmul.f32 %v1302, %v1052
    %v1309 = vadd.f32 %v1307, %v1308
    %v1310 = vadd.f32 %v1286, %v1208
    %v1311 = vxor.u32 %v1310, 2147483648
    %v1312 = vmul.f32 %v1311, 1.442695
    %v1313 = vpow.pop %v1312
    %v1314 = vadd.f32 %v1313, 1.0
    %v1315 = vrcp.pop %v1314
    %v1316 = vmul.f32 1.0, %v1315
    %v1317 = vadd.f32 %v1287, %v1277
    %v1318 = vxor.u32 %v1317, 2147483648
    %v1319 = vmul.f32 %v1318, 1.442695
    %v1320 = vpow.pop %v1319
    %v1321 = vadd.f32 %v1320, 1.0
    %v1322 = vrcp.pop %v1321
    %v1323 = vmul.f32 1.0, %v1322
    %v1324 = vmul.f32 %v1316, %v1279
    %v1325 = vadd.f32 %v1288, %v1324
    %v1326 = vtanh.pop %v1325
    %v1327 = vsub.f32 1.0, %v1323
    %v1328 = vmul.f32 %v1327, %v1326
    %v1329 = vmul.f32 %v1323, %v1059
    %v1330 = vadd.f32 %v1328, %v1329
    %v1331 = vsel %vm1064, 1, 0
    %1332 = vset.pattern.permute.xlu0 0
    %1333 = vperm.xlu0 %1332, %v1331
    %v1334 = vpop.permute.xlu0 %1333
    %vm1335 = vcmp.eq.s32.totalorder %v1334, 1
    %v1336 = vsel %vm1335, %v1309, 0.0
    %s1337 = scalar_lea.vmem [#allocation9], 16
    %1338 = vst [vmem:[%s1337] sm:$0xff] %v1336
    %v1339 = vsel %vm1067, 1, 0
    %1340 = vset.pattern.permute.xlu0 0
    %1341 = vperm.xlu0 %1340, %v1339
    %v1342 = vpop.permute.xlu0 %1341
    %vm1343 = vcmp.eq.s32.totalorder %v1342, 1
    %v1344 = vsel %vm1343, %v1330, 0.0
    %s1345 = scalar_lea.vmem [#allocation9], 96
    %1346 = vst [vmem:[%s1345 + $0x8] sm:$0xff] %v1344
    %v1347 = vsel %vm1335, %v1309, %v1052
    %v1348 = vsel %vm1343, %v1330, %v1059
    %s1349 = scalar_lea.vmem %s1, 16
    %v1350 = vld [vmem:[%s1349] sm:$0xff]
    %vm1351 = vcmp.gt.f32.partialorder %v1350, 0.0
    %s1352 = scalar_lea.vmem %s1, 40
    %v1353 = vld [vmem:[%s1352] sm:$0xff]
    %vm1354 = vcmp.gt.f32.partialorder %v1353, 0.0
    %1355 = vmatprep.subr.mxu0 %v557
    %1356 = vmatpush1.msra.mxu0 %v556
    %1357 = vmatprep.subr.mxu0 %v563
    %1358 = vmatpush1.msra.mxu0 %v562
    %1359 = vmatprep.subr.mxu0 %v569
    %1360 = vmatpush1.msra.mxu0 %v568
    %1361 = vmatprep.subr.mxu0 %v575
    %1362 = vmatpush1.msra.mxu0 %v574
    %1363 = vmatprep.subr.mxu0 %v581
    %1364 = vmatpush1.msra.mxu0 %v580
    %1365 = vmatprep.subr.mxu0 %v587
    %1366 = vmatpush1.msra.mxu0 %v586
    %1367 = vmatprep.subr.mxu0 %v593
    %1368 = vmatpush1.msra.mxu0 %v592
    %1369 = vmatprep.subr.mxu0 %v599
    %1370 = vmatpush1.msra.mxu0 %v598
    %1371 = vmatprep.subr.mxu0 %v605
    %1372 = vmatpush1.msra.mxu0 %v604
    %1373 = vmatprep.subr.mxu0 %v611
    %1374 = vmatpush1.msra.mxu0 %v610
    %1375 = vmatprep.subr.mxu0 %v617
    %1376 = vmatpush1.msra.mxu0 %v616
    %1377 = vmatprep.subr.mxu0 %v623
    %1378 = vmatpush1.msra.mxu0 %v622
    %1379 = vmatprep.subr.mxu0 %v629
    %1380 = vmatpush1.msra.mxu0 %v628
    %1381 = vmatprep.subr.mxu0 %v635
    %1382 = vmatpush1.msra.mxu0 %v634
    %1383 = vmatprep.subr.mxu0 %v641
    %1384 = vmatpush1.msra.mxu0 %v640
    %1385 = vmatprep.subr.mxu0 %v647
    %1386 = vmatpush1.msra.mxu0 %v646
    %1387 = vmatprep.subr.mxu0 %v653
    %1388 = vmatpush1.msra.mxu0 %v652
    %1389 = vmatprep.subr.mxu0 %v659
    %1390 = vmatpush1.msra.mxu0 %v658
    %1391 = vmatprep.subr.mxu0 %v665
    %1392 = vmatpush1.msra.mxu0 %v664
    %1393 = vmatprep.subr.mxu0 %v671
    %1394 = vmatpush1.msra.mxu0 %v670
    %1395 = vmatprep.subr.mxu0 %v677
    %1396 = vmatpush1.msra.mxu0 %v676
    %1397 = vmatprep.subr.mxu0 %v683
    %1398 = vmatpush1.msra.mxu0 %v682
    %1399 = vmatprep.subr.mxu0 %v689
    %1400 = vmatpush1.msra.mxu0 %v688
    %1401 = vmatprep.subr.mxu0 %v695
    %1402 = vmatpush1.msra.mxu0 %v694
    %1403 = vmatprep.subr.mxu0 %v701
    %1404 = vmatpush1.msra.mxu0 %v700
    %1405 = vmatprep.subr.mxu0 %v707
    %1406 = vmatpush1.msra.mxu0 %v706
    %1407 = vmatprep.subr.mxu0 %v713
    %1408 = vmatpush1.msra.mxu0 %v712
    %1409 = vmatprep.subr.mxu0 %v719
    %1410 = vmatpush1.msra.mxu0 %v718
    %1411 = vmatprep.subr.mxu0 %v725
    %1412 = vmatpush1.msra.mxu0 %v724
    %1413 = vmatprep.subr.mxu0 %v731
    %1414 = vmatpush1.msra.mxu0 %v730
    %1415 = vmatprep.subr.mxu0 %v737
    %1416 = vmatpush1.msra.mxu0 %v736
    %1417 = vmatprep.subr.mxu0 %v743
    %1418 = vmatpush1.msra.mxu0 %v742
    %1419 = vmatprep.mubr.f32.mxu0 %v1348
    %1420 = vmatmul.mubr.f32.gmra.mrb[0].mxu0 %v1347
    %v1421 = vpop.f32.mrb[0].mxu0
    %v1422 = vadd.f32 %v758, %v1421
    %v1423 = vpop.f32.mrb[0].mxu0
    %v1424 = vadd.f32 %v762, %v1423
    %1425 = vdwg.mxu0
    %1426 = vmatprep.subr.mxu0 %v559
    %1427 = vmatpush1.msra.mxu0 %v558
    %1428 = vmatprep.subr.mxu0 %v565
    %1429 = vmatpush1.msra.mxu0 %v564
    %1430 = vmatprep.subr.mxu0 %v571
    %1431 = vmatpush1.msra.mxu0 %v570
    %1432 = vmatprep.subr.mxu0 %v577
    %1433 = vmatpush1.msra.mxu0 %v576
    %1434 = vmatprep.subr.mxu0 %v583
    %1435 = vmatpush1.msra.mxu0 %v582
    %1436 = vmatprep.subr.mxu0 %v589
    %1437 = vmatpush1.msra.mxu0 %v588
    %1438 = vmatprep.subr.mxu0 %v595
    %1439 = vmatpush1.msra.mxu0 %v594
    %1440 = vmatprep.subr.mxu0 %v601
    %1441 = vmatpush1.msra.mxu0 %v600
    %1442 = vmatprep.subr.mxu0 %v607
    %1443 = vmatpush1.msra.mxu0 %v606
    %1444 = vmatprep.subr.mxu0 %v613
    %1445 = vmatpush1.msra.mxu0 %v612
    %1446 = vmatprep.subr.mxu0 %v619
    %1447 = vmatpush1.msra.mxu0 %v618
    %1448 = vmatprep.subr.mxu0 %v625
    %1449 = vmatpush1.msra.mxu0 %v624
    %1450 = vmatprep.subr.mxu0 %v631
    %1451 = vmatpush1.msra.mxu0 %v630
    %1452 = vmatprep.subr.mxu0 %v637
    %1453 = vmatpush1.msra.mxu0 %v636
    %1454 = vmatprep.subr.mxu0 %v643
    %1455 = vmatpush1.msra.mxu0 %v642
    %1456 = vmatprep.subr.mxu0 %v649
    %1457 = vmatpush1.msra.mxu0 %v648
    %1458 = vmatprep.subr.mxu0 %v655
    %1459 = vmatpush1.msra.mxu0 %v654
    %1460 = vmatprep.subr.mxu0 %v661
    %1461 = vmatpush1.msra.mxu0 %v660
    %1462 = vmatprep.subr.mxu0 %v667
    %1463 = vmatpush1.msra.mxu0 %v666
    %1464 = vmatprep.subr.mxu0 %v673
    %1465 = vmatpush1.msra.mxu0 %v672
    %1466 = vmatprep.subr.mxu0 %v679
    %1467 = vmatpush1.msra.mxu0 %v678
    %1468 = vmatprep.subr.mxu0 %v685
    %1469 = vmatpush1.msra.mxu0 %v684
    %1470 = vmatprep.subr.mxu0 %v691
    %1471 = vmatpush1.msra.mxu0 %v690
    %1472 = vmatprep.subr.mxu0 %v697
    %1473 = vmatpush1.msra.mxu0 %v696
    %1474 = vmatprep.subr.mxu0 %v703
    %1475 = vmatpush1.msra.mxu0 %v702
    %1476 = vmatprep.subr.mxu0 %v709
    %1477 = vmatpush1.msra.mxu0 %v708
    %1478 = vmatprep.subr.mxu0 %v715
    %1479 = vmatpush1.msra.mxu0 %v714
    %1480 = vmatprep.subr.mxu0 %v721
    %1481 = vmatpush1.msra.mxu0 %v720
    %1482 = vmatprep.subr.mxu0 %v727
    %1483 = vmatpush1.msra.mxu0 %v726
    %1484 = vmatprep.subr.mxu0 %v733
    %1485 = vmatpush1.msra.mxu0 %v732
    %1486 = vmatprep.subr.mxu0 %v739
    %1487 = vmatpush1.msra.mxu0 %v738
    %1488 = vmatprep.subr.mxu0 %v745
    %1489 = vmatpush1.msra.mxu0 %v744
    %1490 = vmatprep.mubr.f32.mxu0 %v1348
    %1491 = vmatmul.mubr.f32.gmra.mrb[0].mxu0 %v1347
    %v1492 = vpop.f32.mrb[0].mxu0
    %v1493 = vadd.f32 %v766, %v1492
    %v1494 = vpop.f32.mrb[0].mxu0
    %v1495 = vadd.f32 %v770, %v1494
    %1496 = vdwg.mxu0
    %1497 = vmatprep.subr.mxu0 %v561
    %1498 = vmatpush1.msra.mxu0 %v560
    %1499 = vmatprep.subr.mxu0 %v567
    %1500 = vmatpush1.msra.mxu0 %v566
    %1501 = vmatprep.subr.mxu0 %v573
    %1502 = vmatpush1.msra.mxu0 %v572
    %1503 = vmatprep.subr.mxu0 %v579
    %1504 = vmatpush1.msra.mxu0 %v578
    %1505 = vmatprep.subr.mxu0 %v585
    %1506 = vmatpush1.msra.mxu0 %v584
    %1507 = vmatprep.subr.mxu0 %v591
    %1508 = vmatpush1.msra.mxu0 %v590
    %1509 = vmatprep.subr.mxu0 %v597
    %1510 = vmatpush1.msra.mxu0 %v596
    %1511 = vmatprep.subr.mxu0 %v603
    %1512 = vmatpush1.msra.mxu0 %v602
    %1513 = vmatprep.subr.mxu0 %v609
    %1514 = vmatpush1.msra.mxu0 %v608
    %1515 = vmatprep.subr.mxu0 %v615
    %1516 = vmatpush1.msra.mxu0 %v614
    %1517 = vmatprep.subr.mxu0 %v621
    %1518 = vmatpush1.msra.mxu0 %v620
    %1519 = vmatprep.subr.mxu0 %v627
    %1520 = vmatpush1.msra.mxu0 %v626
    %1521 = vmatprep.subr.mxu0 %v633
    %1522 = vmatpush1.msra.mxu0 %v632
    %1523 = vmatprep.subr.mxu0 %v639
    %1524 = vmatpush1.msra.mxu0 %v638
    %1525 = vmatprep.subr.mxu0 %v645
    %1526 = vmatpush1.msra.mxu0 %v644
    %1527 = vmatprep.subr.mxu0 %v651
    %1528 = vmatpush1.msra.mxu0 %v650
    %1529 = vmatprep.subr.mxu0 %v657
    %1530 = vmatpush1.msra.mxu0 %v656
    %1531 = vmatprep.subr.mxu0 %v663
    %1532 = vmatpush1.msra.mxu0 %v662
    %1533 = vmatprep.subr.mxu0 %v669
    %1534 = vmatpush1.msra.mxu0 %v668
    %1535 = vmatprep.subr.mxu0 %v675
    %1536 = vmatpush1.msra.mxu0 %v674
    %1537 = vmatprep.subr.mxu0 %v681
    %1538 = vmatpush1.msra.mxu0 %v680
    %1539 = vmatprep.subr.mxu0 %v687
    %1540 = vmatpush1.msra.mxu0 %v686
    %1541 = vmatprep.subr.mxu0 %v693
    %1542 = vmatpush1.msra.mxu0 %v692
    %1543 = vmatprep.subr.mxu0 %v699
    %1544 = vmatpush1.msra.mxu0 %v698
    %1545 = vmatprep.subr.mxu0 %v705
    %1546 = vmatpush1.msra.mxu0 %v704
    %1547 = vmatprep.subr.mxu0 %v711
    %1548 = vmatpush1.msra.mxu0 %v710
    %1549 = vmatprep.subr.mxu0 %v717
    %1550 = vmatpush1.msra.mxu0 %v716
    %1551 = vmatprep.subr.mxu0 %v723
    %1552 = vmatpush1.msra.mxu0 %v722
    %1553 = vmatprep.subr.mxu0 %v729
    %1554 = vmatpush1.msra.mxu0 %v728
    %1555 = vmatprep.subr.mxu0 %v735
    %1556 = vmatpush1.msra.mxu0 %v734
    %1557 = vmatprep.subr.mxu0 %v741
    %1558 = vmatpush1.msra.mxu0 %v740
    %1559 = vmatprep.subr.mxu0 %v747
    %1560 = vmatpush1.msra.mxu0 %v746
    %1561 = vmatprep.mubr.f32.mxu0 %v1348
    %1562 = vmatmul.mubr.f32.gmra.mrb[0].mxu0 %v1347
    %v1563 = vpop.f32.mrb[0].mxu0
    %v1564 = vadd.f32 %v774, %v1563
    %v1565 = vpop.f32.mrb[0].mxu0
    %v1566 = vadd.f32 %v778, %v1565
    %1567 = vdwg.mxu0
    %s1568 = scalar_lea.vmem [#allocation2], 96
    %v1569 = vld [vmem:[%s1568] sm:$0xff]
    %v1570 = vld [vmem:[%s1568 + $0x8] sm:$0xff]
    %v1571 = vld [vmem:[%s1568 + $0x10] sm:$0xff]
    %s1572 = scalar_lea.vmem [#allocation2], 240
    %v1573 = vld [vmem:[%s1572 + $0x18] sm:$0xff]
    %v1574 = vld [vmem:[%s1572 + $0x20] sm:$0xff]
    %v1575 = vld [vmem:[%s1572 + $0x28] sm:$0xff]
    %v1576 = vadd.f32 %v1569, %v1422
    %v1577 = vxor.u32 %v1576, 2147483648
    %v1578 = vmul.f32 %v1577, 1.442695
    %v1579 = vpow.pop %v1578
    %v1580 = vadd.f32 %v1579, 1.0
    %v1581 = vrcp.pop %v1580
    %v1582 = vmul.f32 1.0, %v1581
    %v1583 = vadd.f32 %v1570, %v1424
    %v1584 = vxor.u32 %v1583, 2147483648
    %v1585 = vmul.f32 %v1584, 1.442695
    %v1586 = vpow.pop %v1585
    %v1587 = vadd.f32 %v1586, 1.0
    %v1588 = vrcp.pop %v1587
    %v1589 = vmul.f32 1.0, %v1588
    %v1590 = vmul.f32 %v1582, %v1493
    %v1591 = vadd.f32 %v1571, %v1590
    %v1592 = vtanh.pop %v1591
    %v1593 = vsub.f32 1.0, %v1589
    %v1594 = vmul.f32 %v1593, %v1592
    %v1595 = vmul.f32 %v1589, %v1347
    %v1596 = vadd.f32 %v1594, %v1595
    %v1597 = vadd.f32 %v1573, %v1495
    %v1598 = vxor.u32 %v1597, 2147483648
    %v1599 = vmul.f32 %v1598, 1.442695
    %v1600 = vpow.pop %v1599
    %v1601 = vadd.f32 %v1600, 1.0
    %v1602 = vrcp.pop %v1601
    %v1603 = vmul.f32 1.0, %v1602
    %v1604 = vadd.f32 %v1574, %v1564
    %v1605 = vxor.u32 %v1604, 2147483648
    %v1606 = vmul.f32 %v1605, 1.442695
    %v1607 = vpow.pop %v1606
    %v1608 = vadd.f32 %v1607, 1.0
    %v1609 = vrcp.pop %v1608
    %v1610 = vmul.f32 1.0, %v1609
    %v1611 = vmul.f32 %v1603, %v1566
    %v1612 = vadd.f32 %v1575, %v1611
    %v1613 = vtanh.pop %v1612
    %v1614 = vsub.f32 1.0, %v1610
    %v1615 = vmul.f32 %v1614, %v1613
    %v1616 = vmul.f32 %v1610, %v1348
    %v1617 = vadd.f32 %v1615, %v1616
    %v1618 = vsel %vm1351, 1, 0
    %1619 = vset.pattern.permute.xlu0 0
    %1620 = vperm.xlu0 %1619, %v1618
    %v1621 = vpop.permute.xlu0 %1620
    %vm1622 = vcmp.eq.s32.totalorder %v1621, 1
    %v1623 = vsel %vm1622, %v1596, 0.0
    %s1624 = scalar_lea.vmem [#allocation9], 32
    %1625 = vst [vmem:[%s1624] sm:$0xff] %v1623
    %v1626 = vsel %vm1354, 1, 0
    %1627 = vset.pattern.permute.xlu0 0
    %1628 = vperm.xlu0 %1627, %v1626
    %v1629 = vpop.permute.xlu0 %1628
    %vm1630 = vcmp.eq.s32.totalorder %v1629, 1
    %v1631 = vsel %vm1630, %v1617, 0.0
    %s1632 = scalar_lea.vmem [#allocation9], 80
    %1633 = vst [vmem:[%s1632 + $0x8] sm:$0xff] %v1631
    %v1634 = vsel %vm1622, %v1596, %v1347
    %v1635 = vsel %vm1630, %v1617, %v1348
    %s1636 = scalar_lea.vmem %s1, 24
    %v1637 = vld [vmem:[%s1636] sm:$0xff]
    %vm1638 = vcmp.gt.f32.partialorder %v1637, 0.0
    %s1639 = scalar_lea.vmem %s1, 32
    %v1640 = vld [vmem:[%s1639] sm:$0xff]
    %vm1641 = vcmp.gt.f32.partialorder %v1640, 0.0
    %1642 = vmatprep.subr.mxu0 %v557
    %1643 = vmatpush1.msra.mxu0 %v556
    %1644 = vmatprep.subr.mxu0 %v563
    %1645 = vmatpush1.msra.mxu0 %v562
    %1646 = vmatprep.subr.mxu0 %v569
    %1647 = vmatpush1.msra.mxu0 %v568
    %1648 = vmatprep.subr.mxu0 %v575
    %1649 = vmatpush1.msra.mxu0 %v574
    %1650 = vmatprep.subr.mxu0 %v581
    %1651 = vmatpush1.msra.mxu0 %v580
    %1652 = vmatprep.subr.mxu0 %v587
    %1653 = vmatpush1.msra.mxu0 %v586
    %1654 = vmatprep.subr.mxu0 %v593
    %1655 = vmatpush1.msra.mxu0 %v592
    %1656 = vmatprep.subr.mxu0 %v599
    %1657 = vmatpush1.msra.mxu0 %v598
    %1658 = vmatprep.subr.mxu0 %v605
    %1659 = vmatpush1.msra.mxu0 %v604
    %1660 = vmatprep.subr.mxu0 %v611
    %1661 = vmatpush1.msra.mxu0 %v610
    %1662 = vmatprep.subr.mxu0 %v617
    %1663 = vmatpush1.msra.mxu0 %v616
    %1664 = vmatprep.subr.mxu0 %v623
    %1665 = vmatpush1.msra.mxu0 %v622
    %1666 = vmatprep.subr.mxu0 %v629
    %1667 = vmatpush1.msra.mxu0 %v628
    %1668 = vmatprep.subr.mxu0 %v635
    %1669 = vmatpush1.msra.mxu0 %v634
    %1670 = vmatprep.subr.mxu0 %v641
    %1671 = vmatpush1.msra.mxu0 %v640
    %1672 = vmatprep.subr.mxu0 %v647
    %1673 = vmatpush1.msra.mxu0 %v646
    %1674 = vmatprep.subr.mxu0 %v653
    %1675 = vmatpush1.msra.mxu0 %v652
    %1676 = vmatprep.subr.mxu0 %v659
    %1677 = vmatpush1.msra.mxu0 %v658
    %1678 = vmatprep.subr.mxu0 %v665
    %1679 = vmatpush1.msra.mxu0 %v664
    %1680 = vmatprep.subr.mxu0 %v671
    %1681 = vmatpush1.msra.mxu0 %v670
    %1682 = vmatprep.subr.mxu0 %v677
    %1683 = vmatpush1.msra.mxu0 %v676
    %1684 = vmatprep.subr.mxu0 %v683
    %1685 = vmatpush1.msra.mxu0 %v682
    %1686 = vmatprep.subr.mxu0 %v689
    %1687 = vmatpush1.msra.mxu0 %v688
    %1688 = vmatprep.subr.mxu0 %v695
    %1689 = vmatpush1.msra.mxu0 %v694
    %1690 = vmatprep.subr.mxu0 %v701
    %1691 = vmatpush1.msra.mxu0 %v700
    %1692 = vmatprep.subr.mxu0 %v707
    %1693 = vmatpush1.msra.mxu0 %v706
    %1694 = vmatprep.subr.mxu0 %v713
    %1695 = vmatpush1.msra.mxu0 %v712
    %1696 = vmatprep.subr.mxu0 %v719
    %1697 = vmatpush1.msra.mxu0 %v718
    %1698 = vmatprep.subr.mxu0 %v725
    %1699 = vmatpush1.msra.mxu0 %v724
    %1700 = vmatprep.subr.mxu0 %v731
    %1701 = vmatpush1.msra.mxu0 %v730
    %1702 = vmatprep.subr.mxu0 %v737
    %1703 = vmatpush1.msra.mxu0 %v736
    %1704 = vmatprep.subr.mxu0 %v743
    %1705 = vmatpush1.msra.mxu0 %v742
    %1706 = vmatprep.mubr.f32.mxu0 %v1635
    %1707 = vmatmul.mubr.f32.gmra.mrb[0].mxu0 %v1634
    %v1708 = vpop.f32.mrb[0].mxu0
    %v1709 = vadd.f32 %v758, %v1708
    %v1710 = vpop.f32.mrb[0].mxu0
    %v1711 = vadd.f32 %v762, %v1710
    %1712 = vdwg.mxu0
    %1713 = vmatprep.subr.mxu0 %v559
    %1714 = vmatpush1.msra.mxu0 %v558
    %1715 = vmatprep.subr.mxu0 %v565
    %1716 = vmatpush1.msra.mxu0 %v564
    %1717 = vmatprep.subr.mxu0 %v571
    %1718 = vmatpush1.msra.mxu0 %v570
    %1719 = vmatprep.subr.mxu0 %v577
    %1720 = vmatpush1.msra.mxu0 %v576
    %1721 = vmatprep.subr.mxu0 %v583
    %1722 = vmatpush1.msra.mxu0 %v582
    %1723 = vmatprep.subr.mxu0 %v589
    %1724 = vmatpush1.msra.mxu0 %v588
    %1725 = vmatprep.subr.mxu0 %v595
    %1726 = vmatpush1.msra.mxu0 %v594
    %1727 = vmatprep.subr.mxu0 %v601
    %1728 = vmatpush1.msra.mxu0 %v600
    %1729 = vmatprep.subr.mxu0 %v607
    %1730 = vmatpush1.msra.mxu0 %v606
    %1731 = vmatprep.subr.mxu0 %v613
    %1732 = vmatpush1.msra.mxu0 %v612
    %1733 = vmatprep.subr.mxu0 %v619
    %1734 = vmatpush1.msra.mxu0 %v618
    %1735 = vmatprep.subr.mxu0 %v625
    %1736 = vmatpush1.msra.mxu0 %v624
    %1737 = vmatprep.subr.mxu0 %v631
    %1738 = vmatpush1.msra.mxu0 %v630
    %1739 = vmatprep.subr.mxu0 %v637
    %1740 = vmatpush1.msra.mxu0 %v636
    %1741 = vmatprep.subr.mxu0 %v643
    %1742 = vmatpush1.msra.mxu0 %v642
    %1743 = vmatprep.subr.mxu0 %v649
    %1744 = vmatpush1.msra.mxu0 %v648
    %1745 = vmatprep.subr.mxu0 %v655
    %1746 = vmatpush1.msra.mxu0 %v654
    %1747 = vmatprep.subr.mxu0 %v661
    %1748 = vmatpush1.msra.mxu0 %v660
    %1749 = vmatprep.subr.mxu0 %v667
    %1750 = vmatpush1.msra.mxu0 %v666
    %1751 = vmatprep.subr.mxu0 %v673
    %1752 = vmatpush1.msra.mxu0 %v672
    %1753 = vmatprep.subr.mxu0 %v679
    %1754 = vmatpush1.msra.mxu0 %v678
    %1755 = vmatprep.subr.mxu0 %v685
    %1756 = vmatpush1.msra.mxu0 %v684
    %1757 = vmatprep.subr.mxu0 %v691
    %1758 = vmatpush1.msra.mxu0 %v690
    %1759 = vmatprep.subr.mxu0 %v697
    %1760 = vmatpush1.msra.mxu0 %v696
    %1761 = vmatprep.subr.mxu0 %v703
    %1762 = vmatpush1.msra.mxu0 %v702
    %1763 = vmatprep.subr.mxu0 %v709
    %1764 = vmatpush1.msra.mxu0 %v708
    %1765 = vmatprep.subr.mxu0 %v715
    %1766 = vmatpush1.msra.mxu0 %v714
    %1767 = vmatprep.subr.mxu0 %v721
    %1768 = vmatpush1.msra.mxu0 %v720
    %1769 = vmatprep.subr.mxu0 %v727
    %1770 = vmatpush1.msra.mxu0 %v726
    %1771 = vmatprep.subr.mxu0 %v733
    %1772 = vmatpush1.msra.mxu0 %v732
    %1773 = vmatprep.subr.mxu0 %v739
    %1774 = vmatpush1.msra.mxu0 %v738
    %1775 = vmatprep.subr.mxu0 %v745
    %1776 = vmatpush1.msra.mxu0 %v744
    %1777 = vmatprep.mubr.f32.mxu0 %v1635
    %1778 = vmatmul.mubr.f32.gmra.mrb[0].mxu0 %v1634
    %v1779 = vpop.f32.mrb[0].mxu0
    %v1780 = vadd.f32 %v766, %v1779
    %v1781 = vpop.f32.mrb[0].mxu0
    %v1782 = vadd.f32 %v770, %v1781
    %1783 = vdwg.mxu0
    %1784 = vmatprep.subr.mxu0 %v561
    %1785 = vmatpush1.msra.mxu0 %v560
    %1786 = vmatprep.subr.mxu0 %v567
    %1787 = vmatpush1.msra.mxu0 %v566
    %1788 = vmatprep.subr.mxu0 %v573
    %1789 = vmatpush1.msra.mxu0 %v572
    %1790 = vmatprep.subr.mxu0 %v579
    %1791 = vmatpush1.msra.mxu0 %v578
    %1792 = vmatprep.subr.mxu0 %v585
    %1793 = vmatpush1.msra.mxu0 %v584
    %1794 = vmatprep.subr.mxu0 %v591
    %1795 = vmatpush1.msra.mxu0 %v590
    %1796 = vmatprep.subr.mxu0 %v597
    %1797 = vmatpush1.msra.mxu0 %v596
    %1798 = vmatprep.subr.mxu0 %v603
    %1799 = vmatpush1.msra.mxu0 %v602
    %1800 = vmatprep.subr.mxu0 %v609
    %1801 = vmatpush1.msra.mxu0 %v608
    %1802 = vmatprep.subr.mxu0 %v615
    %1803 = vmatpush1.msra.mxu0 %v614
    %1804 = vmatprep.subr.mxu0 %v621
    %1805 = vmatpush1.msra.mxu0 %v620
    %1806 = vmatprep.subr.mxu0 %v627
    %1807 = vmatpush1.msra.mxu0 %v626
    %1808 = vmatprep.subr.mxu0 %v633
    %1809 = vmatpush1.msra.mxu0 %v632
    %1810 = vmatprep.subr.mxu0 %v639
    %1811 = vmatpush1.msra.mxu0 %v638
    %1812 = vmatprep.subr.mxu0 %v645
    %1813 = vmatpush1.msra.mxu0 %v644
    %1814 = vmatprep.subr.mxu0 %v651
    %1815 = vmatpush1.msra.mxu0 %v650
    %1816 = vmatprep.subr.mxu0 %v657
    %1817 = vmatpush1.msra.mxu0 %v656
    %1818 = vmatprep.subr.mxu0 %v663
    %1819 = vmatpush1.msra.mxu0 %v662
    %1820 = vmatprep.subr.mxu0 %v669
    %1821 = vmatpush1.msra.mxu0 %v668
    %1822 = vmatprep.subr.mxu0 %v675
    %1823 = vmatpush1.msra.mxu0 %v674
    %1824 = vmatprep.subr.mxu0 %v681
    %1825 = vmatpush1.msra.mxu0 %v680
    %1826 = vmatprep.subr.mxu0 %v687
    %1827 = vmatpush1.msra.mxu0 %v686
    %1828 = vmatprep.subr.mxu0 %v693
    %1829 = vmatpush1.msra.mxu0 %v692
    %1830 = vmatprep.subr.mxu0 %v699
    %1831 = vmatpush1.msra.mxu0 %v698
    %1832 = vmatprep.subr.mxu0 %v705
    %1833 = vmatpush1.msra.mxu0 %v704
    %1834 = vmatprep.subr.mxu0 %v711
    %1835 = vmatpush1.msra.mxu0 %v710
    %1836 = vmatprep.subr.mxu0 %v717
    %1837 = vmatpush1.msra.mxu0 %v716
    %1838 = vmatprep.subr.mxu0 %v723
    %1839 = vmatpush1.msra.mxu0 %v722
    %1840 = vmatprep.subr.mxu0 %v729
    %1841 = vmatpush1.msra.mxu0 %v728
    %1842 = vmatprep.subr.mxu0 %v735
    %1843 = vmatpush1.msra.mxu0 %v734
    %1844 = vmatprep.subr.mxu0 %v741
    %1845 = vmatpush1.msra.mxu0 %v740
    %1846 = vmatprep.subr.mxu0 %v747
    %1847 = vmatpush1.msra.mxu0 %v746
    %1848 = vmatprep.mubr.f32.mxu0 %v1635
    %1849 = vmatmul.mubr.f32.gmra.mrb[0].mxu0 %v1634
    %v1850 = vpop.f32.mrb[0].mxu0
    %v1851 = vadd.f32 %v774, %v1850
    %v1852 = vpop.f32.mrb[0].mxu0
    %v1853 = vadd.f32 %v778, %v1852
    %1854 = vdwg.mxu0
    %s1855 = scalar_lea.vmem [#allocation2], 144
    %v1856 = vld [vmem:[%s1855] sm:$0xff]
    %v1857 = vld [vmem:[%s1855 + $0x8] sm:$0xff]
    %v1858 = vld [vmem:[%s1855 + $0x10] sm:$0xff]
    %s1859 = scalar_lea.vmem [#allocation2], 192
    %v1860 = vld [vmem:[%s1859 + $0x18] sm:$0xff]
    %v1861 = vld [vmem:[%s1859 + $0x20] sm:$0xff]
    %v1862 = vld [vmem:[%s1859 + $0x28] sm:$0xff]
    %v1863 = vadd.f32 %v1856, %v1709
    %v1864 = vxor.u32 %v1863, 2147483648
    %v1865 = vmul.f32 %v1864, 1.442695
    %v1866 = vpow.pop %v1865
    %v1867 = vadd.f32 %v1866, 1.0
    %v1868 = vrcp.pop %v1867
    %v1869 = vmul.f32 1.0, %v1868
    %v1870 = vadd.f32 %v1857, %v1711
    %v1871 = vxor.u32 %v1870, 2147483648
    %v1872 = vmul.f32 %v1871, 1.442695
    %v1873 = vpow.pop %v1872
    %v1874 = vadd.f32 %v1873, 1.0
    %v1875 = vrcp.pop %v1874
    %v1876 = vmul.f32 1.0, %v1875
    %v1877 = vmul.f32 %v1869, %v1780
    %v1878 = vadd.f32 %v1858, %v1877
    %v1879 = vtanh.pop %v1878
    %v1880 = vsub.f32 1.0, %v1876
    %v1881 = vmul.f32 %v1880, %v1879
    %v1882 = vmul.f32 %v1876, %v1634
    %v1883 = vadd.f32 %v1881, %v1882
    %v1884 = vadd.f32 %v1860, %v1782
    %v1885 = vxor.u32 %v1884, 2147483648
    %v1886 = vmul.f32 %v1885, 1.442695
    %v1887 = vpow.pop %v1886
    %v1888 = vadd.f32 %v1887, 1.0
    %v1889 = vrcp.pop %v1888
    %v1890 = vmul.f32 1.0, %v1889
    %v1891 = vadd.f32 %v1861, %v1851
    %v1892 = vxor.u32 %v1891, 2147483648
    %v1893 = vmul.f32 %v1892, 1.442695
    %v1894 = vpow.pop %v1893
    %v1895 = vadd.f32 %v1894, 1.0
    %v1896 = vrcp.pop %v1895
    %v1897 = vmul.f32 1.0, %v1896
    %v1898 = vmul.f32 %v1890, %v1853
    %v1899 = vadd.f32 %v1862, %v1898
    %v1900 = vtanh.pop %v1899
    %v1901 = vsub.f32 1.0, %v1897
    %v1902 = vmul.f32 %v1901, %v1900
    %v1903 = vmul.f32 %v1897, %v1635
    %v1904 = vadd.f32 %v1902, %v1903
    %v1905 = vsel %vm1638, 1, 0
    %1906 = vset.pattern.permute.xlu0 0
    %1907 = vperm.xlu0 %1906, %v1905
    %v1908 = vpop.permute.xlu0 %1907
    %vm1909 = vcmp.eq.s32.totalorder %v1908, 1
    %v1910 = vsel %vm1909, %v1883, 0.0
    %s1911 = scalar_lea.vmem [#allocation9], 48
    %1912 = vst [vmem:[%s1911] sm:$0xff] %v1910
    %v1913 = vsel %vm1641, 1, 0
    %1914 = vset.pattern.permute.xlu0 0
    %1915 = vperm.xlu0 %1914, %v1913
    %v1916 = vpop.permute.xlu0 %1915
    %vm1917 = vcmp.eq.s32.totalorder %v1916, 1
    %v1918 = vsel %vm1917, %v1904, 0.0
    %s1919 = scalar_lea.vmem [#allocation9], 64
    %1920 = vst [vmem:[%s1919 + $0x8] sm:$0xff] %v1918
    %v1921 = vsel %vm1909, %v1883, %v1634
    %v1922 = vsel %vm1917, %v1904, %v1635
    %v1923 = vld [vmem:[%s1639] sm:$0xff]
    %vm1924 = vcmp.gt.f32.partialorder %v1923, 0.0
    %v1925 = vld [vmem:[%s1636] sm:$0xff]
    %vm1926 = vcmp.gt.f32.partialorder %v1925, 0.0
    %1927 = vmatprep.subr.mxu0 %v557
    %1928 = vmatpush1.msra.mxu0 %v556
    %1929 = vmatprep.subr.mxu0 %v563
    %1930 = vmatpush1.msra.mxu0 %v562
    %1931 = vmatprep.subr.mxu0 %v569
    %1932 = vmatpush1.msra.mxu0 %v568
    %1933 = vmatprep.subr.mxu0 %v575
    %1934 = vmatpush1.msra.mxu0 %v574
    %1935 = vmatprep.subr.mxu0 %v581
    %1936 = vmatpush1.msra.mxu0 %v580
    %1937 = vmatprep.subr.mxu0 %v587
    %1938 = vmatpush1.msra.mxu0 %v586
    %1939 = vmatprep.subr.mxu0 %v593
    %1940 = vmatpush1.msra.mxu0 %v592
    %1941 = vmatprep.subr.mxu0 %v599
    %1942 = vmatpush1.msra.mxu0 %v598
    %1943 = vmatprep.subr.mxu0 %v605
    %1944 = vmatpush1.msra.mxu0 %v604
    %1945 = vmatprep.subr.mxu0 %v611
    %1946 = vmatpush1.msra.mxu0 %v610
    %1947 = vmatprep.subr.mxu0 %v617
    %1948 = vmatpush1.msra.mxu0 %v616
    %1949 = vmatprep.subr.mxu0 %v623
    %1950 = vmatpush1.msra.mxu0 %v622
    %1951 = vmatprep.subr.mxu0 %v629
    %1952 = vmatpush1.msra.mxu0 %v628
    %1953 = vmatprep.subr.mxu0 %v635
    %1954 = vmatpush1.msra.mxu0 %v634
    %1955 = vmatprep.subr.mxu0 %v641
    %1956 = vmatpush1.msra.mxu0 %v640
    %1957 = vmatprep.subr.mxu0 %v647
    %1958 = vmatpush1.msra.mxu0 %v646
    %1959 = vmatprep.subr.mxu0 %v653
    %1960 = vmatpush1.msra.mxu0 %v652
    %1961 = vmatprep.subr.mxu0 %v659
    %1962 = vmatpush1.msra.mxu0 %v658
    %1963 = vmatprep.subr.mxu0 %v665
    %1964 = vmatpush1.msra.mxu0 %v664
    %1965 = vmatprep.subr.mxu0 %v671
    %1966 = vmatpush1.msra.mxu0 %v670
    %1967 = vmatprep.subr.mxu0 %v677
    %1968 = vmatpush1.msra.mxu0 %v676
    %1969 = vmatprep.subr.mxu0 %v683
    %1970 = vmatpush1.msra.mxu0 %v682
    %1971 = vmatprep.subr.mxu0 %v689
    %1972 = vmatpush1.msra.mxu0 %v688
    %1973 = vmatprep.subr.mxu0 %v695
    %1974 = vmatpush1.msra.mxu0 %v694
    %1975 = vmatprep.subr.mxu0 %v701
    %1976 = vmatpush1.msra.mxu0 %v700
    %1977 = vmatprep.subr.mxu0 %v707
    %1978 = vmatpush1.msra.mxu0 %v706
    %1979 = vmatprep.subr.mxu0 %v713
    %1980 = vmatpush1.msra.mxu0 %v712
    %1981 = vmatprep.subr.mxu0 %v719
    %1982 = vmatpush1.msra.mxu0 %v718
    %1983 = vmatprep.subr.mxu0 %v725
    %1984 = vmatpush1.msra.mxu0 %v724
    %1985 = vmatprep.subr.mxu0 %v731
    %1986 = vmatpush1.msra.mxu0 %v730
    %1987 = vmatprep.subr.mxu0 %v737
    %1988 = vmatpush1.msra.mxu0 %v736
    %1989 = vmatprep.subr.mxu0 %v743
    %1990 = vmatpush1.msra.mxu0 %v742
    %1991 = vmatprep.mubr.f32.mxu0 %v1922
    %1992 = vmatmul.mubr.f32.gmra.mrb[0].mxu0 %v1921
    %v1993 = vpop.f32.mrb[0].mxu0
    %v1994 = vadd.f32 %v758, %v1993
    %v1995 = vpop.f32.mrb[0].mxu0
    %v1996 = vadd.f32 %v762, %v1995
    %1997 = vdwg.mxu0
    %1998 = vmatprep.subr.mxu0 %v559
    %1999 = vmatpush1.msra.mxu0 %v558
    %2000 = vmatprep.subr.mxu0 %v565
    %2001 = vmatpush1.msra.mxu0 %v564
    %2002 = vmatprep.subr.mxu0 %v571
    %2003 = vmatpush1.msra.mxu0 %v570
    %2004 = vmatprep.subr.mxu0 %v577
    %2005 = vmatpush1.msra.mxu0 %v576
    %2006 = vmatprep.subr.mxu0 %v583
    %2007 = vmatpush1.msra.mxu0 %v582
    %2008 = vmatprep.subr.mxu0 %v589
    %2009 = vmatpush1.msra.mxu0 %v588
    %2010 = vmatprep.subr.mxu0 %v595
    %2011 = vmatpush1.msra.mxu0 %v594
    %2012 = vmatprep.subr.mxu0 %v601
    %2013 = vmatpush1.msra.mxu0 %v600
    %2014 = vmatprep.subr.mxu0 %v607
    %2015 = vmatpush1.msra.mxu0 %v606
    %2016 = vmatprep.subr.mxu0 %v613
    %2017 = vmatpush1.msra.mxu0 %v612
    %2018 = vmatprep.subr.mxu0 %v619
    %2019 = vmatpush1.msra.mxu0 %v618
    %2020 = vmatprep.subr.mxu0 %v625
    %2021 = vmatpush1.msra.mxu0 %v624
    %2022 = vmatprep.subr.mxu0 %v631
    %2023 = vmatpush1.msra.mxu0 %v630
    %2024 = vmatprep.subr.mxu0 %v637
    %2025 = vmatpush1.msra.mxu0 %v636
    %2026 = vmatprep.subr.mxu0 %v643
    %2027 = vmatpush1.msra.mxu0 %v642
    %2028 = vmatprep.subr.mxu0 %v649
    %2029 = vmatpush1.msra.mxu0 %v648
    %2030 = vmatprep.subr.mxu0 %v655
    %2031 = vmatpush1.msra.mxu0 %v654
    %2032 = vmatprep.subr.mxu0 %v661
    %2033 = vmatpush1.msra.mxu0 %v660
    %2034 = vmatprep.subr.mxu0 %v667
    %2035 = vmatpush1.msra.mxu0 %v666
    %2036 = vmatprep.subr.mxu0 %v673
    %2037 = vmatpush1.msra.mxu0 %v672
    %2038 = vmatprep.subr.mxu0 %v679
    %2039 = vmatpush1.msra.mxu0 %v678
    %2040 = vmatprep.subr.mxu0 %v685
    %2041 = vmatpush1.msra.mxu0 %v684
    %2042 = vmatprep.subr.mxu0 %v691
    %2043 = vmatpush1.msra.mxu0 %v690
    %2044 = vmatprep.subr.mxu0 %v697
    %2045 = vmatpush1.msra.mxu0 %v696
    %2046 = vmatprep.subr.mxu0 %v703
    %2047 = vmatpush1.msra.mxu0 %v702
    %2048 = vmatprep.subr.mxu0 %v709
    %2049 = vmatpush1.msra.mxu0 %v708
    %2050 = vmatprep.subr.mxu0 %v715
    %2051 = vmatpush1.msra.mxu0 %v714
    %2052 = vmatprep.subr.mxu0 %v721
    %2053 = vmatpush1.msra.mxu0 %v720
    %2054 = vmatprep.subr.mxu0 %v727
    %2055 = vmatpush1.msra.mxu0 %v726
    %2056 = vmatprep.subr.mxu0 %v733
    %2057 = vmatpush1.msra.mxu0 %v732
    %2058 = vmatprep.subr.mxu0 %v739
    %2059 = vmatpush1.msra.mxu0 %v738
    %2060 = vmatprep.subr.mxu0 %v745
    %2061 = vmatpush1.msra.mxu0 %v744
    %2062 = vmatprep.mubr.f32.mxu0 %v1922
    %2063 = vmatmul.mubr.f32.gmra.mrb[0].mxu0 %v1921
    %v2064 = vpop.f32.mrb[0].mxu0
    %v2065 = vadd.f32 %v766, %v2064
    %v2066 = vpop.f32.mrb[0].mxu0
    %v2067 = vadd.f32 %v770, %v2066
    %2068 = vdwg.mxu0
    %2069 = vmatprep.subr.mxu0 %v561
    %2070 = vmatpush1.msra.mxu0 %v560
    %2071 = vmatprep.subr.mxu0 %v567
    %2072 = vmatpush1.msra.mxu0 %v566
    %2073 = vmatprep.subr.mxu0 %v573
    %2074 = vmatpush1.msra.mxu0 %v572
    %2075 = vmatprep.subr.mxu0 %v579
    %2076 = vmatpush1.msra.mxu0 %v578
    %2077 = vmatprep.subr.mxu0 %v585
    %2078 = vmatpush1.msra.mxu0 %v584
    %2079 = vmatprep.subr.mxu0 %v591
    %2080 = vmatpush1.msra.mxu0 %v590
    %2081 = vmatprep.subr.mxu0 %v597
    %2082 = vmatpush1.msra.mxu0 %v596
    %2083 = vmatprep.subr.mxu0 %v603
    %2084 = vmatpush1.msra.mxu0 %v602
    %2085 = vmatprep.subr.mxu0 %v609
    %2086 = vmatpush1.msra.mxu0 %v608
    %2087 = vmatprep.subr.mxu0 %v615
    %2088 = vmatpush1.msra.mxu0 %v614
    %2089 = vmatprep.subr.mxu0 %v621
    %2090 = vmatpush1.msra.mxu0 %v620
    %2091 = vmatprep.subr.mxu0 %v627
    %2092 = vmatpush1.msra.mxu0 %v626
    %2093 = vmatprep.subr.mxu0 %v633
    %2094 = vmatpush1.msra.mxu0 %v632
    %2095 = vmatprep.subr.mxu0 %v639
    %2096 = vmatpush1.msra.mxu0 %v638
    %2097 = vmatprep.subr.mxu0 %v645
    %2098 = vmatpush1.msra.mxu0 %v644
    %2099 = vmatprep.subr.mxu0 %v651
    %2100 = vmatpush1.msra.mxu0 %v650
    %2101 = vmatprep.subr.mxu0 %v657
    %2102 = vmatpush1.msra.mxu0 %v656
    %2103 = vmatprep.subr.mxu0 %v663
    %2104 = vmatpush1.msra.mxu0 %v662
    %2105 = vmatprep.subr.mxu0 %v669
    %2106 = vmatpush1.msra.mxu0 %v668
    %2107 = vmatprep.subr.mxu0 %v675
    %2108 = vmatpush1.msra.mxu0 %v674
    %2109 = vmatprep.subr.mxu0 %v681
    %2110 = vmatpush1.msra.mxu0 %v680
    %2111 = vmatprep.subr.mxu0 %v687
    %2112 = vmatpush1.msra.mxu0 %v686
    %2113 = vmatprep.subr.mxu0 %v693
    %2114 = vmatpush1.msra.mxu0 %v692
    %2115 = vmatprep.subr.mxu0 %v699
    %2116 = vmatpush1.msra.mxu0 %v698
    %2117 = vmatprep.subr.mxu0 %v705
    %2118 = vmatpush1.msra.mxu0 %v704
    %2119 = vmatprep.subr.mxu0 %v711
    %2120 = vmatpush1.msra.mxu0 %v710
    %2121 = vmatprep.subr.mxu0 %v717
    %2122 = vmatpush1.msra.mxu0 %v716
    %2123 = vmatprep.subr.mxu0 %v723
    %2124 = vmatpush1.msra.mxu0 %v722
    %2125 = vmatprep.subr.mxu0 %v729
    %2126 = vmatpush1.msra.mxu0 %v728
    %2127 = vmatprep.subr.mxu0 %v735
    %2128 = vmatpush1.msra.mxu0 %v734
    %2129 = vmatprep.subr.mxu0 %v741
    %2130 = vmatpush1.msra.mxu0 %v740
    %2131 = vmatprep.subr.mxu0 %v747
    %2132 = vmatpush1.msra.mxu0 %v746
    %2133 = vmatprep.mubr.f32.mxu0 %v1922
    %2134 = vmatmul.mubr.f32.gmra.mrb[0].mxu0 %v1921
    %v2135 = vpop.f32.mrb[0].mxu0
    %v2136 = vadd.f32 %v774, %v2135
    %v2137 = vpop.f32.mrb[0].mxu0
    %v2138 = vadd.f32 %v778, %v2137
    %2139 = vdwg.mxu0
    %v2140 = vld [vmem:[%s1859] sm:$0xff]
    %v2141 = vld [vmem:[%s1859 + $0x8] sm:$0xff]
    %v2142 = vld [vmem:[%s1859 + $0x10] sm:$0xff]
    %v2143 = vld [vmem:[%s1855 + $0x18] sm:$0xff]
    %v2144 = vld [vmem:[%s1855 + $0x20] sm:$0xff]
    %v2145 = vld [vmem:[%s1855 + $0x28] sm:$0xff]
    %v2146 = vadd.f32 %v2140, %v1994
    %v2147 = vxor.u32 %v2146, 2147483648
    %v2148 = vmul.f32 %v2147, 1.442695
    %v2149 = vpow.pop %v2148
    %v2150 = vadd.f32 %v2149, 1.0
    %v2151 = vrcp.pop %v2150
    %v2152 = vmul.f32 1.0, %v2151
    %v2153 = vadd.f32 %v2141, %v1996
    %v2154 = vxor.u32 %v2153, 2147483648
    %v2155 = vmul.f32 %v2154, 1.442695
    %v2156 = vpow.pop %v2155
    %v2157 = vadd.f32 %v2156, 1.0
    %v2158 = vrcp.pop %v2157
    %v2159 = vmul.f32 1.0, %v2158
    %v2160 = vmul.f32 %v2152, %v2065
    %v2161 = vadd.f32 %v2142, %v2160
    %v2162 = vtanh.pop %v2161
    %v2163 = vsub.f32 1.0, %v2159
    %v2164 = vmul.f32 %v2163, %v2162
    %v2165 = vmul.f32 %v2159, %v1921
    %v2166 = vadd.f32 %v2164, %v2165
    %v2167 = vadd.f32 %v2143, %v2067
    %v2168 = vxor.u32 %v2167, 2147483648
    %v2169 = vmul.f32 %v2168, 1.442695
    %v2170 = vpow.pop %v2169
    %v2171 = vadd.f32 %v2170, 1.0
    %v2172 = vrcp.pop %v2171
    %v2173 = vmul.f32 1.0, %v2172
    %v2174 = vadd.f32 %v2144, %v2136
    %v2175 = vxor.u32 %v2174, 2147483648
    %v2176 = vmul.f32 %v2175, 1.442695
    %v2177 = vpow.pop %v2176
    %v2178 = vadd.f32 %v2177, 1.0
    %v2179 = vrcp.pop %v2178
    %v2180 = vmul.f32 1.0, %v2179
    %v2181 = vmul.f32 %v2173, %v2138
    %v2182 = vadd.f32 %v2145, %v2181
    %v2183 = vtanh.pop %v2182
    %v2184 = vsub.f32 1.0, %v2180
    %v2185 = vmul.f32 %v2184, %v2183
    %v2186 = vmul.f32 %v2180, %v1922
    %v2187 = vadd.f32 %v2185, %v2186
    %v2188 = vsel %vm1924, 1, 0
    %2189 = vset.pattern.permute.xlu0 0
    %2190 = vperm.xlu0 %2189, %v2188
    %v2191 = vpop.permute.xlu0 %2190
    %vm2192 = vcmp.eq.s32.totalorder %v2191, 1
    %v2193 = vsel %vm2192, %v2166, 0.0
    %2194 = vst [vmem:[%s1919] sm:$0xff] %v2193
    %v2195 = vsel %vm1926, 1, 0
    %2196 = vset.pattern.permute.xlu0 0
    %2197 = vperm.xlu0 %2196, %v2195
    %v2198 = vpop.permute.xlu0 %2197
    %vm2199 = vcmp.eq.s32.totalorder %v2198, 1
    %v2200 = vsel %vm2199, %v2187, 0.0
    %2201 = vst [vmem:[%s1911 + $0x8] sm:$0xff] %v2200
    %v2202 = vsel %vm2192, %v2166, %v1921
    %v2203 = vsel %vm2199, %v2187, %v1922
    %v2204 = vld [vmem:[%s1352] sm:$0xff]
    %vm2205 = vcmp.gt.f32.partialorder %v2204, 0.0
    %v2206 = vld [vmem:[%s1349] sm:$0xff]
    %vm2207 = vcmp.gt.f32.partialorder %v2206, 0.0
    %2208 = vmatprep.subr.mxu0 %v557
    %2209 = vmatpush1.msra.mxu0 %v556
    %2210 = vmatprep.subr.mxu0 %v563
    %2211 = vmatpush1.msra.mxu0 %v562
    %2212 = vmatprep.subr.mxu0 %v569
    %2213 = vmatpush1.msra.mxu0 %v568
    %2214 = vmatprep.subr.mxu0 %v575
    %2215 = vmatpush1.msra.mxu0 %v574
    %2216 = vmatprep.subr.mxu0 %v581
    %2217 = vmatpush1.msra.mxu0 %v580
    %2218 = vmatprep.subr.mxu0 %v587
    %2219 = vmatpush1.msra.mxu0 %v586
    %2220 = vmatprep.subr.mxu0 %v593
    %2221 = vmatpush1.msra.mxu0 %v592
    %2222 = vmatprep.subr.mxu0 %v599
    %2223 = vmatpush1.msra.mxu0 %v598
    %2224 = vmatprep.subr.mxu0 %v605
    %2225 = vmatpush1.msra.mxu0 %v604
    %2226 = vmatprep.subr.mxu0 %v611
    %2227 = vmatpush1.msra.mxu0 %v610
    %2228 = vmatprep.subr.mxu0 %v617
    %2229 = vmatpush1.msra.mxu0 %v616
    %2230 = vmatprep.subr.mxu0 %v623
    %2231 = vmatpush1.msra.mxu0 %v622
    %2232 = vmatprep.subr.mxu0 %v629
    %2233 = vmatpush1.msra.mxu0 %v628
    %2234 = vmatprep.subr.mxu0 %v635
    %2235 = vmatpush1.msra.mxu0 %v634
    %2236 = vmatprep.subr.mxu0 %v641
    %2237 = vmatpush1.msra.mxu0 %v640
    %2238 = vmatprep.subr.mxu0 %v647
    %2239 = vmatpush1.msra.mxu0 %v646
    %2240 = vmatprep.subr.mxu0 %v653
    %2241 = vmatpush1.msra.mxu0 %v652
    %2242 = vmatprep.subr.mxu0 %v659
    %2243 = vmatpush1.msra.mxu0 %v658
    %2244 = vmatprep.subr.mxu0 %v665
    %2245 = vmatpush1.msra.mxu0 %v664
    %2246 = vmatprep.subr.mxu0 %v671
    %2247 = vmatpush1.msra.mxu0 %v670
    %2248 = vmatprep.subr.mxu0 %v677
    %2249 = vmatpush1.msra.mxu0 %v676
    %2250 = vmatprep.subr.mxu0 %v683
    %2251 = vmatpush1.msra.mxu0 %v682
    %2252 = vmatprep.subr.mxu0 %v689
    %2253 = vmatpush1.msra.mxu0 %v688
    %2254 = vmatprep.subr.mxu0 %v695
    %2255 = vmatpush1.msra.mxu0 %v694
    %2256 = vmatprep.subr.mxu0 %v701
    %2257 = vmatpush1.msra.mxu0 %v700
    %2258 = vmatprep.subr.mxu0 %v707
    %2259 = vmatpush1.msra.mxu0 %v706
    %2260 = vmatprep.subr.mxu0 %v713
    %2261 = vmatpush1.msra.mxu0 %v712
    %2262 = vmatprep.subr.mxu0 %v719
    %2263 = vmatpush1.msra.mxu0 %v718
    %2264 = vmatprep.subr.mxu0 %v725
    %2265 = vmatpush1.msra.mxu0 %v724
    %2266 = vmatprep.subr.mxu0 %v731
    %2267 = vmatpush1.msra.mxu0 %v730
    %2268 = vmatprep.subr.mxu0 %v737
    %2269 = vmatpush1.msra.mxu0 %v736
    %2270 = vmatprep.subr.mxu0 %v743
    %2271 = vmatpush1.msra.mxu0 %v742
    %2272 = vmatprep.mubr.f32.mxu0 %v2203
    %2273 = vmatmul.mubr.f32.gmra.mrb[0].mxu0 %v2202
    %v2274 = vpop.f32.mrb[0].mxu0
    %v2275 = vadd.f32 %v758, %v2274
    %v2276 = vpop.f32.mrb[0].mxu0
    %v2277 = vadd.f32 %v762, %v2276
    %2278 = vdwg.mxu0
    %2279 = vmatprep.subr.mxu0 %v559
    %2280 = vmatpush1.msra.mxu0 %v558
    %2281 = vmatprep.subr.mxu0 %v565
    %2282 = vmatpush1.msra.mxu0 %v564
    %2283 = vmatprep.subr.mxu0 %v571
    %2284 = vmatpush1.msra.mxu0 %v570
    %2285 = vmatprep.subr.mxu0 %v577
    %2286 = vmatpush1.msra.mxu0 %v576
    %2287 = vmatprep.subr.mxu0 %v583
    %2288 = vmatpush1.msra.mxu0 %v582
    %2289 = vmatprep.subr.mxu0 %v589
    %2290 = vmatpush1.msra.mxu0 %v588
    %2291 = vmatprep.subr.mxu0 %v595
    %2292 = vmatpush1.msra.mxu0 %v594
    %2293 = vmatprep.subr.mxu0 %v601
    %2294 = vmatpush1.msra.mxu0 %v600
    %2295 = vmatprep.subr.mxu0 %v607
    %2296 = vmatpush1.msra.mxu0 %v606
    %2297 = vmatprep.subr.mxu0 %v613
    %2298 = vmatpush1.msra.mxu0 %v612
    %2299 = vmatprep.subr.mxu0 %v619
    %2300 = vmatpush1.msra.mxu0 %v618
    %2301 = vmatprep.subr.mxu0 %v625
    %2302 = vmatpush1.msra.mxu0 %v624
    %2303 = vmatprep.subr.mxu0 %v631
    %2304 = vmatpush1.msra.mxu0 %v630
    %2305 = vmatprep.subr.mxu0 %v637
    %2306 = vmatpush1.msra.mxu0 %v636
    %2307 = vmatprep.subr.mxu0 %v643
    %2308 = vmatpush1.msra.mxu0 %v642
    %2309 = vmatprep.subr.mxu0 %v649
    %2310 = vmatpush1.msra.mxu0 %v648
    %2311 = vmatprep.subr.mxu0 %v655
    %2312 = vmatpush1.msra.mxu0 %v654
    %2313 = vmatprep.subr.mxu0 %v661
    %2314 = vmatpush1.msra.mxu0 %v660
    %2315 = vmatprep.subr.mxu0 %v667
    %2316 = vmatpush1.msra.mxu0 %v666
    %2317 = vmatprep.subr.mxu0 %v673
    %2318 = vmatpush1.msra.mxu0 %v672
    %2319 = vmatprep.subr.mxu0 %v679
    %2320 = vmatpush1.msra.mxu0 %v678
    %2321 = vmatprep.subr.mxu0 %v685
    %2322 = vmatpush1.msra.mxu0 %v684
    %2323 = vmatprep.subr.mxu0 %v691
    %2324 = vmatpush1.msra.mxu0 %v690
    %2325 = vmatprep.subr.mxu0 %v697
    %2326 = vmatpush1.msra.mxu0 %v696
    %2327 = vmatprep.subr.mxu0 %v703
    %2328 = vmatpush1.msra.mxu0 %v702
    %2329 = vmatprep.subr.mxu0 %v709
    %2330 = vmatpush1.msra.mxu0 %v708
    %2331 = vmatprep.subr.mxu0 %v715
    %2332 = vmatpush1.msra.mxu0 %v714
    %2333 = vmatprep.subr.mxu0 %v721
    %2334 = vmatpush1.msra.mxu0 %v720
    %2335 = vmatprep.subr.mxu0 %v727
    %2336 = vmatpush1.msra.mxu0 %v726
    %2337 = vmatprep.subr.mxu0 %v733
    %2338 = vmatpush1.msra.mxu0 %v732
    %2339 = vmatprep.subr.mxu0 %v739
    %2340 = vmatpush1.msra.mxu0 %v738
    %2341 = vmatprep.subr.mxu0 %v745
    %2342 = vmatpush1.msra.mxu0 %v744
    %2343 = vmatprep.mubr.f32.mxu0 %v2203
    %2344 = vmatmul.mubr.f32.gmra.mrb[0].mxu0 %v2202
    %v2345 = vpop.f32.mrb[0].mxu0
    %v2346 = vadd.f32 %v766, %v2345
    %v2347 = vpop.f32.mrb[0].mxu0
    %v2348 = vadd.f32 %v770, %v2347
    %2349 = vdwg.mxu0
    %2350 = vmatprep.subr.mxu0 %v561
    %2351 = vmatpush1.msra.mxu0 %v560
    %2352 = vmatprep.subr.mxu0 %v567
    %2353 = vmatpush1.msra.mxu0 %v566
    %2354 = vmatprep.subr.mxu0 %v573
    %2355 = vmatpush1.msra.mxu0 %v572
    %2356 = vmatprep.subr.mxu0 %v579
    %2357 = vmatpush1.msra.mxu0 %v578
    %2358 = vmatprep.subr.mxu0 %v585
    %2359 = vmatpush1.msra.mxu0 %v584
    %2360 = vmatprep.subr.mxu0 %v591
    %2361 = vmatpush1.msra.mxu0 %v590
    %2362 = vmatprep.subr.mxu0 %v597
    %2363 = vmatpush1.msra.mxu0 %v596
    %2364 = vmatprep.subr.mxu0 %v603
    %2365 = vmatpush1.msra.mxu0 %v602
    %2366 = vmatprep.subr.mxu0 %v609
    %2367 = vmatpush1.msra.mxu0 %v608
    %2368 = vmatprep.subr.mxu0 %v615
    %2369 = vmatpush1.msra.mxu0 %v614
    %2370 = vmatprep.subr.mxu0 %v621
    %2371 = vmatpush1.msra.mxu0 %v620
    %2372 = vmatprep.subr.mxu0 %v627
    %2373 = vmatpush1.msra.mxu0 %v626
    %2374 = vmatprep.subr.mxu0 %v633
    %2375 = vmatpush1.msra.mxu0 %v632
    %2376 = vmatprep.subr.mxu0 %v639
    %2377 = vmatpush1.msra.mxu0 %v638
    %2378 = vmatprep.subr.mxu0 %v645
    %2379 = vmatpush1.msra.mxu0 %v644
    %2380 = vmatprep.subr.mxu0 %v651
    %2381 = vmatpush1.msra.mxu0 %v650
    %2382 = vmatprep.subr.mxu0 %v657
    %2383 = vmatpush1.msra.mxu0 %v656
    %2384 = vmatprep.subr.mxu0 %v663
    %2385 = vmatpush1.msra.mxu0 %v662
    %2386 = vmatprep.subr.mxu0 %v669
    %2387 = vmatpush1.msra.mxu0 %v668
    %2388 = vmatprep.subr.mxu0 %v675
    %2389 = vmatpush1.msra.mxu0 %v674
    %2390 = vmatprep.subr.mxu0 %v681
    %2391 = vmatpush1.msra.mxu0 %v680
    %2392 = vmatprep.subr.mxu0 %v687
    %2393 = vmatpush1.msra.mxu0 %v686
    %2394 = vmatprep.subr.mxu0 %v693
    %2395 = vmatpush1.msra.mxu0 %v692
    %2396 = vmatprep.subr.mxu0 %v699
    %2397 = vmatpush1.msra.mxu0 %v698
    %2398 = vmatprep.subr.mxu0 %v705
    %2399 = vmatpush1.msra.mxu0 %v704
    %2400 = vmatprep.subr.mxu0 %v711
    %2401 = vmatpush1.msra.mxu0 %v710
    %2402 = vmatprep.subr.mxu0 %v717
    %2403 = vmatpush1.msra.mxu0 %v716
    %2404 = vmatprep.subr.mxu0 %v723
    %2405 = vmatpush1.msra.mxu0 %v722
    %2406 = vmatprep.subr.mxu0 %v729
    %2407 = vmatpush1.msra.mxu0 %v728
    %2408 = vmatprep.subr.mxu0 %v735
    %2409 = vmatpush1.msra.mxu0 %v734
    %2410 = vmatprep.subr.mxu0 %v741
    %2411 = vmatpush1.msra.mxu0 %v740
    %2412 = vmatprep.subr.mxu0 %v747
    %2413 = vmatpush1.msra.mxu0 %v746
    %2414 = vmatprep.mubr.f32.mxu0 %v2203
    %2415 = vmatmul.mubr.f32.gmra.mrb[0].mxu0 %v2202
    %v2416 = vpop.f32.mrb[0].mxu0
    %v2417 = vadd.f32 %v774, %v2416
    %v2418 = vpop.f32.mrb[0].mxu0
    %v2419 = vadd.f32 %v778, %v2418
    %2420 = vdwg.mxu0
    %v2421 = vld [vmem:[%s1572] sm:$0xff]
    %v2422 = vld [vmem:[%s1572 + $0x8] sm:$0xff]
    %v2423 = vld [vmem:[%s1572 + $0x10] sm:$0xff]
    %v2424 = vld [vmem:[%s1568 + $0x18] sm:$0xff]
    %v2425 = vld [vmem:[%s1568 + $0x20] sm:$0xff]
    %v2426 = vld [vmem:[%s1568 + $0x28] sm:$0xff]
    %v2427 = vadd.f32 %v2421, %v2275
    %v2428 = vxor.u32 %v2427, 2147483648
    %v2429 = vmul.f32 %v2428, 1.442695
    %v2430 = vpow.pop %v2429
    %v2431 = vadd.f32 %v2430, 1.0
    %v2432 = vrcp.pop %v2431
    %v2433 = vmul.f32 1.0, %v2432
    %v2434 = vadd.f32 %v2422, %v2277
    %v2435 = vxor.u32 %v2434, 2147483648
    %v2436 = vmul.f32 %v2435, 1.442695
    %v2437 = vpow.pop %v2436
    %v2438 = vadd.f32 %v2437, 1.0
    %v2439 = vrcp.pop %v2438
    %v2440 = vmul.f32 1.0, %v2439
    %v2441 = vmul.f32 %v2433, %v2346
    %v2442 = vadd.f32 %v2423, %v2441
    %v2443 = vtanh.pop %v2442
    %v2444 = vsub.f32 1.0, %v2440
    %v2445 = vmul.f32 %v2444, %v2443
    %v2446 = vmul.f32 %v2440, %v2202
    %v2447 = vadd.f32 %v2445, %v2446
    %v2448 = vadd.f32 %v2424, %v2348
    %v2449 = vxor.u32 %v2448, 2147483648
    %v2450 = vmul.f32 %v2449, 1.442695
    %v2451 = vpow.pop %v2450
    %v2452 = vadd.f32 %v2451, 1.0
    %v2453 = vrcp.pop %v2452
    %v2454 = vmul.f32 1.0, %v2453
    %v2455 = vadd.f32 %v2425, %v2417
    %v2456 = vxor.u32 %v2455, 2147483648
    %v2457 = vmul.f32 %v2456, 1.442695
    %v2458 = vpow.pop %v2457
    %v2459 = vadd.f32 %v2458, 1.0
    %v2460 = vrcp.pop %v2459
    %v2461 = vmul.f32 1.0, %v2460
    %v2462 = vmul.f32 %v2454, %v2419
    %v2463 = vadd.f32 %v2426, %v2462
    %v2464 = vtanh.pop %v2463
    %v2465 = vsub.f32 1.0, %v2461
    %v2466 = vmul.f32 %v2465, %v2464
    %v2467 = vmul.f32 %v2461, %v2203
    %v2468 = vadd.f32 %v2466, %v2467
    %v2469 = vsel %vm2205, 1, 0
    %2470 = vset.pattern.permute.xlu0 0
    %2471 = vperm.xlu0 %2470, %v2469
    %v2472 = vpop.permute.xlu0 %2471
    %vm2473 = vcmp.eq.s32.totalorder %v2472, 1
    %v2474 = vsel %vm2473, %v2447, 0.0
    %2475 = vst [vmem:[%s1632] sm:$0xff] %v2474
    %v2476 = vsel %vm2207, 1, 0
    %2477 = vset.pattern.permute.xlu0 0
    %2478 = vperm.xlu0 %2477, %v2476
    %v2479 = vpop.permute.xlu0 %2478
    %vm2480 = vcmp.eq.s32.totalorder %v2479, 1
    %v2481 = vsel %vm2480, %v2468, 0.0
    %2482 = vst [vmem:[%s1624 + $0x8] sm:$0xff] %v2481
    %v2483 = vsel %vm2473, %v2447, %v2202
    %v2484 = vsel %vm2480, %v2468, %v2203
    %v2485 = vld [vmem:[%s1065] sm:$0xff]
    %vm2486 = vcmp.gt.f32.partialorder %v2485, 0.0
    %v2487 = vld [vmem:[%s1062] sm:$0xff]
    %vm2488 = vcmp.gt.f32.partialorder %v2487, 0.0
    %2489 = vmatprep.subr.mxu0 %v557
    %2490 = vmatpush1.msra.mxu0 %v556
    %2491 = vmatprep.subr.mxu0 %v563
    %2492 = vmatpush1.msra.mxu0 %v562
    %2493 = vmatprep.subr.mxu0 %v569
    %2494 = vmatpush1.msra.mxu0 %v568
    %2495 = vmatprep.subr.mxu0 %v575
    %2496 = vmatpush1.msra.mxu0 %v574
    %2497 = vmatprep.subr.mxu0 %v581
    %2498 = vmatpush1.msra.mxu0 %v580
    %2499 = vmatprep.subr.mxu0 %v587
    %2500 = vmatpush1.msra.mxu0 %v586
    %2501 = vmatprep.subr.mxu0 %v593
    %2502 = vmatpush1.msra.mxu0 %v592
    %2503 = vmatprep.subr.mxu0 %v599
    %2504 = vmatpush1.msra.mxu0 %v598
    %2505 = vmatprep.subr.mxu0 %v605
    %2506 = vmatpush1.msra.mxu0 %v604
    %2507 = vmatprep.subr.mxu0 %v611
    %2508 = vmatpush1.msra.mxu0 %v610
    %2509 = vmatprep.subr.mxu0 %v617
    %2510 = vmatpush1.msra.mxu0 %v616
    %2511 = vmatprep.subr.mxu0 %v623
    %2512 = vmatpush1.msra.mxu0 %v622
    %2513 = vmatprep.subr.mxu0 %v629
    %2514 = vmatpush1.msra.mxu0 %v628
    %2515 = vmatprep.subr.mxu0 %v635
    %2516 = vmatpush1.msra.mxu0 %v634
    %2517 = vmatprep.subr.mxu0 %v641
    %2518 = vmatpush1.msra.mxu0 %v640
    %2519 = vmatprep.subr.mxu0 %v647
    %2520 = vmatpush1.msra.mxu0 %v646
    %2521 = vmatprep.subr.mxu0 %v653
    %2522 = vmatpush1.msra.mxu0 %v652
    %2523 = vmatprep.subr.mxu0 %v659
    %2524 = vmatpush1.msra.mxu0 %v658
    %2525 = vmatprep.subr.mxu0 %v665
    %2526 = vmatpush1.msra.mxu0 %v664
    %2527 = vmatprep.subr.mxu0 %v671
    %2528 = vmatpush1.msra.mxu0 %v670
    %2529 = vmatprep.subr.mxu0 %v677
    %2530 = vmatpush1.msra.mxu0 %v676
    %2531 = vmatprep.subr.mxu0 %v683
    %2532 = vmatpush1.msra.mxu0 %v682
    %2533 = vmatprep.subr.mxu0 %v689
    %2534 = vmatpush1.msra.mxu0 %v688
    %2535 = vmatprep.subr.mxu0 %v695
    %2536 = vmatpush1.msra.mxu0 %v694
    %2537 = vmatprep.subr.mxu0 %v701
    %2538 = vmatpush1.msra.mxu0 %v700
    %2539 = vmatprep.subr.mxu0 %v707
    %2540 = vmatpush1.msra.mxu0 %v706
    %2541 = vmatprep.subr.mxu0 %v713
    %2542 = vmatpush1.msra.mxu0 %v712
    %2543 = vmatprep.subr.mxu0 %v719
    %2544 = vmatpush1.msra.mxu0 %v718
    %2545 = vmatprep.subr.mxu0 %v725
    %2546 = vmatpush1.msra.mxu0 %v724
    %2547 = vmatprep.subr.mxu0 %v731
    %2548 = vmatpush1.msra.mxu0 %v730
    %2549 = vmatprep.subr.mxu0 %v737
    %2550 = vmatpush1.msra.mxu0 %v736
    %2551 = vmatprep.subr.mxu0 %v743
    %2552 = vmatpush1.msra.mxu0 %v742
    %2553 = vmatprep.mubr.f32.mxu0 %v2484
    %2554 = vmatmul.mubr.f32.gmra.mrb[0].mxu0 %v2483
    %v2555 = vpop.f32.mrb[0].mxu0
    %v2556 = vadd.f32 %v758, %v2555
    %v2557 = vpop.f32.mrb[0].mxu0
    %v2558 = vadd.f32 %v762, %v2557
    %2559 = vdwg.mxu0
    %2560 = vmatprep.subr.mxu0 %v559
    %2561 = vmatpush1.msra.mxu0 %v558
    %2562 = vmatprep.subr.mxu0 %v565
    %2563 = vmatpush1.msra.mxu0 %v564
    %2564 = vmatprep.subr.mxu0 %v571
    %2565 = vmatpush1.msra.mxu0 %v570
    %2566 = vmatprep.subr.mxu0 %v577
    %2567 = vmatpush1.msra.mxu0 %v576
    %2568 = vmatprep.subr.mxu0 %v583
    %2569 = vmatpush1.msra.mxu0 %v582
    %2570 = vmatprep.subr.mxu0 %v589
    %2571 = vmatpush1.msra.mxu0 %v588
    %2572 = vmatprep.subr.mxu0 %v595
    %2573 = vmatpush1.msra.mxu0 %v594
    %2574 = vmatprep.subr.mxu0 %v601
    %2575 = vmatpush1.msra.mxu0 %v600
    %2576 = vmatprep.subr.mxu0 %v607
    %2577 = vmatpush1.msra.mxu0 %v606
    %2578 = vmatprep.subr.mxu0 %v613
    %2579 = vmatpush1.msra.mxu0 %v612
    %2580 = vmatprep.subr.mxu0 %v619
    %2581 = vmatpush1.msra.mxu0 %v618
    %2582 = vmatprep.subr.mxu0 %v625
    %2583 = vmatpush1.msra.mxu0 %v624
    %2584 = vmatprep.subr.mxu0 %v631
    %2585 = vmatpush1.msra.mxu0 %v630
    %2586 = vmatprep.subr.mxu0 %v637
    %2587 = vmatpush1.msra.mxu0 %v636
    %2588 = vmatprep.subr.mxu0 %v643
    %2589 = vmatpush1.msra.mxu0 %v642
    %2590 = vmatprep.subr.mxu0 %v649
    %2591 = vmatpush1.msra.mxu0 %v648
    %2592 = vmatprep.subr.mxu0 %v655
    %2593 = vmatpush1.msra.mxu0 %v654
    %2594 = vmatprep.subr.mxu0 %v661
    %2595 = vmatpush1.msra.mxu0 %v660
    %2596 = vmatprep.subr.mxu0 %v667
    %2597 = vmatpush1.msra.mxu0 %v666
    %2598 = vmatprep.subr.mxu0 %v673
    %2599 = vmatpush1.msra.mxu0 %v672
    %2600 = vmatprep.subr.mxu0 %v679
    %2601 = vmatpush1.msra.mxu0 %v678
    %2602 = vmatprep.subr.mxu0 %v685
    %2603 = vmatpush1.msra.mxu0 %v684
    %2604 = vmatprep.subr.mxu0 %v691
    %2605 = vmatpush1.msra.mxu0 %v690
    %2606 = vmatprep.subr.mxu0 %v697
    %2607 = vmatpush1.msra.mxu0 %v696
    %2608 = vmatprep.subr.mxu0 %v703
    %2609 = vmatpush1.msra.mxu0 %v702
    %2610 = vmatprep.subr.mxu0 %v709
    %2611 = vmatpush1.msra.mxu0 %v708
    %2612 = vmatprep.subr.mxu0 %v715
    %2613 = vmatpush1.msra.mxu0 %v714
    %2614 = vmatprep.subr.mxu0 %v721
    %2615 = vmatpush1.msra.mxu0 %v720
    %2616 = vmatprep.subr.mxu0 %v727
    %2617 = vmatpush1.msra.mxu0 %v726
    %2618 = vmatprep.subr.mxu0 %v733
    %2619 = vmatpush1.msra.mxu0 %v732
    %2620 = vmatprep.subr.mxu0 %v739
    %2621 = vmatpush1.msra.mxu0 %v738
    %2622 = vmatprep.subr.mxu0 %v745
    %2623 = vmatpush1.msra.mxu0 %v744
    %2624 = vmatprep.mubr.f32.mxu0 %v2484
    %2625 = vmatmul.mubr.f32.gmra.mrb[0].mxu0 %v2483
    %v2626 = vpop.f32.mrb[0].mxu0
    %v2627 = vadd.f32 %v766, %v2626
    %v2628 = vpop.f32.mrb[0].mxu0
    %v2629 = vadd.f32 %v770, %v2628
    %2630 = vdwg.mxu0
    %2631 = vmatprep.subr.mxu0 %v561
    %2632 = vmatpush1.msra.mxu0 %v560
    %2633 = vmatprep.subr.mxu0 %v567
    %2634 = vmatpush1.msra.mxu0 %v566
    %2635 = vmatprep.subr.mxu0 %v573
    %2636 = vmatpush1.msra.mxu0 %v572
    %2637 = vmatprep.subr.mxu0 %v579
    %2638 = vmatpush1.msra.mxu0 %v578
    %2639 = vmatprep.subr.mxu0 %v585
    %2640 = vmatpush1.msra.mxu0 %v584
    %2641 = vmatprep.subr.mxu0 %v591
    %2642 = vmatpush1.msra.mxu0 %v590
    %2643 = vmatprep.subr.mxu0 %v597
    %2644 = vmatpush1.msra.mxu0 %v596
    %2645 = vmatprep.subr.mxu0 %v603
    %2646 = vmatpush1.msra.mxu0 %v602
    %2647 = vmatprep.subr.mxu0 %v609
    %2648 = vmatpush1.msra.mxu0 %v608
    %2649 = vmatprep.subr.mxu0 %v615
    %2650 = vmatpush1.msra.mxu0 %v614
    %2651 = vmatprep.subr.mxu0 %v621
    %2652 = vmatpush1.msra.mxu0 %v620
    %2653 = vmatprep.subr.mxu0 %v627
    %2654 = vmatpush1.msra.mxu0 %v626
    %2655 = vmatprep.subr.mxu0 %v633
    %2656 = vmatpush1.msra.mxu0 %v632
    %2657 = vmatprep.subr.mxu0 %v639
    %2658 = vmatpush1.msra.mxu0 %v638
    %2659 = vmatprep.subr.mxu0 %v645
    %2660 = vmatpush1.msra.mxu0 %v644
    %2661 = vmatprep.subr.mxu0 %v651
    %2662 = vmatpush1.msra.mxu0 %v650
    %2663 = vmatprep.subr.mxu0 %v657
    %2664 = vmatpush1.msra.mxu0 %v656
    %2665 = vmatprep.subr.mxu0 %v663
    %2666 = vmatpush1.msra.mxu0 %v662
    %2667 = vmatprep.subr.mxu0 %v669
    %2668 = vmatpush1.msra.mxu0 %v668
    %2669 = vmatprep.subr.mxu0 %v675
    %2670 = vmatpush1.msra.mxu0 %v674
    %2671 = vmatprep.subr.mxu0 %v681
    %2672 = vmatpush1.msra.mxu0 %v680
    %2673 = vmatprep.subr.mxu0 %v687
    %2674 = vmatpush1.msra.mxu0 %v686
    %2675 = vmatprep.subr.mxu0 %v693
    %2676 = vmatpush1.msra.mxu0 %v692
    %2677 = vmatprep.subr.mxu0 %v699
    %2678 = vmatpush1.msra.mxu0 %v698
    %2679 = vmatprep.subr.mxu0 %v705
    %2680 = vmatpush1.msra.mxu0 %v704
    %2681 = vmatprep.subr.mxu0 %v711
    %2682 = vmatpush1.msra.mxu0 %v710
    %2683 = vmatprep.subr.mxu0 %v717
    %2684 = vmatpush1.msra.mxu0 %v716
    %2685 = vmatprep.subr.mxu0 %v723
    %2686 = vmatpush1.msra.mxu0 %v722
    %2687 = vmatprep.subr.mxu0 %v729
    %2688 = vmatpush1.msra.mxu0 %v728
    %2689 = vmatprep.subr.mxu0 %v735
    %2690 = vmatpush1.msra.mxu0 %v734
    %2691 = vmatprep.subr.mxu0 %v741
    %2692 = vmatpush1.msra.mxu0 %v740
    %2693 = vmatprep.subr.mxu0 %v747
    %2694 = vmatpush1.msra.mxu0 %v746
    %2695 = vmatprep.mubr.f32.mxu0 %v2484
    %2696 = vmatmul.mubr.f32.gmra.mrb[0].mxu0 %v2483
    %v2697 = vpop.f32.mrb[0].mxu0
    %v2698 = vadd.f32 %v774, %v2697
    %v2699 = vpop.f32.mrb[0].mxu0
    %v2700 = vadd.f32 %v778, %v2699
    %2701 = vdwg.mxu0
    %v2702 = vld [vmem:[%s1285] sm:$0xff]
    %v2703 = vld [vmem:[%s1285 + $0x8] sm:$0xff]
    %v2704 = vld [vmem:[%s1285 + $0x10] sm:$0xff]
    %v2705 = vld [vmem:[%s1281 + $0x18] sm:$0xff]
    %v2706 = vld [vmem:[%s1281 + $0x20] sm:$0xff]
    %v2707 = vld [vmem:[%s1281 + $0x28] sm:$0xff]
    %v2708 = vadd.f32 %v2702, %v2556
    %v2709 = vxor.u32 %v2708, 2147483648
    %v2710 = vmul.f32 %v2709, 1.442695
    %v2711 = vpow.pop %v2710
    %v2712 = vadd.f32 %v2711, 1.0
    %v2713 = vrcp.pop %v2712
    %v2714 = vmul.f32 1.0, %v2713
    %v2715 = vadd.f32 %v2703, %v2558
    %v2716 = vxor.u32 %v2715, 2147483648
    %v2717 = vmul.f32 %v2716, 1.442695
    %v2718 = vpow.pop %v2717
    %v2719 = vadd.f32 %v2718, 1.0
    %v2720 = vrcp.pop %v2719
    %v2721 = vmul.f32 1.0, %v2720
    %v2722 = vmul.f32 %v2714, %v2627
    %v2723 = vadd.f32 %v2704, %v2722
    %v2724 = vtanh.pop %v2723
    %v2725 = vsub.f32 1.0, %v2721
    %v2726 = vmul.f32 %v2725, %v2724
    %v2727 = vmul.f32 %v2721, %v2483
    %v2728 = vadd.f32 %v2726, %v2727
    %v2729 = vadd.f32 %v2705, %v2629
    %v2730 = vxor.u32 %v2729, 2147483648
    %v2731 = vmul.f32 %v2730, 1.442695
    %v2732 = vpow.pop %v2731
    %v2733 = vadd.f32 %v2732, 1.0
    %v2734 = vrcp.pop %v2733
    %v2735 = vmul.f32 1.0, %v2734
    %v2736 = vadd.f32 %v2706, %v2698
    %v2737 = vxor.u32 %v2736, 2147483648
    %v2738 = vmul.f32 %v2737, 1.442695
    %v2739 = vpow.pop %v2738
    %v2740 = vadd.f32 %v2739, 1.0
    %v2741 = vrcp.pop %v2740
    %v2742 = vmul.f32 1.0, %v2741
    %v2743 = vmul.f32 %v2735, %v2700
    %v2744 = vadd.f32 %v2707, %v2743
    %v2745 = vtanh.pop %v2744
    %v2746 = vsub.f32 1.0, %v2742
    %v2747 = vmul.f32 %v2746, %v2745
    %v2748 = vmul.f32 %v2742, %v2484
    %v2749 = vadd.f32 %v2747, %v2748
    %v2750 = vsel %vm2486, 1, 0
    %2751 = vset.pattern.permute.xlu0 0
    %2752 = vperm.xlu0 %2751, %v2750
    %v2753 = vpop.permute.xlu0 %2752
    %vm2754 = vcmp.eq.s32.totalorder %v2753, 1
    %v2755 = vsel %vm2754, %v2728, 0.0
    %2756 = vst [vmem:[%s1345] sm:$0xff] %v2755
    %v2757 = vsel %vm2488, 1, 0
    %2758 = vset.pattern.permute.xlu0 0
    %2759 = vperm.xlu0 %2758, %v2757
    %v2760 = vpop.permute.xlu0 %2759
    %vm2761 = vcmp.eq.s32.totalorder %v2760, 1
    %v2762 = vsel %vm2761, %v2749, 0.0
    %2763 = vst [vmem:[%s1337 + $0x8] sm:$0xff] %v2762
    %v2764 = vsel %vm2754, %v2728, %v2483
    %v2765 = vsel %vm2761, %v2749, %v2484
    %v2766 = vld [vmem:[%s751] sm:$0xff]
    %vm2767 = vcmp.gt.f32.partialorder %v2766, 0.0
    %v2768 = vld [vmem:[%s1] sm:$0xff]
    %vm2769 = vcmp.gt.f32.partialorder %v2768, 0.0
    %2770 = vmatprep.subr.mxu0 %v557
    %2771 = vmatpush1.msra.mxu0 %v556
    %2772 = vmatprep.subr.mxu0 %v563
    %2773 = vmatpush1.msra.mxu0 %v562
    %2774 = vmatprep.subr.mxu0 %v569
    %2775 = vmatpush1.msra.mxu0 %v568
    %2776 = vmatprep.subr.mxu0 %v575
    %2777 = vmatpush1.msra.mxu0 %v574
    %2778 = vmatprep.subr.mxu0 %v581
    %2779 = vmatpush1.msra.mxu0 %v580
    %2780 = vmatprep.subr.mxu0 %v587
    %2781 = vmatpush1.msra.mxu0 %v586
    %2782 = vmatprep.subr.mxu0 %v593
    %2783 = vmatpush1.msra.mxu0 %v592
    %2784 = vmatprep.subr.mxu0 %v599
    %2785 = vmatpush1.msra.mxu0 %v598
    %2786 = vmatprep.subr.mxu0 %v605
    %2787 = vmatpush1.msra.mxu0 %v604
    %2788 = vmatprep.subr.mxu0 %v611
    %2789 = vmatpush1.msra.mxu0 %v610
    %2790 = vmatprep.subr.mxu0 %v617
    %2791 = vmatpush1.msra.mxu0 %v616
    %2792 = vmatprep.subr.mxu0 %v623
    %2793 = vmatpush1.msra.mxu0 %v622
    %2794 = vmatprep.subr.mxu0 %v629
    %2795 = vmatpush1.msra.mxu0 %v628
    %2796 = vmatprep.subr.mxu0 %v635
    %2797 = vmatpush1.msra.mxu0 %v634
    %2798 = vmatprep.subr.mxu0 %v641
    %2799 = vmatpush1.msra.mxu0 %v640
    %2800 = vmatprep.subr.mxu0 %v647
    %2801 = vmatpush1.msra.mxu0 %v646
    %2802 = vmatprep.subr.mxu0 %v653
    %2803 = vmatpush1.msra.mxu0 %v652
    %2804 = vmatprep.subr.mxu0 %v659
    %2805 = vmatpush1.msra.mxu0 %v658
    %2806 = vmatprep.subr.mxu0 %v665
    %2807 = vmatpush1.msra.mxu0 %v664
    %2808 = vmatprep.subr.mxu0 %v671
    %2809 = vmatpush1.msra.mxu0 %v670
    %2810 = vmatprep.subr.mxu0 %v677
    %2811 = vmatpush1.msra.mxu0 %v676
    %2812 = vmatprep.subr.mxu0 %v683
    %2813 = vmatpush1.msra.mxu0 %v682
    %2814 = vmatprep.subr.mxu0 %v689
    %2815 = vmatpush1.msra.mxu0 %v688
    %2816 = vmatprep.subr.mxu0 %v695
    %2817 = vmatpush1.msra.mxu0 %v694
    %2818 = vmatprep.subr.mxu0 %v701
    %2819 = vmatpush1.msra.mxu0 %v700
    %2820 = vmatprep.subr.mxu0 %v707
    %2821 = vmatpush1.msra.mxu0 %v706
    %2822 = vmatprep.subr.mxu0 %v713
    %2823 = vmatpush1.msra.mxu0 %v712
    %2824 = vmatprep.subr.mxu0 %v719
    %2825 = vmatpush1.msra.mxu0 %v718
    %2826 = vmatprep.subr.mxu0 %v725
    %2827 = vmatpush1.msra.mxu0 %v724
    %2828 = vmatprep.subr.mxu0 %v731
    %2829 = vmatpush1.msra.mxu0 %v730
    %2830 = vmatprep.subr.mxu0 %v737
    %2831 = vmatpush1.msra.mxu0 %v736
    %2832 = vmatprep.subr.mxu0 %v743
    %2833 = vmatpush1.msra.mxu0 %v742
    %2834 = vmatprep.mubr.f32.mxu0 %v2765
    %2835 = vmatmul.mubr.f32.gmra.mrb[0].mxu0 %v2764
    %v2836 = vpop.f32.mrb[0].mxu0
    %v2837 = vadd.f32 %v758, %v2836
    %v2838 = vpop.f32.mrb[0].mxu0
    %v2839 = vadd.f32 %v762, %v2838
    %2840 = vdwg.mxu0
    %2841 = vmatprep.subr.mxu0 %v559
    %2842 = vmatpush1.msra.mxu0 %v558
    %2843 = vmatprep.subr.mxu0 %v565
    %2844 = vmatpush1.msra.mxu0 %v564
    %2845 = vmatprep.subr.mxu0 %v571
    %2846 = vmatpush1.msra.mxu0 %v570
    %2847 = vmatprep.subr.mxu0 %v577
    %2848 = vmatpush1.msra.mxu0 %v576
    %2849 = vmatprep.subr.mxu0 %v583
    %2850 = vmatpush1.msra.mxu0 %v582
    %2851 = vmatprep.subr.mxu0 %v589
    %2852 = vmatpush1.msra.mxu0 %v588
    %2853 = vmatprep.subr.mxu0 %v595
    %2854 = vmatpush1.msra.mxu0 %v594
    %2855 = vmatprep.subr.mxu0 %v601
    %2856 = vmatpush1.msra.mxu0 %v600
    %2857 = vmatprep.subr.mxu0 %v607
    %2858 = vmatpush1.msra.mxu0 %v606
    %2859 = vmatprep.subr.mxu0 %v613
    %2860 = vmatpush1.msra.mxu0 %v612
    %2861 = vmatprep.subr.mxu0 %v619
    %2862 = vmatpush1.msra.mxu0 %v618
    %2863 = vmatprep.subr.mxu0 %v625
    %2864 = vmatpush1.msra.mxu0 %v624
    %2865 = vmatprep.subr.mxu0 %v631
    %2866 = vmatpush1.msra.mxu0 %v630
    %2867 = vmatprep.subr.mxu0 %v637
    %2868 = vmatpush1.msra.mxu0 %v636
    %2869 = vmatprep.subr.mxu0 %v643
    %2870 = vmatpush1.msra.mxu0 %v642
    %2871 = vmatprep.subr.mxu0 %v649
    %2872 = vmatpush1.msra.mxu0 %v648
    %2873 = vmatprep.subr.mxu0 %v655
    %2874 = vmatpush1.msra.mxu0 %v654
    %2875 = vmatprep.subr.mxu0 %v661
    %2876 = vmatpush1.msra.mxu0 %v660
    %2877 = vmatprep.subr.mxu0 %v667
    %2878 = vmatpush1.msra.mxu0 %v666
    %2879 = vmatprep.subr.mxu0 %v673
    %2880 = vmatpush1.msra.mxu0 %v672
    %2881 = vmatprep.subr.mxu0 %v679
    %2882 = vmatpush1.msra.mxu0 %v678
    %2883 = vmatprep.subr.mxu0 %v685
    %2884 = vmatpush1.msra.mxu0 %v684
    %2885 = vmatprep.subr.mxu0 %v691
    %2886 = vmatpush1.msra.mxu0 %v690
    %2887 = vmatprep.subr.mxu0 %v697
    %2888 = vmatpush1.msra.mxu0 %v696
    %2889 = vmatprep.subr.mxu0 %v703
    %2890 = vmatpush1.msra.mxu0 %v702
    %2891 = vmatprep.subr.mxu0 %v709
    %2892 = vmatpush1.msra.mxu0 %v708
    %2893 = vmatprep.subr.mxu0 %v715
    %2894 = vmatpush1.msra.mxu0 %v714
    %2895 = vmatprep.subr.mxu0 %v721
    %2896 = vmatpush1.msra.mxu0 %v720
    %2897 = vmatprep.subr.mxu0 %v727
    %2898 = vmatpush1.msra.mxu0 %v726
    %2899 = vmatprep.subr.mxu0 %v733
    %2900 = vmatpush1.msra.mxu0 %v732
    %2901 = vmatprep.subr.mxu0 %v739
    %2902 = vmatpush1.msra.mxu0 %v738
    %2903 = vmatprep.subr.mxu0 %v745
    %2904 = vmatpush1.msra.mxu0 %v744
    %2905 = vmatprep.mubr.f32.mxu0 %v2765
    %2906 = vmatmul.mubr.f32.gmra.mrb[0].mxu0 %v2764
    %v2907 = vpop.f32.mrb[0].mxu0
    %v2908 = vadd.f32 %v766, %v2907
    %v2909 = vpop.f32.mrb[0].mxu0
    %v2910 = vadd.f32 %v770, %v2909
    %2911 = vdwg.mxu0
    %2912 = vmatprep.subr.mxu0 %v561
    %2913 = vmatpush1.msra.mxu0 %v560
    %2914 = vmatprep.subr.mxu0 %v567
    %2915 = vmatpush1.msra.mxu0 %v566
    %2916 = vmatprep.subr.mxu0 %v573
    %2917 = vmatpush1.msra.mxu0 %v572
    %2918 = vmatprep.subr.mxu0 %v579
    %2919 = vmatpush1.msra.mxu0 %v578
    %2920 = vmatprep.subr.mxu0 %v585
    %2921 = vmatpush1.msra.mxu0 %v584
    %2922 = vmatprep.subr.mxu0 %v591
    %2923 = vmatpush1.msra.mxu0 %v590
    %2924 = vmatprep.subr.mxu0 %v597
    %2925 = vmatpush1.msra.mxu0 %v596
    %2926 = vmatprep.subr.mxu0 %v603
    %2927 = vmatpush1.msra.mxu0 %v602
    %2928 = vmatprep.subr.mxu0 %v609
    %2929 = vmatpush1.msra.mxu0 %v608
    %2930 = vmatprep.subr.mxu0 %v615
    %2931 = vmatpush1.msra.mxu0 %v614
    %2932 = vmatprep.subr.mxu0 %v621
    %2933 = vmatpush1.msra.mxu0 %v620
    %2934 = vmatprep.subr.mxu0 %v627
    %2935 = vmatpush1.msra.mxu0 %v626
    %2936 = vmatprep.subr.mxu0 %v633
    %2937 = vmatpush1.msra.mxu0 %v632
    %2938 = vmatprep.subr.mxu0 %v639
    %2939 = vmatpush1.msra.mxu0 %v638
    %2940 = vmatprep.subr.mxu0 %v645
    %2941 = vmatpush1.msra.mxu0 %v644
    %2942 = vmatprep.subr.mxu0 %v651
    %2943 = vmatpush1.msra.mxu0 %v650
    %2944 = vmatprep.subr.mxu0 %v657
    %2945 = vmatpush1.msra.mxu0 %v656
    %2946 = vmatprep.subr.mxu0 %v663
    %2947 = vmatpush1.msra.mxu0 %v662
    %2948 = vmatprep.subr.mxu0 %v669
    %2949 = vmatpush1.msra.mxu0 %v668
    %2950 = vmatprep.subr.mxu0 %v675
    %2951 = vmatpush1.msra.mxu0 %v674
    %2952 = vmatprep.subr.mxu0 %v681
    %2953 = vmatpush1.msra.mxu0 %v680
    %2954 = vmatprep.subr.mxu0 %v687
    %2955 = vmatpush1.msra.mxu0 %v686
    %2956 = vmatprep.subr.mxu0 %v693
    %2957 = vmatpush1.msra.mxu0 %v692
    %2958 = vmatprep.subr.mxu0 %v699
    %2959 = vmatpush1.msra.mxu0 %v698
    %2960 = vmatprep.subr.mxu0 %v705
    %2961 = vmatpush1.msra.mxu0 %v704
    %2962 = vmatprep.subr.mxu0 %v711
    %2963 = vmatpush1.msra.mxu0 %v710
    %2964 = vmatprep.subr.mxu0 %v717
    %2965 = vmatpush1.msra.mxu0 %v716
    %2966 = vmatprep.subr.mxu0 %v723
    %2967 = vmatpush1.msra.mxu0 %v722
    %2968 = vmatprep.subr.mxu0 %v729
    %2969 = vmatpush1.msra.mxu0 %v728
    %2970 = vmatprep.subr.mxu0 %v735
    %2971 = vmatpush1.msra.mxu0 %v734
    %2972 = vmatprep.subr.mxu0 %v741
    %2973 = vmatpush1.msra.mxu0 %v740
    %2974 = vmatprep.subr.mxu0 %v747
    %2975 = vmatpush1.msra.mxu0 %v746
    %2976 = vmatprep.mubr.f32.mxu0 %v2765
    %2977 = vmatmul.mubr.f32.gmra.mrb[0].mxu0 %v2764
    %v2978 = vpop.f32.mrb[0].mxu0
    %v2979 = vadd.f32 %v774, %v2978
    %v2980 = vpop.f32.mrb[0].mxu0
    %v2981 = vadd.f32 %v778, %v2980
    %2982 = vdwg.mxu0
    %v2983 = vld [vmem:[%s1001] sm:$0xff]
    %v2984 = vld [vmem:[%s1001 + $0x8] sm:$0xff]
    %v2985 = vld [vmem:[%s1001 + $0x10] sm:$0xff]
    %v2986 = vld [vmem:[#allocation2 + $0x18] sm:$0xff]
    %v2987 = vld [vmem:[#allocation2 + $0x20] sm:$0xff]
    %v2988 = vld [vmem:[#allocation2 + $0x28] sm:$0xff]
    %v2989 = vadd.f32 %v2983, %v2837
    %v2990 = vxor.u32 %v2989, 2147483648
    %v2991 = vmul.f32 %v2990, 1.442695
    %v2992 = vpow.pop %v2991
    %v2993 = vadd.f32 %v2992, 1.0
    %v2994 = vrcp.pop %v2993
    %v2995 = vmul.f32 1.0, %v2994
    %v2996 = vadd.f32 %v2984, %v2839
    %v2997 = vxor.u32 %v2996, 2147483648
    %v2998 = vmul.f32 %v2997, 1.442695
    %v2999 = vpow.pop %v2998
    %v3000 = vadd.f32 %v2999, 1.0
    %v3001 = vrcp.pop %v3000
    %v3002 = vmul.f32 1.0, %v3001
    %v3003 = vmul.f32 %v2995, %v2908
    %v3004 = vadd.f32 %v2985, %v3003
    %v3005 = vtanh.pop %v3004
    %v3006 = vsub.f32 1.0, %v3002
    %v3007 = vmul.f32 %v3006, %v3005
    %v3008 = vmul.f32 %v3002, %v2764
    %v3009 = vadd.f32 %v3007, %v3008
    %v3010 = vadd.f32 %v2986, %v2910
    %v3011 = vxor.u32 %v3010, 2147483648
    %v3012 = vmul.f32 %v3011, 1.442695
    %v3013 = vpow.pop %v3012
    %v3014 = vadd.f32 %v3013, 1.0
    %v3015 = vrcp.pop %v3014
    %v3016 = vmul.f32 1.0, %v3015
    %v3017 = vadd.f32 %v2987, %v2979
    %v3018 = vxor.u32 %v3017, 2147483648
    %v3019 = vmul.f32 %v3018, 1.442695
    %v3020 = vpow.pop %v3019
    %v3021 = vadd.f32 %v3020, 1.0
    %v3022 = vrcp.pop %v3021
    %v3023 = vmul.f32 1.0, %v3022
    %v3024 = vmul.f32 %v3016, %v2981
    %v3025 = vadd.f32 %v2988, %v3024
    %v3026 = vtanh.pop %v3025
    %v3027 = vsub.f32 1.0, %v3023
    %v3028 = vmul.f32 %v3027, %v3026
    %v3029 = vmul.f32 %v3023, %v2765
    %v3030 = vadd.f32 %v3028, %v3029
    %v3031 = vsel %vm2767, 1, 0
    %3032 = vset.pattern.permute.xlu0 0
    %3033 = vperm.xlu0 %3032, %v3031
    %v3034 = vpop.permute.xlu0 %3033
    %vm3035 = vcmp.eq.s32.totalorder %v3034, 1
    %v3036 = vsel %vm3035, %v3009, 0.0
    %3037 = vst [vmem:[%s1060] sm:$0xff] %v3036
    %v3038 = vsel %vm2769, 1, 0
    %3039 = vset.pattern.permute.xlu0 0
    %3040 = vperm.xlu0 %3039, %v3038
    %v3041 = vpop.permute.xlu0 %3040
    %vm3042 = vcmp.eq.s32.totalorder %v3041, 1
    %v3043 = vsel %vm3042, %v3030, 0.0
    %3044 = vst [vmem:[#allocation9 + $0x8] sm:$0xff] %v3043
    %v3045 = vsel %vm3035, %v3009, %v2764
    %v3046 = vsel %vm3042, %v3030, %v2765
    %3047 = vst [vmem:[#allocation10] sm:$0xff] %v3045
    %3048 = vst [vmem:[#allocation10 + $0x8] sm:$0xff] %v3046
    %v3049 = vld [vmem:[#allocation8] sm:$0xff]
    %v3050 = vld [vmem:[#allocation8 + $0x8] sm:$0xff]
    %v3051 = vld [vmem:[#allocation8 + $0x10] sm:$0xff]
    %v3052 = vld [vmem:[#allocation8 + $0x18] sm:$0xff]
    %v3053 = vld [vmem:[#allocation8 + $0x20] sm:$0xff]
    %v3054 = vld [vmem:[#allocation8 + $0x28] sm:$0xff]
    %v3055 = vld [vmem:[#allocation8 + $0x30] sm:$0xff]
    %v3056 = vld [vmem:[#allocation8 + $0x38] sm:$0xff]
    %v3057 = vld [vmem:[#allocation8 + $0x40] sm:$0xff]
    %v3058 = vld [vmem:[#allocation8 + $0x48] sm:$0xff]
    %v3059 = vld [vmem:[#allocation8 + $0x50] sm:$0xff]
    %v3060 = vld [vmem:[#allocation8 + $0x58] sm:$0xff]
    %v3061 = vld [vmem:[#allocation8 + $0x60] sm:$0xff]
    %v3062 = vld [vmem:[#allocation8 + $0x68] sm:$0xff]
    %v3063 = vld [vmem:[#allocation8 + $0x70] sm:$0xff]
    %v3064 = vld [vmem:[#allocation8 + $0x78] sm:$0xff]
    %v3065 = vld [vmem:[#allocation8 + $0x80] sm:$0xff]
    %v3066 = vld [vmem:[#allocation8 + $0x88] sm:$0xff]
    %v3067 = vld [vmem:[#allocation8 + $0x90] sm:$0xff]
    %v3068 = vld [vmem:[#allocation8 + $0x98] sm:$0xff]
    %v3069 = vld [vmem:[#allocation8 + $0xa0] sm:$0xff]
    %v3070 = vld [vmem:[#allocation8 + $0xa8] sm:$0xff]
    %v3071 = vld [vmem:[#allocation8 + $0xb0] sm:$0xff]
    %v3072 = vld [vmem:[#allocation8 + $0xb8] sm:$0xff]
    %v3073 = vld [vmem:[#allocation8 + $0xc0] sm:$0xff]
    %v3074 = vld [vmem:[#allocation8 + $0xc8] sm:$0xff]
    %v3075 = vld [vmem:[#allocation8 + $0xd0] sm:$0xff]
    %v3076 = vld [vmem:[#allocation8 + $0xd8] sm:$0xff]
    %v3077 = vld [vmem:[#allocation8 + $0xe0] sm:$0xff]
    %v3078 = vld [vmem:[#allocation8 + $0xe8] sm:$0xff]
    %v3079 = vld [vmem:[#allocation8 + $0xf0] sm:$0xff]
    %v3080 = vld [vmem:[#allocation8 + $0xf8] sm:$0xff]
    %v3081 = vld [vmem:[%s7] sm:$0x1]
    %v3083 = vlaneseq
    %v3084 = vshrl.u32 %v3083, 7
    %v3085 = vsub.s32 0, %v3084
    %v3086 = vrot.slane %v3081, %v3085
    %3088 = vmatprep.subr.mxu0 0.0
    %3089 = vmatpush1.msra.mxu0 %v3049
    %3090 = vmatprep.subr.mxu0 0.0
    %3091 = vmatpush1.msra.mxu0 %v3050
    %3092 = vmatprep.subr.mxu0 0.0
    %3093 = vmatpush1.msra.mxu0 %v3051
    %3094 = vmatprep.subr.mxu0 0.0
    %3095 = vmatpush1.msra.mxu0 %v3052
    %3096 = vmatprep.subr.mxu0 0.0
    %3097 = vmatpush1.msra.mxu0 %v3053
    %3098 = vmatprep.subr.mxu0 0.0
    %3099 = vmatpush1.msra.mxu0 %v3054
    %3100 = vmatprep.subr.mxu0 0.0
    %3101 = vmatpush1.msra.mxu0 %v3055
    %3102 = vmatprep.subr.mxu0 0.0
    %3103 = vmatpush1.msra.mxu0 %v3056
    %3104 = vmatprep.subr.mxu0 0.0
    %3105 = vmatpush1.msra.mxu0 %v3057
    %3106 = vmatprep.subr.mxu0 0.0
    %3107 = vmatpush1.msra.mxu0 %v3058
    %3108 = vmatprep.subr.mxu0 0.0
    %3109 = vmatpush1.msra.mxu0 %v3059
    %3110 = vmatprep.subr.mxu0 0.0
    %3111 = vmatpush1.msra.mxu0 %v3060
    %3112 = vmatprep.subr.mxu0 0.0
    %3113 = vmatpush1.msra.mxu0 %v3061
    %3114 = vmatprep.subr.mxu0 0.0
    %3115 = vmatpush1.msra.mxu0 %v3062
    %3116 = vmatprep.subr.mxu0 0.0
    %3117 = vmatpush1.msra.mxu0 %v3063
    %3118 = vmatprep.subr.mxu0 0.0
    %3119 = vmatpush1.msra.mxu0 %v3064
    %3120 = vmatprep.subr.mxu0 0.0
    %3121 = vmatpush1.msra.mxu0 %v3065
    %3122 = vmatprep.subr.mxu0 0.0
    %3123 = vmatpush1.msra.mxu0 %v3066
    %3124 = vmatprep.subr.mxu0 0.0
    %3125 = vmatpush1.msra.mxu0 %v3067
    %3126 = vmatprep.subr.mxu0 0.0
    %3127 = vmatpush1.msra.mxu0 %v3068
    %3128 = vmatprep.subr.mxu0 0.0
    %3129 = vmatpush1.msra.mxu0 %v3069
    %3130 = vmatprep.subr.mxu0 0.0
    %3131 = vmatpush1.msra.mxu0 %v3070
    %3132 = vmatprep.subr.mxu0 0.0
    %3133 = vmatpush1.msra.mxu0 %v3071
    %3134 = vmatprep.subr.mxu0 0.0
    %3135 = vmatpush1.msra.mxu0 %v3072
    %3136 = vmatprep.subr.mxu0 0.0
    %3137 = vmatpush1.msra.mxu0 %v3073
    %3138 = vmatprep.subr.mxu0 0.0
    %3139 = vmatpush1.msra.mxu0 %v3074
    %3140 = vmatprep.subr.mxu0 0.0
    %3141 = vmatpush1.msra.mxu0 %v3075
    %3142 = vmatprep.subr.mxu0 0.0
    %3143 = vmatpush1.msra.mxu0 %v3076
    %3144 = vmatprep.subr.mxu0 0.0
    %3145 = vmatpush1.msra.mxu0 %v3077
    %3146 = vmatprep.subr.mxu0 0.0
    %3147 = vmatpush1.msra.mxu0 %v3078
    %3148 = vmatprep.subr.mxu0 0.0
    %3149 = vmatpush1.msra.mxu0 %v3079
    %3150 = vmatprep.subr.mxu0 0.0
    %3151 = vmatpush1.msra.mxu0 %v3080
    %3152 = vmatprep.mubr.f32.mxu0 %v3046
    %3153 = vmatmul.mubr.f32.gmra.mrb[0].mxu0 %v3045
    %v3154 = vpop.f32.mrb[0].mxu0
    %v3155 = vadd.f32 %v3086, %v3154
    %v3156 = vpop.f32.mrb[0].mxu0
    %3157 = vdwg.mxu0
    %v3158 = vld [vmem:[%s8] sm:$0xff]
    %vm3159 = vcmp.gt.f32.partialorder %v3158, 0.0
    %v3160 = vsel %vm3159, %v3155, -1e+09
    %3161 = vmax.xlane.f32.xlu0 %v3160
    %v3162 = vpop.xlane.xlu0 %3161
    %v3163 = vsub.f32 %v3160, %v3162
    %v3164 = vmul.f32 %v3163, 1.442695
    %v3165 = vpow.pop %v3164
    %3166 = vadd.xlane.f32.xlu0 %v3165
    %v3167 = vpop.xlane.xlu0 %3166
    %v3168 = vlog2.pop %v3167
    %v3169 = vmul.f32 %v3168, 0.6931472
    %v3170 = vsub.f32 %v3163, %v3169
    %3171 = vst [vmem:[#allocation12] sm:$0xff] %v3170
    %v3172 = vlaneseq
    %v3173 = vand.u32 %v3172, 127
    %vm3174 = vcmp.ge.f32.partialorder %v3160, %v3162
    %v3175 = vsel %vm3174, %v3173, 128
    %v3176 = vand.u32 %v3175, 65535
    %v3177 = vshra.s32 %v3175, 16
    %v3178 = vcvt.s32.f32 %v3176
    %v3179 = vcvt.s32.f32 %v3177
    %3180 = vmin.xlane.f32.xlu0 %v3179
    %v3181 = vpop.xlane.xlu0 %3180
    %vm3182 = vcmp.eq.f32.partialorder %v3179, %v3181
    %v3183 = vsel %vm3182, %v3178, inf
    %3184 = vmin.xlane.f32.xlu0 %v3183
    %v3185 = vpop.xlane.xlu0 %3184
    %v3186 = vcvt.f32.s32 %v3185
    %v3187 = vcvt.f32.s32 %v3181
    %v3188 = vshll.u32 %v3187, 16
    %v3189 = vadd.s32 %v3188, %v3186
    %vm3190 = vcmask 7168
    %3191 = vst.msk [vmem:[%s12] sm:$0xff] %vm3190, %v3189
    %vm3192 = vcmp.eq.s32.totalorder %v3173, %v3189
    %v3193 = vsel %vm3192, %v3170, 0.0
    %3194 = vadd.xlane.f32.xlu0 %v3193
    %v3195 = vpop.xlane.xlu0 %3194
    %3196 = vst.msk [vmem:[%s13] sm:$0xff] %vm3190, %v3195
    // Predicated region
    $region50: #{tpu_custom_call.1} parent=1 // pred_check
      _
    $region51: #{tpu_custom_call.1} parent=1 // pred_check_branch
      %3198 = sbr.rel (0) target = $region53
    $region52: #{tpu_custom_call.1} parent=1 // pred_region
      %s3200 = ssub.s32 2048, 2048
      %3201 = vsyncadd [#allocation5], %s3200
      %s3202 = sshll.u32 [#allocation9], 4
      %s3203 = int_to_ptr.vmem [resolvable:$true] %s3202
      %3208 = dma.vmem_to_hbm [thread:$0]  %s3203, 2048, %s9, [#allocation5], 256, 256, 16
    $region53: #{tpu_custom_call.1} parent=1 // pred_fallthru
      _
    // Predicated region
    $region54: #{tpu_custom_call.1} parent=1 // pred_check
      _
    $region55: #{tpu_custom_call.1} parent=1 // pred_check_branch
      %3210 = sbr.rel (0) target = $region57
    $region56: #{tpu_custom_call.1} parent=1 // pred_region
      %s3212 = ssub.s32 256, 256
      %3213 = vsyncadd [#allocation11], %s3212
      %s3215 = sshll.u32 [#allocation10], 4
      %s3216 = int_to_ptr.vmem [resolvable:$true] %s3215
      %3218 = dma.vmem_to_hbm [thread:$0]  %s3216, 256, %s10, [#allocation11]
    $region57: #{tpu_custom_call.1} parent=1 // pred_fallthru
      _
    // Predicated region
    $region58: #{tpu_custom_call.1} parent=1 // pred_check
      _
    $region59: #{tpu_custom_call.1} parent=1 // pred_check_branch
      %3220 = sbr.rel (0) target = $region61
    $region60: #{tpu_custom_call.1} parent=1 // pred_region
      %s3222 = ssub.s32 128, 128
      %3223 = vsyncadd [#allocation11], %s3222
      %s3225 = sshll.u32 [#allocation12], 4
      %s3226 = int_to_ptr.vmem [resolvable:$true] %s3225
      %3228 = dma.vmem_to_hbm [thread:$0]  %s3226, 128, %s11, [#allocation11]
    $region61: #{tpu_custom_call.1} parent=1 // pred_fallthru
      _
    // Predicated region
    $region62: #{tpu_custom_call.1} parent=1 // pred_check
      _
    $region63: #{tpu_custom_call.1} parent=1 // pred_check_branch
      %3230 = sbr.rel (0) target = $region65
    $region64: #{tpu_custom_call.1} parent=1 // pred_region
      _
    $region65: #{tpu_custom_call.1} parent=1 // pred_fallthru
      _
    // Predicated region
    $region66: #{tpu_custom_call.1} parent=1 // pred_check
      _
    $region67: #{tpu_custom_call.1} parent=1 // pred_check_branch
      %3232 = sbr.rel (0) target = $region69
    $region68: #{tpu_custom_call.1} parent=1 // pred_region
      _
    $region69: #{tpu_custom_call.1} parent=1 // pred_fallthru
      _
    // Predicated region
    $region70: #{tpu_custom_call.1} parent=1 // pred_check
      _
    $region71: #{tpu_custom_call.1} parent=1 // pred_check_branch
      %3234 = sbr.rel (0) target = $region73
    $region72: #{tpu_custom_call.1} parent=1 // pred_region
      %3235 = dma.done [#allocation5], 2048
    $region73: #{tpu_custom_call.1} parent=1 // pred_fallthru
      _
    // Predicated region
    $region74: #{tpu_custom_call.1} parent=1 // pred_check
      _
    $region75: #{tpu_custom_call.1} parent=1 // pred_check_branch
      %3237 = sbr.rel (0) target = $region77
    $region76: #{tpu_custom_call.1} parent=1 // pred_region
      %3238 = dma.done [#allocation11], 256
    $region77: #{tpu_custom_call.1} parent=1 // pred_fallthru
      _
    // Predicated region
    $region78: #{tpu_custom_call.1} parent=1 // pred_check
      _
    $region79: #{tpu_custom_call.1} parent=1 // pred_check_branch
      %3240 = sbr.rel (0) target = $region81
    $region80: #{tpu_custom_call.1} parent=1 // pred_region
      %3241 = dma.done [#allocation11], 128
    $region81: #{tpu_custom_call.1} parent=1 // pred_fallthru
      _
    // Predicated region
    $region82: #{tpu_custom_call.1} parent=1 // pred_check
      _
    $region83: #{tpu_custom_call.1} parent=1 // pred_check_branch
      %3243 = sbr.rel (0) target = $region85
    $region84: #{tpu_custom_call.1} parent=1 // pred_region
      _
    $region85: #{tpu_custom_call.1} parent=1 // pred_fallthru
      _
    // Predicated region
    $region86: #{tpu_custom_call.1} parent=1 // pred_check
      _
    $region87: #{tpu_custom_call.1} parent=1 // pred_check_branch
      %3245 = sbr.rel (0) target = $region89
    $region88: #{tpu_custom_call.1} parent=1 // pred_region
      _
    $region89: #{tpu_custom_call.1} parent=1 // pred_fallthru
      _
    %3246 = vsyncpa [#allocation4], 1
    %3247 = vsyncpa [#allocation7], 1
    %3248 = vsyncpa [#allocation5], 1
    %3249 = vsyncpa [#allocation11], 1

</llo_original>
